<compile_context>
chip_gen: v7x
topology: tpu7x:2x2x1
jax: 0.10.0
libtpu: 0.0.40
codegen_flags: <defaults>
</compile_context>

<pallas_src>
import jax
import jax.numpy as jnp
import numpy as np
from jax.experimental import pallas as pl
from jax.experimental.pallas import tpu as pltpu


# ---------------------------------------------------------------------------
# Host-side (trace-time) interpolation planning
# ---------------------------------------------------------------------------
def _bilinear_matrix_align_corners(n_in: int, scale: int = 2) -> np.ndarray:
    """A (n_out, n_in) with y = A @ x == F.interpolate(scale_factor=scale,
    mode='bilinear', align_corners=True) along one axis."""
    n_out = n_in * scale
    A = np.zeros((n_out, n_in), dtype=np.float32)
    if n_in == 1 or n_out == 1:
        A[:, 0] = 1.0
        return A
    for j in range(n_out):
        src = j * (n_in - 1) / (n_out - 1)
        i0 = min(int(np.floor(src)), n_in - 1)
        i1 = min(i0 + 1, n_in - 1)
        frac = src - i0
        A[j, i0] += 1.0 - frac
        A[j, i1] += frac
    return A


def _pick_band_rows(H2: int, W2: int, C_out: int, out_itemsize: int,
                    target_bytes: int = 2 << 20) -> int:
    """Largest divisor To of H2 whose output band is lane-aligned (To*W2 % 128 == 0)
    and <= target_bytes, preferring >= 4 bands (gives v7x's 2nd core work)."""
    divisors = [d for d in range(1, H2 + 1) if H2 % d == 0]
    for min_bands in (4, 2):
        cands = [d for d in divisors
                 if (d * W2) % 128 == 0
                 and C_out * d * W2 * out_itemsize <= target_bytes
                 and H2 // d >= min_bands]
        if cands:
            return max(cands)
    return H2  # single full-height band (block == full array dim, always legal)


def _band_plan(H: int, To: int):
    """Per-band input row window + 2-tap H-upsample schedule (align_corners, 2x)."""
    H2 = 2 * H
    nb = H2 // To
    j = np.arange(H2)
    src = j * (H - 1) / (H2 - 1)
    i0 = np.minimum(np.floor(src).astype(np.int64), H - 2)   # first tap row, i0+1 <= H-1
    frac = (src - i0).astype(np.float32)                      # weight of row i0+1

    R = 2
    for b in range(nb):
        lo = int(i0[b * To])
        hi = int(i0[(b + 1) * To - 1]) + 1
        R = max(R, hi - lo + 1)
    R = min(R, H)

    starts = np.zeros((nb,), np.int32)
    lloc = np.zeros((nb, To), np.int32)
    thi = np.zeros((nb, To), np.float32)
    for b in range(nb):
        r0 = min(int(i0[b * To]), H - R)
        starts[b] = r0
        lloc[b] = i0[b * To:(b + 1) * To] - r0
        thi[b] = frac[b * To:(b + 1) * To]
    return R, starts, lloc.reshape(-1), thi.reshape(-1)


# ---------------------------------------------------------------------------
# Kernel
# ---------------------------------------------------------------------------
def _make_band_kernel(two_inputs: bool, W: int, W2: int, R: int, To: int, conv_dtype):
    def body(starts_ref, lloc_ref, thi_ref, x_refs,
             w_ref, awt_ref, bias_ref, o_ref, zw_ref):
        b = pl.program_id(1)
        r0 = starts_ref[b]                       # first input row of this band (SMEM)

        # Per input row: skip-add (f32, v5e-safe), 1x1 conv (+bias, before the
        # upsample -- taps sum to 1 so this is exact), W-direction 2x upsample.
        for i in range(R):
            xr = x_refs[0][0, :, r0 + i, :].astype(jnp.float32)        # (C, W)
            if len(x_refs) == 2:
                xr = xr + x_refs[1][0, :, r0 + i, :].astype(jnp.float32)
            z = jnp.dot(w_ref[...], xr.astype(conv_dtype),
                        preferred_element_type=jnp.float32) + bias_ref[...]   # (C_out, W)
            zw_ref[i] = jnp.dot(z, awt_ref[...],
                                preferred_element_type=jnp.float32)           # (C_out, W2)

        # H-direction 2x upsample: two taps per output row (banded), taps from SMEM.
        for jj in range(To):
            l = lloc_ref[b * To + jj]
            t_hi = thi_ref[b * To + jj]
            row = (1.0 - t_hi) * zw_ref[l] + t_hi * zw_ref[l + 1]             # (C_out, W2)
            o_ref[0, :, jj * W2:(jj + 1) * W2] = row.astype(o_ref.dtype)

    if two_inputs:
        def kernel(starts_ref, lloc_ref, thi_ref, x0_ref, x1_ref,
                   w_ref, awt_ref, bias_ref, o_ref, zw_ref):
            body(starts_ref, lloc_ref, thi_ref, (x0_ref, x1_ref),
                 w_ref, awt_ref, bias_ref, o_ref, zw_ref)
    else:
        def kernel(starts_ref, lloc_ref, thi_ref, x0_ref,
                   w_ref, awt_ref, bias_ref, o_ref, zw_ref):
            body(starts_ref, lloc_ref, thi_ref, (x0_ref,),
                 w_ref, awt_ref, bias_ref, o_ref, zw_ref)
    return kernel


# ---------------------------------------------------------------------------
# Wrapper
# ---------------------------------------------------------------------------
def _block_bytes(shape, itemsize):
    pad = list(shape)
    if len(pad) >= 1:
        pad[-1] = -(-pad[-1] // 128) * 128
    if len(pad) >= 2:
        pad[-2] = -(-pad[-2] // 8) * 8
    n = 1
    for d in pad:
        n *= d
    return n * itemsize


def _vmem_capacity_bytes():
    try:
        return int(pltpu.get_tpu_info().vmem_capacity_bytes)
    except Exception:
        return 64 * 1024 * 1024  # v7x floor


def feature_fusion_block(x0, x1, weight, bias, *, align_corners=True, conv_dtype=None):
    """xs -> add -> bilinear 2x upsample (align_corners=True) -> 1x1 conv (+bias).

    x0: (N, C, H, W); x1: (N, C, H, W) or None.  weight: (C_out, C); bias: (C_out,).
    Returns (N, C_out, 2H, 2W) in x0's dtype.  `conv_dtype` selects the MXU operand
    dtype for the 1x1 conv (pass jnp.bfloat16 on v6e/v7x for f32 activations).
    """
    assert align_corners, "only align_corners=True (module default) implemented"
    N, C, H, W = x0.shape
    assert H >= 2, "2x bilinear upsample with 2-tap banding needs H >= 2"
    C_out = weight.shape[0]
    assert weight.shape[1] == C
    H2, W2 = 2 * H, 2 * W
    HW2 = H2 * W2
    out_dtype = x0.dtype
    cdt = jnp.dtype(conv_dtype) if conv_dtype is not None else jnp.dtype(out_dtype)

    # --- trace-time band plan -------------------------------------------------
    To = _pick_band_rows(H2, W2, C_out, jnp.dtype(out_dtype).itemsize)
    nb = H2 // To
    R, starts, lloc, thi = _band_plan(H, To)

    awt = jnp.asarray(_bilinear_matrix_align_corners(W).T)     # (W, W2), f32 taps
    w = weight.astype(cdt)                                      # (C_out, C)
    b2 = bias.reshape(C_out, 1).astype(jnp.float32)             # (C_out, 1)

    x_args = [x0]
    if x1 is not None:
        x_args.append(x1)                                       # no wrapper-side cast
    n_in = len(x_args)

    kernel = _make_band_kernel(n_in == 2, W, W2, R, To, cdt)

    # --- generation-aware VMEM budget ------------------------------------------
    need = 0
    for a in x_args:                                            # double-buffered inputs
        need += 2 * _block_bytes((1, C, H, W), jnp.dtype(a.dtype).itemsize)
    need += 2 * (_block_bytes((C_out, C), jnp.dtype(cdt).itemsize)
                 + _block_bytes((W, W2), 4) + _block_bytes((C_out, 1), 4))
    need += 2 * _block_bytes((1, C_out, To * W2), jnp.dtype(out_dtype).itemsize)
    need += _block_bytes((R, C_out, W2), 4)                     # zw scratch
    vmem_cap = _vmem_capacity_bytes()
    vmem_limit = int(min(0.8 * vmem_cap, max(2 * need + (8 << 20), 16 << 20)))

    def build_and_run(single_buffer_consts):
        def const_spec(shape):
            idx = lambda n, b, *_: (0,) * len(shape)
            if single_buffer_consts:
                return pl.BlockSpec(shape, idx, pipeline_mode=pl.Buffered(1))
            return pl.BlockSpec(shape, idx)

        x_spec = pl.BlockSpec((1, C, H, W), lambda n, b, *_: (n, 0, 0, 0))
        in_specs = ([x_spec] * n_in
                    + [const_spec((C_out, C)),
                       const_spec((W, W2)),
                       const_spec((C_out, 1))])
        out_spec = pl.BlockSpec((1, C_out, To * W2), lambda n, b, *_: (n, 0, b))

        return pl.pallas_call(
            kernel,
            out_shape=jax.ShapeDtypeStruct((N, C_out, HW2), out_dtype),
            grid_spec=pltpu.PrefetchScalarGridSpec(
                num_scalar_prefetch=3,
                grid=(N, nb),
                in_specs=in_specs,
                out_specs=out_spec,
                scratch_shapes=[pltpu.VMEM((R, C_out, W2), jnp.float32)],
            ),
            compiler_params=pltpu.CompilerParams(
                dimension_semantics=("parallel", "parallel"),
                vmem_limit_bytes=vmem_limit,
            ),
        )(jnp.asarray(starts), jnp.asarray(lloc), jnp.asarray(thi),
          *x_args, w, awt, b2)

    try:
        out_flat = build_and_run(True)
    except Exception:
        # Fallback if this runtime rejects pipeline_mode=pl.Buffered(1) for constants.
        out_flat = build_and_run(False)

    return out_flat.reshape(N, C_out, H2, W2)


# ---------------------------------------------------------------------------
# Pure-JAX reference in the ORIGINAL PyTorch order: add -> upsample -> conv(+bias)
# ---------------------------------------------------------------------------
def _reference(x0, x1, weight, bias):
    N, C, H, W = x0.shape
    x = x0 if x1 is None else x0 + x1
    x = x.astype(jnp.float32)
    ah = jnp.asarray(_bilinear_matrix_align_corners(H))   # (2H, H)
    aw = jnp.asarray(_bilinear_matrix_align_corners(W))   # (2W, W)
    xw = jnp.einsum("nchw,ow->ncho", x, aw)               # upsample W
    xhw = jnp.einsum("oh,nchw->ncow", ah, xw)             # upsample H
    return (jnp.einsum("dc,nchw->ndhw", weight.astype(jnp.float32), xhw)
            + bias.astype(jnp.float32)[None, :, None, None])


if __name__ == "__main__":
    # Small shapes consistent with the module: features=8, batch=2, 16x16 spatial.
    N, C, H, W = 2, 8, 16, 16
    features = C
    out_features = features                    # expand=False
    key = jax.random.PRNGKey(0)
    k0, k1, kw, kb = jax.random.split(key, 4)

    x0 = jax.random.normal(k0, (N, C, H, W), dtype=jnp.float32)
    x1 = jax.random.normal(k1, (N, C, H, W), dtype=jnp.float32)
    weight = jax.random.normal(kw, (out_features, features), dtype=jnp.float32) * 0.1
    bias = jax.random.normal(kb, (out_features,), dtype=jnp.float32) * 0.1

    # Two-input (skip-add) path, f32 end to end.
    out2 = jax.block_until_ready(feature_fusion_block(x0, x1, weight, bias))
    assert out2.shape == (N, out_features, 2 * H, 2 * W), out2.shape
    ref2 = _reference(x0, x1, weight, bias)
    np.testing.assert_allclose(np.asarray(out2), np.asarray(ref2), rtol=1e-4, atol=1e-4)

    # Single-input path (no zeros tensor streamed from HBM).
    out1 = jax.block_until_ready(feature_fusion_block(x0, None, weight, bias))
    ref1 = _reference(x0, None, weight, bias)
    np.testing.assert_allclose(np.asarray(out1), np.asarray(ref1), rtol=1e-4, atol=1e-4)

    # Non-square spatial + bf16 MXU operands for the 1x1 conv (v6e/v7x fast path).
    xa = jax.random.normal(k0, (N, C, 12, 16), dtype=jnp.float32)
    xb = jax.random.normal(k1, (N, C, 12, 16), dtype=jnp.float32)
    outb = jax.block_until_ready(
        feature_fusion_block(xa, xb, weight, bias, conv_dtype=jnp.bfloat16))
    refb = _reference(xa, xb, weight, bias)
    np.testing.assert_allclose(np.asarray(outb), np.asarray(refb), rtol=5e-2, atol=5e-2)

    print("KERNEL_OK")
</pallas_src>

<mosaic_0001>
module attributes {stable_mosaic.version = 11 : i64} {
  func.func @kernel(%arg0: i32, %arg1: i32, %arg2: memref<4xi32, #tpu.memory_space<smem>>, %arg3: memref<32xi32, #tpu.memory_space<smem>>, %arg4: memref<32xf32, #tpu.memory_space<smem>>, %arg5: memref<1x8x16x16xf32, #tpu.memory_space<vmem>>, %arg6: memref<1x8x16x16xf32, #tpu.memory_space<vmem>>, %arg7: memref<8x8xf32, #tpu.memory_space<vmem>>, %arg8: memref<16x32xf32, #tpu.memory_space<vmem>>, %arg9: memref<8x1xf32, #tpu.memory_space<vmem>>, %arg10: memref<1x8x256xf32, #tpu.memory_space<vmem>>, %arg11: memref<6x8x32xf32, #tpu.memory_space<vmem>>) attributes {dimension_semantics = [#tpu.dimension_semantics<parallel>, #tpu.dimension_semantics<parallel>], iteration_bounds = array<i64: 2, 4>, scalar_prefetch = 3 : i64, scratch_operands = 1 : i64, tpu.core_type = #tpu.core_type<tc>, window_params = [{transform_indices = @transform_0, window_bounds = array<i64: 1, 8, 16, 16>}, {transform_indices = @transform_1, window_bounds = array<i64: 1, 8, 16, 16>}, {pipeline_mode = #tpu.pipeline_mode<synchronous>, transform_indices = @transform_2, window_bounds = array<i64: 8, 8>}, {pipeline_mode = #tpu.pipeline_mode<synchronous>, transform_indices = @transform_3, window_bounds = array<i64: 16, 32>}, {pipeline_mode = #tpu.pipeline_mode<synchronous>, transform_indices = @transform_4, window_bounds = array<i64: 8, 1>}, {transform_indices = @transform_5, window_bounds = array<i64: 1, 8, 256>}]} {
    %0 = arith.index_cast %arg1 : i32 to index
    %1 = memref.load %arg2[%0] : memref<4xi32, #tpu.memory_space<smem>>
    %c0_i32 = arith.constant 0 : i32
    %2 = arith.addi %1, %c0_i32 : i32
    %c0 = arith.constant 0 : index
    %c0_0 = arith.constant 0 : index
    %3 = arith.index_cast %2 : i32 to index
    %c0_1 = arith.constant 0 : index
    %4 = vector.load %arg5[%c0, %c0_0, %3, %c0_1] : memref<1x8x16x16xf32, #tpu.memory_space<vmem>>, vector<1x8x1x16xf32>
    %5 = vector.shape_cast %4 : vector<1x8x1x16xf32> to vector<8x16xf32>
    %c0_i32_2 = arith.constant 0 : i32
    %6 = arith.addi %1, %c0_i32_2 : i32
    %c0_3 = arith.constant 0 : index
    %c0_4 = arith.constant 0 : index
    %7 = arith.index_cast %6 : i32 to index
    %c0_5 = arith.constant 0 : index
    %8 = vector.load %arg6[%c0_3, %c0_4, %7, %c0_5] : memref<1x8x16x16xf32, #tpu.memory_space<vmem>>, vector<1x8x1x16xf32>
    %9 = vector.shape_cast %8 : vector<1x8x1x16xf32> to vector<8x16xf32>
    %10 = arith.addf %5, %9 : vector<8x16xf32>
    %c0_6 = arith.constant 0 : index
    %c0_7 = arith.constant 0 : index
    %11 = vector.load %arg7[%c0_6, %c0_7] : memref<8x8xf32, #tpu.memory_space<vmem>>, vector<8x8xf32>
    %cst = arith.constant dense<0.000000e+00> : vector<8x16xf32>
    %12 = tpu.matmul %11, %10, %cst {dimension_numbers = #tpu.dot_dimension_numbers<[1], [0], [0], [1], [0, 0, 1, 1], [], []>} : vector<8x8xf32>, vector<8x16xf32>, vector<8x16xf32> -> vector<8x16xf32>
    %c0_8 = arith.constant 0 : index
    %c0_9 = arith.constant 0 : index
    %13 = vector.load %arg9[%c0_8, %c0_9] : memref<8x1xf32, #tpu.memory_space<vmem>>, vector<8x1xf32>
    %14 = vector.broadcast %13 : vector<8x1xf32> to vector<8x16xf32>
    %15 = arith.addf %12, %14 : vector<8x16xf32>
    %c0_10 = arith.constant 0 : index
    %c0_11 = arith.constant 0 : index
    %16 = vector.load %arg8[%c0_10, %c0_11] : memref<16x32xf32, #tpu.memory_space<vmem>>, vector<16x32xf32>
    %cst_12 = arith.constant dense<0.000000e+00> : vector<8x32xf32>
    %17 = tpu.matmul %15, %16, %cst_12 {dimension_numbers = #tpu.dot_dimension_numbers<[1], [0], [0], [1], [0, 0, 1, 1], [], []>} : vector<8x16xf32>, vector<16x32xf32>, vector<8x32xf32> -> vector<8x32xf32>
    %c0_13 = arith.constant 0 : index
    %c0_14 = arith.constant 0 : index
    %c0_15 = arith.constant 0 : index
    %18 = vector.load %arg11[%c0_13, %c0_14, %c0_15] : memref<6x8x32xf32, #tpu.memory_space<vmem>>, vector<1x8x32xf32>
    %19 = vector.shape_cast %18 : vector<1x8x32xf32> to vector<8x32xf32>
    %20 = vector.shape_cast %17 : vector<8x32xf32> to vector<1x8x32xf32>
    tpu.vector_store %arg11[%c0_13, %c0_14, %c0_15], %20 {strides = array<i32>} : memref<6x8x32xf32, #tpu.memory_space<vmem>>, vector<1x8x32xf32>,
    %c1_i32 = arith.constant 1 : i32
    %21 = arith.addi %1, %c1_i32 : i32
    %c0_16 = arith.constant 0 : index
    %c0_17 = arith.constant 0 : index
    %22 = arith.index_cast %21 : i32 to index
    %c0_18 = arith.constant 0 : index
    %23 = vector.load %arg5[%c0_16, %c0_17, %22, %c0_18] : memref<1x8x16x16xf32, #tpu.memory_space<vmem>>, vector<1x8x1x16xf32>
    %24 = vector.shape_cast %23 : vector<1x8x1x16xf32> to vector<8x16xf32>
    %c1_i32_19 = arith.constant 1 : i32
    %25 = arith.addi %1, %c1_i32_19 : i32
    %c0_20 = arith.constant 0 : index
    %c0_21 = arith.constant 0 : index
    %26 = arith.index_cast %25 : i32 to index
    %c0_22 = arith.constant 0 : index
    %27 = vector.load %arg6[%c0_20, %c0_21, %26, %c0_22] : memref<1x8x16x16xf32, #tpu.memory_space<vmem>>, vector<1x8x1x16xf32>
    %28 = vector.shape_cast %27 : vector<1x8x1x16xf32> to vector<8x16xf32>
    %29 = arith.addf %24, %28 : vector<8x16xf32>
    %c0_23 = arith.constant 0 : index
    %c0_24 = arith.constant 0 : index
    %30 = vector.load %arg7[%c0_23, %c0_24] : memref<8x8xf32, #tpu.memory_space<vmem>>, vector<8x8xf32>
    %cst_25 = arith.constant dense<0.000000e+00> : vector<8x16xf32>
    %31 = tpu.matmul %30, %29, %cst_25 {dimension_numbers = #tpu.dot_dimension_numbers<[1], [0], [0], [1], [0, 0, 1, 1], [], []>} : vector<8x8xf32>, vector<8x16xf32>, vector<8x16xf32> -> vector<8x16xf32>
    %c0_26 = arith.constant 0 : index
    %c0_27 = arith.constant 0 : index
    %32 = vector.load %arg9[%c0_26, %c0_27] : memref<8x1xf32, #tpu.memory_space<vmem>>, vector<8x1xf32>
    %33 = vector.broadcast %32 : vector<8x1xf32> to vector<8x16xf32>
    %34 = arith.addf %31, %33 : vector<8x16xf32>
    %c0_28 = arith.constant 0 : index
    %c0_29 = arith.constant 0 : index
    %35 = vector.load %arg8[%c0_28, %c0_29] : memref<16x32xf32, #tpu.memory_space<vmem>>, vector<16x32xf32>
    %cst_30 = arith.constant dense<0.000000e+00> : vector<8x32xf32>
    %36 = tpu.matmul %34, %35, %cst_30 {dimension_numbers = #tpu.dot_dimension_numbers<[1], [0], [0], [1], [0, 0, 1, 1], [], []>} : vector<8x16xf32>, vector<16x32xf32>, vector<8x32xf32> -> vector<8x32xf32>
    %c1 = arith.constant 1 : index
    %c0_31 = arith.constant 0 : index
    %c0_32 = arith.constant 0 : index
    %37 = vector.load %arg11[%c1, %c0_31, %c0_32] : memref<6x8x32xf32, #tpu.memory_space<vmem>>, vector<1x8x32xf32>
    %38 = vector.shape_cast %37 : vector<1x8x32xf32> to vector<8x32xf32>
    %39 = vector.shape_cast %36 : vector<8x32xf32> to vector<1x8x32xf32>
    tpu.vector_store %arg11[%c1, %c0_31, %c0_32], %39 {strides = array<i32>} : memref<6x8x32xf32, #tpu.memory_space<vmem>>, vector<1x8x32xf32>,
    %c2_i32 = arith.constant 2 : i32
    %40 = arith.addi %1, %c2_i32 : i32
    %c0_33 = arith.constant 0 : index
    %c0_34 = arith.constant 0 : index
    %41 = arith.index_cast %40 : i32 to index
    %c0_35 = arith.constant 0 : index
    %42 = vector.load %arg5[%c0_33, %c0_34, %41, %c0_35] : memref<1x8x16x16xf32, #tpu.memory_space<vmem>>, vector<1x8x1x16xf32>
    %43 = vector.shape_cast %42 : vector<1x8x1x16xf32> to vector<8x16xf32>
    %c2_i32_36 = arith.constant 2 : i32
    %44 = arith.addi %1, %c2_i32_36 : i32
    %c0_37 = arith.constant 0 : index
    %c0_38 = arith.constant 0 : index
    %45 = arith.index_cast %44 : i32 to index
    %c0_39 = arith.constant 0 : index
    %46 = vector.load %arg6[%c0_37, %c0_38, %45, %c0_39] : memref<1x8x16x16xf32, #tpu.memory_space<vmem>>, vector<1x8x1x16xf32>
    %47 = vector.shape_cast %46 : vector<1x8x1x16xf32> to vector<8x16xf32>
    %48 = arith.addf %43, %47 : vector<8x16xf32>
    %c0_40 = arith.constant 0 : index
    %c0_41 = arith.constant 0 : index
    %49 = vector.load %arg7[%c0_40, %c0_41] : memref<8x8xf32, #tpu.memory_space<vmem>>, vector<8x8xf32>
    %cst_42 = arith.constant dense<0.000000e+00> : vector<8x16xf32>
    %50 = tpu.matmul %49, %48, %cst_42 {dimension_numbers = #tpu.dot_dimension_numbers<[1], [0], [0], [1], [0, 0, 1, 1], [], []>} : vector<8x8xf32>, vector<8x16xf32>, vector<8x16xf32> -> vector<8x16xf32>
    %c0_43 = arith.constant 0 : index
    %c0_44 = arith.constant 0 : index
    %51 = vector.load %arg9[%c0_43, %c0_44] : memref<8x1xf32, #tpu.memory_space<vmem>>, vector<8x1xf32>
    %52 = vector.broadcast %51 : vector<8x1xf32> to vector<8x16xf32>
    %53 = arith.addf %50, %52 : vector<8x16xf32>
    %c0_45 = arith.constant 0 : index
    %c0_46 = arith.constant 0 : index
    %54 = vector.load %arg8[%c0_45, %c0_46] : memref<16x32xf32, #tpu.memory_space<vmem>>, vector<16x32xf32>
    %cst_47 = arith.constant dense<0.000000e+00> : vector<8x32xf32>
    %55 = tpu.matmul %53, %54, %cst_47 {dimension_numbers = #tpu.dot_dimension_numbers<[1], [0], [0], [1], [0, 0, 1, 1], [], []>} : vector<8x16xf32>, vector<16x32xf32>, vector<8x32xf32> -> vector<8x32xf32>
    %c2 = arith.constant 2 : index
    %c0_48 = arith.constant 0 : index
    %c0_49 = arith.constant 0 : index
    %56 = vector.load %arg11[%c2, %c0_48, %c0_49] : memref<6x8x32xf32, #tpu.memory_space<vmem>>, vector<1x8x32xf32>
    %57 = vector.shape_cast %56 : vector<1x8x32xf32> to vector<8x32xf32>
    %58 = vector.shape_cast %55 : vector<8x32xf32> to vector<1x8x32xf32>
    tpu.vector_store %arg11[%c2, %c0_48, %c0_49], %58 {strides = array<i32>} : memref<6x8x32xf32, #tpu.memory_space<vmem>>, vector<1x8x32xf32>,
    %c3_i32 = arith.constant 3 : i32
    %59 = arith.addi %1, %c3_i32 : i32
    %c0_50 = arith.constant 0 : index
    %c0_51 = arith.constant 0 : index
    %60 = arith.index_cast %59 : i32 to index
    %c0_52 = arith.constant 0 : index
    %61 = vector.load %arg5[%c0_50, %c0_51, %60, %c0_52] : memref<1x8x16x16xf32, #tpu.memory_space<vmem>>, vector<1x8x1x16xf32>
    %62 = vector.shape_cast %61 : vector<1x8x1x16xf32> to vector<8x16xf32>
    %c3_i32_53 = arith.constant 3 : i32
    %63 = arith.addi %1, %c3_i32_53 : i32
    %c0_54 = arith.constant 0 : index
    %c0_55 = arith.constant 0 : index
    %64 = arith.index_cast %63 : i32 to index
    %c0_56 = arith.constant 0 : index
    %65 = vector.load %arg6[%c0_54, %c0_55, %64, %c0_56] : memref<1x8x16x16xf32, #tpu.memory_space<vmem>>, vector<1x8x1x16xf32>
    %66 = vector.shape_cast %65 : vector<1x8x1x16xf32> to vector<8x16xf32>
    %67 = arith.addf %62, %66 : vector<8x16xf32>
    %c0_57 = arith.constant 0 : index
    %c0_58 = arith.constant 0 : index
    %68 = vector.load %arg7[%c0_57, %c0_58] : memref<8x8xf32, #tpu.memory_space<vmem>>, vector<8x8xf32>
    %cst_59 = arith.constant dense<0.000000e+00> : vector<8x16xf32>
    %69 = tpu.matmul %68, %67, %cst_59 {dimension_numbers = #tpu.dot_dimension_numbers<[1], [0], [0], [1], [0, 0, 1, 1], [], []>} : vector<8x8xf32>, vector<8x16xf32>, vector<8x16xf32> -> vector<8x16xf32>
    %c0_60 = arith.constant 0 : index
    %c0_61 = arith.constant 0 : index
    %70 = vector.load %arg9[%c0_60, %c0_61] : memref<8x1xf32, #tpu.memory_space<vmem>>, vector<8x1xf32>
    %71 = vector.broadcast %70 : vector<8x1xf32> to vector<8x16xf32>
    %72 = arith.addf %69, %71 : vector<8x16xf32>
    %c0_62 = arith.constant 0 : index
    %c0_63 = arith.constant 0 : index
    %73 = vector.load %arg8[%c0_62, %c0_63] : memref<16x32xf32, #tpu.memory_space<vmem>>, vector<16x32xf32>
    %cst_64 = arith.constant dense<0.000000e+00> : vector<8x32xf32>
    %74 = tpu.matmul %72, %73, %cst_64 {dimension_numbers = #tpu.dot_dimension_numbers<[1], [0], [0], [1], [0, 0, 1, 1], [], []>} : vector<8x16xf32>, vector<16x32xf32>, vector<8x32xf32> -> vector<8x32xf32>
    %c3 = arith.constant 3 : index
    %c0_65 = arith.constant 0 : index
    %c0_66 = arith.constant 0 : index
    %75 = vector.load %arg11[%c3, %c0_65, %c0_66] : memref<6x8x32xf32, #tpu.memory_space<vmem>>, vector<1x8x32xf32>
    %76 = vector.shape_cast %75 : vector<1x8x32xf32> to vector<8x32xf32>
    %77 = vector.shape_cast %74 : vector<8x32xf32> to vector<1x8x32xf32>
    tpu.vector_store %arg11[%c3, %c0_65, %c0_66], %77 {strides = array<i32>} : memref<6x8x32xf32, #tpu.memory_space<vmem>>, vector<1x8x32xf32>,
    %c4_i32 = arith.constant 4 : i32
    %78 = arith.addi %1, %c4_i32 : i32
    %c0_67 = arith.constant 0 : index
    %c0_68 = arith.constant 0 : index
    %79 = arith.index_cast %78 : i32 to index
    %c0_69 = arith.constant 0 : index
    %80 = vector.load %arg5[%c0_67, %c0_68, %79, %c0_69] : memref<1x8x16x16xf32, #tpu.memory_space<vmem>>, vector<1x8x1x16xf32>
    %81 = vector.shape_cast %80 : vector<1x8x1x16xf32> to vector<8x16xf32>
    %c4_i32_70 = arith.constant 4 : i32
    %82 = arith.addi %1, %c4_i32_70 : i32
    %c0_71 = arith.constant 0 : index
    %c0_72 = arith.constant 0 : index
    %83 = arith.index_cast %82 : i32 to index
    %c0_73 = arith.constant 0 : index
    %84 = vector.load %arg6[%c0_71, %c0_72, %83, %c0_73] : memref<1x8x16x16xf32, #tpu.memory_space<vmem>>, vector<1x8x1x16xf32>
    %85 = vector.shape_cast %84 : vector<1x8x1x16xf32> to vector<8x16xf32>
    %86 = arith.addf %81, %85 : vector<8x16xf32>
    %c0_74 = arith.constant 0 : index
    %c0_75 = arith.constant 0 : index
    %87 = vector.load %arg7[%c0_74, %c0_75] : memref<8x8xf32, #tpu.memory_space<vmem>>, vector<8x8xf32>
    %cst_76 = arith.constant dense<0.000000e+00> : vector<8x16xf32>
    %88 = tpu.matmul %87, %86, %cst_76 {dimension_numbers = #tpu.dot_dimension_numbers<[1], [0], [0], [1], [0, 0, 1, 1], [], []>} : vector<8x8xf32>, vector<8x16xf32>, vector<8x16xf32> -> vector<8x16xf32>
    %c0_77 = arith.constant 0 : index
    %c0_78 = arith.constant 0 : index
    %89 = vector.load %arg9[%c0_77, %c0_78] : memref<8x1xf32, #tpu.memory_space<vmem>>, vector<8x1xf32>
    %90 = vector.broadcast %89 : vector<8x1xf32> to vector<8x16xf32>
    %91 = arith.addf %88, %90 : vector<8x16xf32>
    %c0_79 = arith.constant 0 : index
    %c0_80 = arith.constant 0 : index
    %92 = vector.load %arg8[%c0_79, %c0_80] : memref<16x32xf32, #tpu.memory_space<vmem>>, vector<16x32xf32>
    %cst_81 = arith.constant dense<0.000000e+00> : vector<8x32xf32>
    %93 = tpu.matmul %91, %92, %cst_81 {dimension_numbers = #tpu.dot_dimension_numbers<[1], [0], [0], [1], [0, 0, 1, 1], [], []>} : vector<8x16xf32>, vector<16x32xf32>, vector<8x32xf32> -> vector<8x32xf32>
    %c4 = arith.constant 4 : index
    %c0_82 = arith.constant 0 : index
    %c0_83 = arith.constant 0 : index
    %94 = vector.load %arg11[%c4, %c0_82, %c0_83] : memref<6x8x32xf32, #tpu.memory_space<vmem>>, vector<1x8x32xf32>
    %95 = vector.shape_cast %94 : vector<1x8x32xf32> to vector<8x32xf32>
    %96 = vector.shape_cast %93 : vector<8x32xf32> to vector<1x8x32xf32>
    tpu.vector_store %arg11[%c4, %c0_82, %c0_83], %96 {strides = array<i32>} : memref<6x8x32xf32, #tpu.memory_space<vmem>>, vector<1x8x32xf32>,
    %c5_i32 = arith.constant 5 : i32
    %97 = arith.addi %1, %c5_i32 : i32
    %c0_84 = arith.constant 0 : index
    %c0_85 = arith.constant 0 : index
    %98 = arith.index_cast %97 : i32 to index
    %c0_86 = arith.constant 0 : index
    %99 = vector.load %arg5[%c0_84, %c0_85, %98, %c0_86] : memref<1x8x16x16xf32, #tpu.memory_space<vmem>>, vector<1x8x1x16xf32>
    %100 = vector.shape_cast %99 : vector<1x8x1x16xf32> to vector<8x16xf32>
    %c5_i32_87 = arith.constant 5 : i32
    %101 = arith.addi %1, %c5_i32_87 : i32
    %c0_88 = arith.constant 0 : index
    %c0_89 = arith.constant 0 : index
    %102 = arith.index_cast %101 : i32 to index
    %c0_90 = arith.constant 0 : index
    %103 = vector.load %arg6[%c0_88, %c0_89, %102, %c0_90] : memref<1x8x16x16xf32, #tpu.memory_space<vmem>>, vector<1x8x1x16xf32>
    %104 = vector.shape_cast %103 : vector<1x8x1x16xf32> to vector<8x16xf32>
    %105 = arith.addf %100, %104 : vector<8x16xf32>
    %c0_91 = arith.constant 0 : index
    %c0_92 = arith.constant 0 : index
    %106 = vector.load %arg7[%c0_91, %c0_92] : memref<8x8xf32, #tpu.memory_space<vmem>>, vector<8x8xf32>
    %cst_93 = arith.constant dense<0.000000e+00> : vector<8x16xf32>
    %107 = tpu.matmul %106, %105, %cst_93 {dimension_numbers = #tpu.dot_dimension_numbers<[1], [0], [0], [1], [0, 0, 1, 1], [], []>} : vector<8x8xf32>, vector<8x16xf32>, vector<8x16xf32> -> vector<8x16xf32>
    %c0_94 = arith.constant 0 : index
    %c0_95 = arith.constant 0 : index
    %108 = vector.load %arg9[%c0_94, %c0_95] : memref<8x1xf32, #tpu.memory_space<vmem>>, vector<8x1xf32>
    %109 = vector.broadcast %108 : vector<8x1xf32> to vector<8x16xf32>
    %110 = arith.addf %107, %109 : vector<8x16xf32>
    %c0_96 = arith.constant 0 : index
    %c0_97 = arith.constant 0 : index
    %111 = vector.load %arg8[%c0_96, %c0_97] : memref<16x32xf32, #tpu.memory_space<vmem>>, vector<16x32xf32>
    %cst_98 = arith.constant dense<0.000000e+00> : vector<8x32xf32>
    %112 = tpu.matmul %110, %111, %cst_98 {dimension_numbers = #tpu.dot_dimension_numbers<[1], [0], [0], [1], [0, 0, 1, 1], [], []>} : vector<8x16xf32>, vector<16x32xf32>, vector<8x32xf32> -> vector<8x32xf32>
    %c5 = arith.constant 5 : index
    %c0_99 = arith.constant 0 : index
    %c0_100 = arith.constant 0 : index
    %113 = vector.load %arg11[%c5, %c0_99, %c0_100] : memref<6x8x32xf32, #tpu.memory_space<vmem>>, vector<1x8x32xf32>
    %114 = vector.shape_cast %113 : vector<1x8x32xf32> to vector<8x32xf32>
    %115 = vector.shape_cast %112 : vector<8x32xf32> to vector<1x8x32xf32>
    tpu.vector_store %arg11[%c5, %c0_99, %c0_100], %115 {strides = array<i32>} : memref<6x8x32xf32, #tpu.memory_space<vmem>>, vector<1x8x32xf32>,
    %c8_i32 = arith.constant 8 : i32
    %116 = arith.muli %arg1, %c8_i32 : i32
    %c0_i32_101 = arith.constant 0 : i32
    %117 = arith.addi %116, %c0_i32_101 : i32
    %118 = arith.index_cast %117 : i32 to index
    %119 = memref.load %arg3[%118] : memref<32xi32, #tpu.memory_space<smem>>
    %c8_i32_102 = arith.constant 8 : i32
    %120 = arith.muli %arg1, %c8_i32_102 : i32
    %c0_i32_103 = arith.constant 0 : i32
    %121 = arith.addi %120, %c0_i32_103 : i32
    %122 = arith.index_cast %121 : i32 to index
    %123 = memref.load %arg4[%122] : memref<32xf32, #tpu.memory_space<smem>>
    %cst_104 = arith.constant 1.000000e+00 : f32
    %124 = arith.subf %cst_104, %123 : f32
    %125 = arith.index_cast %119 : i32 to index
    %c0_105 = arith.constant 0 : index
    %c0_106 = arith.constant 0 : index
    %126 = vector.load %arg11[%125, %c0_105, %c0_106] : memref<6x8x32xf32, #tpu.memory_space<vmem>>, vector<1x8x32xf32>
    %127 = vector.shape_cast %126 : vector<1x8x32xf32> to vector<8x32xf32>
    %128 = vector.broadcast %124 : f32 to vector<8x32xf32>
    %129 = arith.mulf %128, %127 : vector<8x32xf32>
    %c1_i32_107 = arith.constant 1 : i32
    %130 = arith.addi %119, %c1_i32_107 : i32
    %131 = arith.index_cast %130 : i32 to index
    %c0_108 = arith.constant 0 : index
    %c0_109 = arith.constant 0 : index
    %132 = vector.load %arg11[%131, %c0_108, %c0_109] : memref<6x8x32xf32, #tpu.memory_space<vmem>>, vector<1x8x32xf32>
    %133 = vector.shape_cast %132 : vector<1x8x32xf32> to vector<8x32xf32>
    %134 = vector.broadcast %123 : f32 to vector<8x32xf32>
    %135 = arith.mulf %134, %133 : vector<8x32xf32>
    %136 = arith.addf %129, %135 : vector<8x32xf32>
    %c0_110 = arith.constant 0 : index
    %c0_111 = arith.constant 0 : index
    %c0_112 = arith.constant 0 : index
    %137 = vector.load %arg10[%c0_110, %c0_111, %c0_112] : memref<1x8x256xf32, #tpu.memory_space<vmem>>, vector<1x8x32xf32>
    %138 = vector.shape_cast %137 : vector<1x8x32xf32> to vector<8x32xf32>
    %139 = vector.shape_cast %136 : vector<8x32xf32> to vector<1x8x32xf32>
    tpu.vector_store %arg10[%c0_110, %c0_111, %c0_112], %139 {strides = array<i32>} : memref<1x8x256xf32, #tpu.memory_space<vmem>>, vector<1x8x32xf32>,
    %c8_i32_113 = arith.constant 8 : i32
    %140 = arith.muli %arg1, %c8_i32_113 : i32
    %c1_i32_114 = arith.constant 1 : i32
    %141 = arith.addi %140, %c1_i32_114 : i32
    %142 = arith.index_cast %141 : i32 to index
    %143 = memref.load %arg3[%142] : memref<32xi32, #tpu.memory_space<smem>>
    %c8_i32_115 = arith.constant 8 : i32
    %144 = arith.muli %arg1, %c8_i32_115 : i32
    %c1_i32_116 = arith.constant 1 : i32
    %145 = arith.addi %144, %c1_i32_116 : i32
    %146 = arith.index_cast %145 : i32 to index
    %147 = memref.load %arg4[%146] : memref<32xf32, #tpu.memory_space<smem>>
    %cst_117 = arith.constant 1.000000e+00 : f32
    %148 = arith.subf %cst_117, %147 : f32
    %149 = arith.index_cast %143 : i32 to index
    %c0_118 = arith.constant 0 : index
    %c0_119 = arith.constant 0 : index
    %150 = vector.load %arg11[%149, %c0_118, %c0_119] : memref<6x8x32xf32, #tpu.memory_space<vmem>>, vector<1x8x32xf32>
    %151 = vector.shape_cast %150 : vector<1x8x32xf32> to vector<8x32xf32>
    %152 = vector.broadcast %148 : f32 to vector<8x32xf32>
    %153 = arith.mulf %152, %151 : vector<8x32xf32>
    %c1_i32_120 = arith.constant 1 : i32
    %154 = arith.addi %143, %c1_i32_120 : i32
    %155 = arith.index_cast %154 : i32 to index
    %c0_121 = arith.constant 0 : index
    %c0_122 = arith.constant 0 : index
    %156 = vector.load %arg11[%155, %c0_121, %c0_122] : memref<6x8x32xf32, #tpu.memory_space<vmem>>, vector<1x8x32xf32>
    %157 = vector.shape_cast %156 : vector<1x8x32xf32> to vector<8x32xf32>
    %158 = vector.broadcast %147 : f32 to vector<8x32xf32>
    %159 = arith.mulf %158, %157 : vector<8x32xf32>
    %160 = arith.addf %153, %159 : vector<8x32xf32>
    %c0_123 = arith.constant 0 : index
    %c0_124 = arith.constant 0 : index
    %c32 = arith.constant 32 : index
    %161 = vector.load %arg10[%c0_123, %c0_124, %c32] : memref<1x8x256xf32, #tpu.memory_space<vmem>>, vector<1x8x32xf32>
    %162 = vector.shape_cast %161 : vector<1x8x32xf32> to vector<8x32xf32>
    %163 = vector.shape_cast %160 : vector<8x32xf32> to vector<1x8x32xf32>
    tpu.vector_store %arg10[%c0_123, %c0_124, %c32], %163 {strides = array<i32>} : memref<1x8x256xf32, #tpu.memory_space<vmem>>, vector<1x8x32xf32>,
    %c8_i32_125 = arith.constant 8 : i32
    %164 = arith.muli %arg1, %c8_i32_125 : i32
    %c2_i32_126 = arith.constant 2 : i32
    %165 = arith.addi %164, %c2_i32_126 : i32
    %166 = arith.index_cast %165 : i32 to index
    %167 = memref.load %arg3[%166] : memref<32xi32, #tpu.memory_space<smem>>
    %c8_i32_127 = arith.constant 8 : i32
    %168 = arith.muli %arg1, %c8_i32_127 : i32
    %c2_i32_128 = arith.constant 2 : i32
    %169 = arith.addi %168, %c2_i32_128 : i32
    %170 = arith.index_cast %169 : i32 to index
    %171 = memref.load %arg4[%170] : memref<32xf32, #tpu.memory_space<smem>>
    %cst_129 = arith.constant 1.000000e+00 : f32
    %172 = arith.subf %cst_129, %171 : f32
    %173 = arith.index_cast %167 : i32 to index
    %c0_130 = arith.constant 0 : index
    %c0_131 = arith.constant 0 : index
    %174 = vector.load %arg11[%173, %c0_130, %c0_131] : memref<6x8x32xf32, #tpu.memory_space<vmem>>, vector<1x8x32xf32>
    %175 = vector.shape_cast %174 : vector<1x8x32xf32> to vector<8x32xf32>
    %176 = vector.broadcast %172 : f32 to vector<8x32xf32>
    %177 = arith.mulf %176, %175 : vector<8x32xf32>
    %c1_i32_132 = arith.constant 1 : i32
    %178 = arith.addi %167, %c1_i32_132 : i32
    %179 = arith.index_cast %178 : i32 to index
    %c0_133 = arith.constant 0 : index
    %c0_134 = arith.constant 0 : index
    %180 = vector.load %arg11[%179, %c0_133, %c0_134] : memref<6x8x32xf32, #tpu.memory_space<vmem>>, vector<1x8x32xf32>
    %181 = vector.shape_cast %180 : vector<1x8x32xf32> to vector<8x32xf32>
    %182 = vector.broadcast %171 : f32 to vector<8x32xf32>
    %183 = arith.mulf %182, %181 : vector<8x32xf32>
    %184 = arith.addf %177, %183 : vector<8x32xf32>
    %c0_135 = arith.constant 0 : index
    %c0_136 = arith.constant 0 : index
    %c64 = arith.constant 64 : index
    %185 = vector.load %arg10[%c0_135, %c0_136, %c64] : memref<1x8x256xf32, #tpu.memory_space<vmem>>, vector<1x8x32xf32>
    %186 = vector.shape_cast %185 : vector<1x8x32xf32> to vector<8x32xf32>
    %187 = vector.shape_cast %184 : vector<8x32xf32> to vector<1x8x32xf32>
    tpu.vector_store %arg10[%c0_135, %c0_136, %c64], %187 {strides = array<i32>} : memref<1x8x256xf32, #tpu.memory_space<vmem>>, vector<1x8x32xf32>,
    %c8_i32_137 = arith.constant 8 : i32
    %188 = arith.muli %arg1, %c8_i32_137 : i32
    %c3_i32_138 = arith.constant 3 : i32
    %189 = arith.addi %188, %c3_i32_138 : i32
    %190 = arith.index_cast %189 : i32 to index
    %191 = memref.load %arg3[%190] : memref<32xi32, #tpu.memory_space<smem>>
    %c8_i32_139 = arith.constant 8 : i32
    %192 = arith.muli %arg1, %c8_i32_139 : i32
    %c3_i32_140 = arith.constant 3 : i32
    %193 = arith.addi %192, %c3_i32_140 : i32
    %194 = arith.index_cast %193 : i32 to index
    %195 = memref.load %arg4[%194] : memref<32xf32, #tpu.memory_space<smem>>
    %cst_141 = arith.constant 1.000000e+00 : f32
    %196 = arith.subf %cst_141, %195 : f32
    %197 = arith.index_cast %191 : i32 to index
    %c0_142 = arith.constant 0 : index
    %c0_143 = arith.constant 0 : index
    %198 = vector.load %arg11[%197, %c0_142, %c0_143] : memref<6x8x32xf32, #tpu.memory_space<vmem>>, vector<1x8x32xf32>
    %199 = vector.shape_cast %198 : vector<1x8x32xf32> to vector<8x32xf32>
    %200 = vector.broadcast %196 : f32 to vector<8x32xf32>
    %201 = arith.mulf %200, %199 : vector<8x32xf32>
    %c1_i32_144 = arith.constant 1 : i32
    %202 = arith.addi %191, %c1_i32_144 : i32
    %203 = arith.index_cast %202 : i32 to index
    %c0_145 = arith.constant 0 : index
    %c0_146 = arith.constant 0 : index
    %204 = vector.load %arg11[%203, %c0_145, %c0_146] : memref<6x8x32xf32, #tpu.memory_space<vmem>>, vector<1x8x32xf32>
    %205 = vector.shape_cast %204 : vector<1x8x32xf32> to vector<8x32xf32>
    %206 = vector.broadcast %195 : f32 to vector<8x32xf32>
    %207 = arith.mulf %206, %205 : vector<8x32xf32>
    %208 = arith.addf %201, %207 : vector<8x32xf32>
    %c0_147 = arith.constant 0 : index
    %c0_148 = arith.constant 0 : index
    %c96 = arith.constant 96 : index
    %209 = vector.load %arg10[%c0_147, %c0_148, %c96] : memref<1x8x256xf32, #tpu.memory_space<vmem>>, vector<1x8x32xf32>
    %210 = vector.shape_cast %209 : vector<1x8x32xf32> to vector<8x32xf32>
    %211 = vector.shape_cast %208 : vector<8x32xf32> to vector<1x8x32xf32>
    tpu.vector_store %arg10[%c0_147, %c0_148, %c96], %211 {strides = array<i32>} : memref<1x8x256xf32, #tpu.memory_space<vmem>>, vector<1x8x32xf32>,
    %c8_i32_149 = arith.constant 8 : i32
    %212 = arith.muli %arg1, %c8_i32_149 : i32
    %c4_i32_150 = arith.constant 4 : i32
    %213 = arith.addi %212, %c4_i32_150 : i32
    %214 = arith.index_cast %213 : i32 to index
    %215 = memref.load %arg3[%214] : memref<32xi32, #tpu.memory_space<smem>>
    %c8_i32_151 = arith.constant 8 : i32
    %216 = arith.muli %arg1, %c8_i32_151 : i32
    %c4_i32_152 = arith.constant 4 : i32
    %217 = arith.addi %216, %c4_i32_152 : i32
    %218 = arith.index_cast %217 : i32 to index
    %219 = memref.load %arg4[%218] : memref<32xf32, #tpu.memory_space<smem>>
    %cst_153 = arith.constant 1.000000e+00 : f32
    %220 = arith.subf %cst_153, %219 : f32
    %221 = arith.index_cast %215 : i32 to index
    %c0_154 = arith.constant 0 : index
    %c0_155 = arith.constant 0 : index
    %222 = vector.load %arg11[%221, %c0_154, %c0_155] : memref<6x8x32xf32, #tpu.memory_space<vmem>>, vector<1x8x32xf32>
    %223 = vector.shape_cast %222 : vector<1x8x32xf32> to vector<8x32xf32>
    %224 = vector.broadcast %220 : f32 to vector<8x32xf32>
    %225 = arith.mulf %224, %223 : vector<8x32xf32>
    %c1_i32_156 = arith.constant 1 : i32
    %226 = arith.addi %215, %c1_i32_156 : i32
    %227 = arith.index_cast %226 : i32 to index
    %c0_157 = arith.constant 0 : index
    %c0_158 = arith.constant 0 : index
    %228 = vector.load %arg11[%227, %c0_157, %c0_158] : memref<6x8x32xf32, #tpu.memory_space<vmem>>, vector<1x8x32xf32>
    %229 = vector.shape_cast %228 : vector<1x8x32xf32> to vector<8x32xf32>
    %230 = vector.broadcast %219 : f32 to vector<8x32xf32>
    %231 = arith.mulf %230, %229 : vector<8x32xf32>
    %232 = arith.addf %225, %231 : vector<8x32xf32>
    %c0_159 = arith.constant 0 : index
    %c0_160 = arith.constant 0 : index
    %c128 = arith.constant 128 : index
    %233 = vector.load %arg10[%c0_159, %c0_160, %c128] : memref<1x8x256xf32, #tpu.memory_space<vmem>>, vector<1x8x32xf32>
    %234 = vector.shape_cast %233 : vector<1x8x32xf32> to vector<8x32xf32>
    %235 = vector.shape_cast %232 : vector<8x32xf32> to vector<1x8x32xf32>
    tpu.vector_store %arg10[%c0_159, %c0_160, %c128], %235 {strides = array<i32>} : memref<1x8x256xf32, #tpu.memory_space<vmem>>, vector<1x8x32xf32>,
    %c8_i32_161 = arith.constant 8 : i32
    %236 = arith.muli %arg1, %c8_i32_161 : i32
    %c5_i32_162 = arith.constant 5 : i32
    %237 = arith.addi %236, %c5_i32_162 : i32
    %238 = arith.index_cast %237 : i32 to index
    %239 = memref.load %arg3[%238] : memref<32xi32, #tpu.memory_space<smem>>
    %c8_i32_163 = arith.constant 8 : i32
    %240 = arith.muli %arg1, %c8_i32_163 : i32
    %c5_i32_164 = arith.constant 5 : i32
    %241 = arith.addi %240, %c5_i32_164 : i32
    %242 = arith.index_cast %241 : i32 to index
    %243 = memref.load %arg4[%242] : memref<32xf32, #tpu.memory_space<smem>>
    %cst_165 = arith.constant 1.000000e+00 : f32
    %244 = arith.subf %cst_165, %243 : f32
    %245 = arith.index_cast %239 : i32 to index
    %c0_166 = arith.constant 0 : index
    %c0_167 = arith.constant 0 : index
    %246 = vector.load %arg11[%245, %c0_166, %c0_167] : memref<6x8x32xf32, #tpu.memory_space<vmem>>, vector<1x8x32xf32>
    %247 = vector.shape_cast %246 : vector<1x8x32xf32> to vector<8x32xf32>
    %248 = vector.broadcast %244 : f32 to vector<8x32xf32>
    %249 = arith.mulf %248, %247 : vector<8x32xf32>
    %c1_i32_168 = arith.constant 1 : i32
    %250 = arith.addi %239, %c1_i32_168 : i32
    %251 = arith.index_cast %250 : i32 to index
    %c0_169 = arith.constant 0 : index
    %c0_170 = arith.constant 0 : index
    %252 = vector.load %arg11[%251, %c0_169, %c0_170] : memref<6x8x32xf32, #tpu.memory_space<vmem>>, vector<1x8x32xf32>
    %253 = vector.shape_cast %252 : vector<1x8x32xf32> to vector<8x32xf32>
    %254 = vector.broadcast %243 : f32 to vector<8x32xf32>
    %255 = arith.mulf %254, %253 : vector<8x32xf32>
    %256 = arith.addf %249, %255 : vector<8x32xf32>
    %c0_171 = arith.constant 0 : index
    %c0_172 = arith.constant 0 : index
    %c160 = arith.constant 160 : index
    %257 = vector.load %arg10[%c0_171, %c0_172, %c160] : memref<1x8x256xf32, #tpu.memory_space<vmem>>, vector<1x8x32xf32>
    %258 = vector.shape_cast %257 : vector<1x8x32xf32> to vector<8x32xf32>
    %259 = vector.shape_cast %256 : vector<8x32xf32> to vector<1x8x32xf32>
    tpu.vector_store %arg10[%c0_171, %c0_172, %c160], %259 {strides = array<i32>} : memref<1x8x256xf32, #tpu.memory_space<vmem>>, vector<1x8x32xf32>,
    %c8_i32_173 = arith.constant 8 : i32
    %260 = arith.muli %arg1, %c8_i32_173 : i32
    %c6_i32 = arith.constant 6 : i32
    %261 = arith.addi %260, %c6_i32 : i32
    %262 = arith.index_cast %261 : i32 to index
    %263 = memref.load %arg3[%262] : memref<32xi32, #tpu.memory_space<smem>>
    %c8_i32_174 = arith.constant 8 : i32
    %264 = arith.muli %arg1, %c8_i32_174 : i32
    %c6_i32_175 = arith.constant 6 : i32
    %265 = arith.addi %264, %c6_i32_175 : i32
    %266 = arith.index_cast %265 : i32 to index
    %267 = memref.load %arg4[%266] : memref<32xf32, #tpu.memory_space<smem>>
    %cst_176 = arith.constant 1.000000e+00 : f32
    %268 = arith.subf %cst_176, %267 : f32
    %269 = arith.index_cast %263 : i32 to index
    %c0_177 = arith.constant 0 : index
    %c0_178 = arith.constant 0 : index
    %270 = vector.load %arg11[%269, %c0_177, %c0_178] : memref<6x8x32xf32, #tpu.memory_space<vmem>>, vector<1x8x32xf32>
    %271 = vector.shape_cast %270 : vector<1x8x32xf32> to vector<8x32xf32>
    %272 = vector.broadcast %268 : f32 to vector<8x32xf32>
    %273 = arith.mulf %272, %271 : vector<8x32xf32>
    %c1_i32_179 = arith.constant 1 : i32
    %274 = arith.addi %263, %c1_i32_179 : i32
    %275 = arith.index_cast %274 : i32 to index
    %c0_180 = arith.constant 0 : index
    %c0_181 = arith.constant 0 : index
    %276 = vector.load %arg11[%275, %c0_180, %c0_181] : memref<6x8x32xf32, #tpu.memory_space<vmem>>, vector<1x8x32xf32>
    %277 = vector.shape_cast %276 : vector<1x8x32xf32> to vector<8x32xf32>
    %278 = vector.broadcast %267 : f32 to vector<8x32xf32>
    %279 = arith.mulf %278, %277 : vector<8x32xf32>
    %280 = arith.addf %273, %279 : vector<8x32xf32>
    %c0_182 = arith.constant 0 : index
    %c0_183 = arith.constant 0 : index
    %c192 = arith.constant 192 : index
    %281 = vector.load %arg10[%c0_182, %c0_183, %c192] : memref<1x8x256xf32, #tpu.memory_space<vmem>>, vector<1x8x32xf32>
    %282 = vector.shape_cast %281 : vector<1x8x32xf32> to vector<8x32xf32>
    %283 = vector.shape_cast %280 : vector<8x32xf32> to vector<1x8x32xf32>
    tpu.vector_store %arg10[%c0_182, %c0_183, %c192], %283 {strides = array<i32>} : memref<1x8x256xf32, #tpu.memory_space<vmem>>, vector<1x8x32xf32>,
    %c8_i32_184 = arith.constant 8 : i32
    %284 = arith.muli %arg1, %c8_i32_184 : i32
    %c7_i32 = arith.constant 7 : i32
    %285 = arith.addi %284, %c7_i32 : i32
    %286 = arith.index_cast %285 : i32 to index
    %287 = memref.load %arg3[%286] : memref<32xi32, #tpu.memory_space<smem>>
    %c8_i32_185 = arith.constant 8 : i32
    %288 = arith.muli %arg1, %c8_i32_185 : i32
    %c7_i32_186 = arith.constant 7 : i32
    %289 = arith.addi %288, %c7_i32_186 : i32
    %290 = arith.index_cast %289 : i32 to index
    %291 = memref.load %arg4[%290] : memref<32xf32, #tpu.memory_space<smem>>
    %cst_187 = arith.constant 1.000000e+00 : f32
    %292 = arith.subf %cst_187, %291 : f32
    %293 = arith.index_cast %287 : i32 to index
    %c0_188 = arith.constant 0 : index
    %c0_189 = arith.constant 0 : index
    %294 = vector.load %arg11[%293, %c0_188, %c0_189] : memref<6x8x32xf32, #tpu.memory_space<vmem>>, vector<1x8x32xf32>
    %295 = vector.shape_cast %294 : vector<1x8x32xf32> to vector<8x32xf32>
    %296 = vector.broadcast %292 : f32 to vector<8x32xf32>
    %297 = arith.mulf %296, %295 : vector<8x32xf32>
    %c1_i32_190 = arith.constant 1 : i32
    %298 = arith.addi %287, %c1_i32_190 : i32
    %299 = arith.index_cast %298 : i32 to index
    %c0_191 = arith.constant 0 : index
    %c0_192 = arith.constant 0 : index
    %300 = vector.load %arg11[%299, %c0_191, %c0_192] : memref<6x8x32xf32, #tpu.memory_space<vmem>>, vector<1x8x32xf32>
    %301 = vector.shape_cast %300 : vector<1x8x32xf32> to vector<8x32xf32>
    %302 = vector.broadcast %291 : f32 to vector<8x32xf32>
    %303 = arith.mulf %302, %301 : vector<8x32xf32>
    %304 = arith.addf %297, %303 : vector<8x32xf32>
    %c0_193 = arith.constant 0 : index
    %c0_194 = arith.constant 0 : index
    %c224 = arith.constant 224 : index
    %305 = vector.load %arg10[%c0_193, %c0_194, %c224] : memref<1x8x256xf32, #tpu.memory_space<vmem>>, vector<1x8x32xf32>
    %306 = vector.shape_cast %305 : vector<1x8x32xf32> to vector<8x32xf32>
    %307 = vector.shape_cast %304 : vector<8x32xf32> to vector<1x8x32xf32>
    tpu.vector_store %arg10[%c0_193, %c0_194, %c224], %307 {strides = array<i32>} : memref<1x8x256xf32, #tpu.memory_space<vmem>>, vector<1x8x32xf32>,
    return
  }
  func.func @transform_0(%arg0: i32, %arg1: i32, %arg2: memref<4xi32, #tpu.memory_space<smem>>, %arg3: memref<32xi32, #tpu.memory_space<smem>>, %arg4: memref<32xf32, #tpu.memory_space<smem>>) -> (i32, i32, i32, i32) {
    %c0_i32 = arith.constant 0 : i32
    %c0_i32_0 = arith.constant 0 : i32
    %c0_i32_1 = arith.constant 0 : i32
    %c0_i32_2 = arith.constant 0 : i32
    return %arg0, %c0_i32, %c0_i32_0, %c0_i32_1 : i32, i32, i32, i32
  }
  func.func @transform_1(%arg0: i32, %arg1: i32, %arg2: memref<4xi32, #tpu.memory_space<smem>>, %arg3: memref<32xi32, #tpu.memory_space<smem>>, %arg4: memref<32xf32, #tpu.memory_space<smem>>) -> (i32, i32, i32, i32) {
    %c0_i32 = arith.constant 0 : i32
    %c0_i32_0 = arith.constant 0 : i32
    %c0_i32_1 = arith.constant 0 : i32
    %c0_i32_2 = arith.constant 0 : i32
    return %arg0, %c0_i32, %c0_i32_0, %c0_i32_1 : i32, i32, i32, i32
  }
  func.func @transform_2(%arg0: i32, %arg1: i32, %arg2: memref<4xi32, #tpu.memory_space<smem>>, %arg3: memref<32xi32, #tpu.memory_space<smem>>, %arg4: memref<32xf32, #tpu.memory_space<smem>>) -> (i32, i32) {
    %c0_i32 = arith.constant 0 : i32
    %c0_i32_0 = arith.constant 0 : i32
    %c0_i32_1 = arith.constant 0 : i32
    return %c0_i32, %c0_i32_0 : i32, i32
  }
  func.func @transform_3(%arg0: i32, %arg1: i32, %arg2: memref<4xi32, #tpu.memory_space<smem>>, %arg3: memref<32xi32, #tpu.memory_space<smem>>, %arg4: memref<32xf32, #tpu.memory_space<smem>>) -> (i32, i32) {
    %c0_i32 = arith.constant 0 : i32
    %c0_i32_0 = arith.constant 0 : i32
    %c0_i32_1 = arith.constant 0 : i32
    return %c0_i32, %c0_i32_0 : i32, i32
  }
  func.func @transform_4(%arg0: i32, %arg1: i32, %arg2: memref<4xi32, #tpu.memory_space<smem>>, %arg3: memref<32xi32, #tpu.memory_space<smem>>, %arg4: memref<32xf32, #tpu.memory_space<smem>>) -> (i32, i32) {
    %c0_i32 = arith.constant 0 : i32
    %c0_i32_0 = arith.constant 0 : i32
    %c0_i32_1 = arith.constant 0 : i32
    return %c0_i32, %c0_i32_0 : i32, i32
  }
  func.func @transform_5(%arg0: i32, %arg1: i32, %arg2: memref<4xi32, #tpu.memory_space<smem>>, %arg3: memref<32xi32, #tpu.memory_space<smem>>, %arg4: memref<32xf32, #tpu.memory_space<smem>>) -> (i32, i32, i32) {
    %c0_i32 = arith.constant 0 : i32
    %c0_i32_0 = arith.constant 0 : i32
    return %arg0, %c0_i32, %arg1 : i32, i32, i32
  }
}

module attributes {stable_mosaic.version = 11 : i64} {
  func.func @kernel(%arg0: i32, %arg1: i32, %arg2: memref<4xi32, #tpu.memory_space<smem>>, %arg3: memref<32xi32, #tpu.memory_space<smem>>, %arg4: memref<32xf32, #tpu.memory_space<smem>>, %arg5: memref<1x8x16x16xf32, #tpu.memory_space<vmem>>, %arg6: memref<1x8x16x16xf32, #tpu.memory_space<vmem>>, %arg7: memref<8x8xf32, #tpu.memory_space<vmem>>, %arg8: memref<16x32xf32, #tpu.memory_space<vmem>>, %arg9: memref<8x1xf32, #tpu.memory_space<vmem>>, %arg10: memref<1x8x256xf32, #tpu.memory_space<vmem>>, %arg11: memref<6x8x32xf32, #tpu.memory_space<vmem>>) attributes {dimension_semantics = [#tpu.dimension_semantics<parallel>, #tpu.dimension_semantics<parallel>], iteration_bounds = array<i64: 2, 4>, scalar_prefetch = 3 : i64, scratch_operands = 1 : i64, tpu.core_type = #tpu.core_type<tc>, window_params = [{transform_indices = @transform_0, window_bounds = array<i64: 1, 8, 16, 16>}, {transform_indices = @transform_1, window_bounds = array<i64: 1, 8, 16, 16>}, {pipeline_mode = #tpu.pipeline_mode<synchronous>, transform_indices = @transform_2, window_bounds = array<i64: 8, 8>}, {pipeline_mode = #tpu.pipeline_mode<synchronous>, transform_indices = @transform_3, window_bounds = array<i64: 16, 32>}, {pipeline_mode = #tpu.pipeline_mode<synchronous>, transform_indices = @transform_4, window_bounds = array<i64: 8, 1>}, {transform_indices = @transform_5, window_bounds = array<i64: 1, 8, 256>}]} {
    %0 = arith.index_cast %arg1 : i32 to index
    %1 = memref.load %arg2[%0] : memref<4xi32, #tpu.memory_space<smem>>
    %c0_i32 = arith.constant 0 : i32
    %2 = arith.addi %1, %c0_i32 : i32
    %c0 = arith.constant 0 : index
    %c0_0 = arith.constant 0 : index
    %3 = arith.index_cast %2 : i32 to index
    %c0_1 = arith.constant 0 : index
    %4 = vector.load %arg5[%c0, %c0_0, %3, %c0_1] : memref<1x8x16x16xf32, #tpu.memory_space<vmem>>, vector<1x8x1x16xf32>
    %5 = vector.shape_cast %4 : vector<1x8x1x16xf32> to vector<8x16xf32>
    %c0_i32_2 = arith.constant 0 : i32
    %6 = arith.addi %1, %c0_i32_2 : i32
    %c0_3 = arith.constant 0 : index
    %c0_4 = arith.constant 0 : index
    %7 = arith.index_cast %6 : i32 to index
    %c0_5 = arith.constant 0 : index
    %8 = vector.load %arg6[%c0_3, %c0_4, %7, %c0_5] : memref<1x8x16x16xf32, #tpu.memory_space<vmem>>, vector<1x8x1x16xf32>
    %9 = vector.shape_cast %8 : vector<1x8x1x16xf32> to vector<8x16xf32>
    %10 = arith.addf %5, %9 : vector<8x16xf32>
    %c0_6 = arith.constant 0 : index
    %c0_7 = arith.constant 0 : index
    %11 = vector.load %arg7[%c0_6, %c0_7] : memref<8x8xf32, #tpu.memory_space<vmem>>, vector<8x8xf32>
    %cst = arith.constant dense<0.000000e+00> : vector<8x16xf32>
    %12 = tpu.matmul %11, %10, %cst {dimension_numbers = #tpu.dot_dimension_numbers<[1], [0], [0], [1], [0, 0, 1, 1], [], []>} : vector<8x8xf32>, vector<8x16xf32>, vector<8x16xf32> -> vector<8x16xf32>
    %c0_8 = arith.constant 0 : index
    %c0_9 = arith.constant 0 : index
    %13 = vector.load %arg9[%c0_8, %c0_9] : memref<8x1xf32, #tpu.memory_space<vmem>>, vector<8x1xf32>
    %14 = vector.broadcast %13 : vector<8x1xf32> to vector<8x16xf32>
    %15 = arith.addf %12, %14 : vector<8x16xf32>
    %c0_10 = arith.constant 0 : index
    %c0_11 = arith.constant 0 : index
    %16 = vector.load %arg8[%c0_10, %c0_11] : memref<16x32xf32, #tpu.memory_space<vmem>>, vector<16x32xf32>
    %cst_12 = arith.constant dense<0.000000e+00> : vector<8x32xf32>
    %17 = tpu.matmul %15, %16, %cst_12 {dimension_numbers = #tpu.dot_dimension_numbers<[1], [0], [0], [1], [0, 0, 1, 1], [], []>} : vector<8x16xf32>, vector<16x32xf32>, vector<8x32xf32> -> vector<8x32xf32>
    %c0_13 = arith.constant 0 : index
    %c0_14 = arith.constant 0 : index
    %c0_15 = arith.constant 0 : index
    %18 = vector.load %arg11[%c0_13, %c0_14, %c0_15] : memref<6x8x32xf32, #tpu.memory_space<vmem>>, vector<1x8x32xf32>
    %19 = vector.shape_cast %18 : vector<1x8x32xf32> to vector<8x32xf32>
    %20 = vector.shape_cast %17 : vector<8x32xf32> to vector<1x8x32xf32>
    tpu.vector_store %arg11[%c0_13, %c0_14, %c0_15], %20 {strides = array<i32>} : memref<6x8x32xf32, #tpu.memory_space<vmem>>, vector<1x8x32xf32>,
    %c1_i32 = arith.constant 1 : i32
    %21 = arith.addi %1, %c1_i32 : i32
    %c0_16 = arith.constant 0 : index
    %c0_17 = arith.constant 0 : index
    %22 = arith.index_cast %21 : i32 to index
    %c0_18 = arith.constant 0 : index
    %23 = vector.load %arg5[%c0_16, %c0_17, %22, %c0_18] : memref<1x8x16x16xf32, #tpu.memory_space<vmem>>, vector<1x8x1x16xf32>
    %24 = vector.shape_cast %23 : vector<1x8x1x16xf32> to vector<8x16xf32>
    %c1_i32_19 = arith.constant 1 : i32
    %25 = arith.addi %1, %c1_i32_19 : i32
    %c0_20 = arith.constant 0 : index
    %c0_21 = arith.constant 0 : index
    %26 = arith.index_cast %25 : i32 to index
    %c0_22 = arith.constant 0 : index
    %27 = vector.load %arg6[%c0_20, %c0_21, %26, %c0_22] : memref<1x8x16x16xf32, #tpu.memory_space<vmem>>, vector<1x8x1x16xf32>
    %28 = vector.shape_cast %27 : vector<1x8x1x16xf32> to vector<8x16xf32>
    %29 = arith.addf %24, %28 : vector<8x16xf32>
    %c0_23 = arith.constant 0 : index
    %c0_24 = arith.constant 0 : index
    %30 = vector.load %arg7[%c0_23, %c0_24] : memref<8x8xf32, #tpu.memory_space<vmem>>, vector<8x8xf32>
    %cst_25 = arith.constant dense<0.000000e+00> : vector<8x16xf32>
    %31 = tpu.matmul %30, %29, %cst_25 {dimension_numbers = #tpu.dot_dimension_numbers<[1], [0], [0], [1], [0, 0, 1, 1], [], []>} : vector<8x8xf32>, vector<8x16xf32>, vector<8x16xf32> -> vector<8x16xf32>
    %c0_26 = arith.constant 0 : index
    %c0_27 = arith.constant 0 : index
    %32 = vector.load %arg9[%c0_26, %c0_27] : memref<8x1xf32, #tpu.memory_space<vmem>>, vector<8x1xf32>
    %33 = vector.broadcast %32 : vector<8x1xf32> to vector<8x16xf32>
    %34 = arith.addf %31, %33 : vector<8x16xf32>
    %c0_28 = arith.constant 0 : index
    %c0_29 = arith.constant 0 : index
    %35 = vector.load %arg8[%c0_28, %c0_29] : memref<16x32xf32, #tpu.memory_space<vmem>>, vector<16x32xf32>
    %cst_30 = arith.constant dense<0.000000e+00> : vector<8x32xf32>
    %36 = tpu.matmul %34, %35, %cst_30 {dimension_numbers = #tpu.dot_dimension_numbers<[1], [0], [0], [1], [0, 0, 1, 1], [], []>} : vector<8x16xf32>, vector<16x32xf32>, vector<8x32xf32> -> vector<8x32xf32>
    %c1 = arith.constant 1 : index
    %c0_31 = arith.constant 0 : index
    %c0_32 = arith.constant 0 : index
    %37 = vector.load %arg11[%c1, %c0_31, %c0_32] : memref<6x8x32xf32, #tpu.memory_space<vmem>>, vector<1x8x32xf32>
    %38 = vector.shape_cast %37 : vector<1x8x32xf32> to vector<8x32xf32>
    %39 = vector.shape_cast %36 : vector<8x32xf32> to vector<1x8x32xf32>
    tpu.vector_store %arg11[%c1, %c0_31, %c0_32], %39 {strides = array<i32>} : memref<6x8x32xf32, #tpu.memory_space<vmem>>, vector<1x8x32xf32>,
    %c2_i32 = arith.constant 2 : i32
    %40 = arith.addi %1, %c2_i32 : i32
    %c0_33 = arith.constant 0 : index
    %c0_34 = arith.constant 0 : index
    %41 = arith.index_cast %40 : i32 to index
    %c0_35 = arith.constant 0 : index
    %42 = vector.load %arg5[%c0_33, %c0_34, %41, %c0_35] : memref<1x8x16x16xf32, #tpu.memory_space<vmem>>, vector<1x8x1x16xf32>
    %43 = vector.shape_cast %42 : vector<1x8x1x16xf32> to vector<8x16xf32>
    %c2_i32_36 = arith.constant 2 : i32
    %44 = arith.addi %1, %c2_i32_36 : i32
    %c0_37 = arith.constant 0 : index
    %c0_38 = arith.constant 0 : index
    %45 = arith.index_cast %44 : i32 to index
    %c0_39 = arith.constant 0 : index
    %46 = vector.load %arg6[%c0_37, %c0_38, %45, %c0_39] : memref<1x8x16x16xf32, #tpu.memory_space<vmem>>, vector<1x8x1x16xf32>
    %47 = vector.shape_cast %46 : vector<1x8x1x16xf32> to vector<8x16xf32>
    %48 = arith.addf %43, %47 : vector<8x16xf32>
    %c0_40 = arith.constant 0 : index
    %c0_41 = arith.constant 0 : index
    %49 = vector.load %arg7[%c0_40, %c0_41] : memref<8x8xf32, #tpu.memory_space<vmem>>, vector<8x8xf32>
    %cst_42 = arith.constant dense<0.000000e+00> : vector<8x16xf32>
    %50 = tpu.matmul %49, %48, %cst_42 {dimension_numbers = #tpu.dot_dimension_numbers<[1], [0], [0], [1], [0, 0, 1, 1], [], []>} : vector<8x8xf32>, vector<8x16xf32>, vector<8x16xf32> -> vector<8x16xf32>
    %c0_43 = arith.constant 0 : index
    %c0_44 = arith.constant 0 : index
    %51 = vector.load %arg9[%c0_43, %c0_44] : memref<8x1xf32, #tpu.memory_space<vmem>>, vector<8x1xf32>
    %52 = vector.broadcast %51 : vector<8x1xf32> to vector<8x16xf32>
    %53 = arith.addf %50, %52 : vector<8x16xf32>
    %c0_45 = arith.constant 0 : index
    %c0_46 = arith.constant 0 : index
    %54 = vector.load %arg8[%c0_45, %c0_46] : memref<16x32xf32, #tpu.memory_space<vmem>>, vector<16x32xf32>
    %cst_47 = arith.constant dense<0.000000e+00> : vector<8x32xf32>
    %55 = tpu.matmul %53, %54, %cst_47 {dimension_numbers = #tpu.dot_dimension_numbers<[1], [0], [0], [1], [0, 0, 1, 1], [], []>} : vector<8x16xf32>, vector<16x32xf32>, vector<8x32xf32> -> vector<8x32xf32>
    %c2 = arith.constant 2 : index
    %c0_48 = arith.constant 0 : index
    %c0_49 = arith.constant 0 : index
    %56 = vector.load %arg11[%c2, %c0_48, %c0_49] : memref<6x8x32xf32, #tpu.memory_space<vmem>>, vector<1x8x32xf32>
    %57 = vector.shape_cast %56 : vector<1x8x32xf32> to vector<8x32xf32>
    %58 = vector.shape_cast %55 : vector<8x32xf32> to vector<1x8x32xf32>
    tpu.vector_store %arg11[%c2, %c0_48, %c0_49], %58 {strides = array<i32>} : memref<6x8x32xf32, #tpu.memory_space<vmem>>, vector<1x8x32xf32>,
    %c3_i32 = arith.constant 3 : i32
    %59 = arith.addi %1, %c3_i32 : i32
    %c0_50 = arith.constant 0 : index
    %c0_51 = arith.constant 0 : index
    %60 = arith.index_cast %59 : i32 to index
    %c0_52 = arith.constant 0 : index
    %61 = vector.load %arg5[%c0_50, %c0_51, %60, %c0_52] : memref<1x8x16x16xf32, #tpu.memory_space<vmem>>, vector<1x8x1x16xf32>
    %62 = vector.shape_cast %61 : vector<1x8x1x16xf32> to vector<8x16xf32>
    %c3_i32_53 = arith.constant 3 : i32
    %63 = arith.addi %1, %c3_i32_53 : i32
    %c0_54 = arith.constant 0 : index
    %c0_55 = arith.constant 0 : index
    %64 = arith.index_cast %63 : i32 to index
    %c0_56 = arith.constant 0 : index
    %65 = vector.load %arg6[%c0_54, %c0_55, %64, %c0_56] : memref<1x8x16x16xf32, #tpu.memory_space<vmem>>, vector<1x8x1x16xf32>
    %66 = vector.shape_cast %65 : vector<1x8x1x16xf32> to vector<8x16xf32>
    %67 = arith.addf %62, %66 : vector<8x16xf32>
    %c0_57 = arith.constant 0 : index
    %c0_58 = arith.constant 0 : index
    %68 = vector.load %arg7[%c0_57, %c0_58] : memref<8x8xf32, #tpu.memory_space<vmem>>, vector<8x8xf32>
    %cst_59 = arith.constant dense<0.000000e+00> : vector<8x16xf32>
    %69 = tpu.matmul %68, %67, %cst_59 {dimension_numbers = #tpu.dot_dimension_numbers<[1], [0], [0], [1], [0, 0, 1, 1], [], []>} : vector<8x8xf32>, vector<8x16xf32>, vector<8x16xf32> -> vector<8x16xf32>
    %c0_60 = arith.constant 0 : index
    %c0_61 = arith.constant 0 : index
    %70 = vector.load %arg9[%c0_60, %c0_61] : memref<8x1xf32, #tpu.memory_space<vmem>>, vector<8x1xf32>
    %71 = vector.broadcast %70 : vector<8x1xf32> to vector<8x16xf32>
    %72 = arith.addf %69, %71 : vector<8x16xf32>
    %c0_62 = arith.constant 0 : index
    %c0_63 = arith.constant 0 : index
    %73 = vector.load %arg8[%c0_62, %c0_63] : memref<16x32xf32, #tpu.memory_space<vmem>>, vector<16x32xf32>
    %cst_64 = arith.constant dense<0.000000e+00> : vector<8x32xf32>
    %74 = tpu.matmul %72, %73, %cst_64 {dimension_numbers = #tpu.dot_dimension_numbers<[1], [0], [0], [1], [0, 0, 1, 1], [], []>} : vector<8x16xf32>, vector<16x32xf32>, vector<8x32xf32> -> vector<8x32xf32>
    %c3 = arith.constant 3 : index
    %c0_65 = arith.constant 0 : index
    %c0_66 = arith.constant 0 : index
    %75 = vector.load %arg11[%c3, %c0_65, %c0_66] : memref<6x8x32xf32, #tpu.memory_space<vmem>>, vector<1x8x32xf32>
    %76 = vector.shape_cast %75 : vector<1x8x32xf32> to vector<8x32xf32>
    %77 = vector.shape_cast %74 : vector<8x32xf32> to vector<1x8x32xf32>
    tpu.vector_store %arg11[%c3, %c0_65, %c0_66], %77 {strides = array<i32>} : memref<6x8x32xf32, #tpu.memory_space<vmem>>, vector<1x8x32xf32>,
    %c4_i32 = arith.constant 4 : i32
    %78 = arith.addi %1, %c4_i32 : i32
    %c0_67 = arith.constant 0 : index
    %c0_68 = arith.constant 0 : index
    %79 = arith.index_cast %78 : i32 to index
    %c0_69 = arith.constant 0 : index
    %80 = vector.load %arg5[%c0_67, %c0_68, %79, %c0_69] : memref<1x8x16x16xf32, #tpu.memory_space<vmem>>, vector<1x8x1x16xf32>
    %81 = vector.shape_cast %80 : vector<1x8x1x16xf32> to vector<8x16xf32>
    %c4_i32_70 = arith.constant 4 : i32
    %82 = arith.addi %1, %c4_i32_70 : i32
    %c0_71 = arith.constant 0 : index
    %c0_72 = arith.constant 0 : index
    %83 = arith.index_cast %82 : i32 to index
    %c0_73 = arith.constant 0 : index
    %84 = vector.load %arg6[%c0_71, %c0_72, %83, %c0_73] : memref<1x8x16x16xf32, #tpu.memory_space<vmem>>, vector<1x8x1x16xf32>
    %85 = vector.shape_cast %84 : vector<1x8x1x16xf32> to vector<8x16xf32>
    %86 = arith.addf %81, %85 : vector<8x16xf32>
    %c0_74 = arith.constant 0 : index
    %c0_75 = arith.constant 0 : index
    %87 = vector.load %arg7[%c0_74, %c0_75] : memref<8x8xf32, #tpu.memory_space<vmem>>, vector<8x8xf32>
    %cst_76 = arith.constant dense<0.000000e+00> : vector<8x16xf32>
    %88 = tpu.matmul %87, %86, %cst_76 {dimension_numbers = #tpu.dot_dimension_numbers<[1], [0], [0], [1], [0, 0, 1, 1], [], []>} : vector<8x8xf32>, vector<8x16xf32>, vector<8x16xf32> -> vector<8x16xf32>
    %c0_77 = arith.constant 0 : index
    %c0_78 = arith.constant 0 : index
    %89 = vector.load %arg9[%c0_77, %c0_78] : memref<8x1xf32, #tpu.memory_space<vmem>>, vector<8x1xf32>
    %90 = vector.broadcast %89 : vector<8x1xf32> to vector<8x16xf32>
    %91 = arith.addf %88, %90 : vector<8x16xf32>
    %c0_79 = arith.constant 0 : index
    %c0_80 = arith.constant 0 : index
    %92 = vector.load %arg8[%c0_79, %c0_80] : memref<16x32xf32, #tpu.memory_space<vmem>>, vector<16x32xf32>
    %cst_81 = arith.constant dense<0.000000e+00> : vector<8x32xf32>
    %93 = tpu.matmul %91, %92, %cst_81 {dimension_numbers = #tpu.dot_dimension_numbers<[1], [0], [0], [1], [0, 0, 1, 1], [], []>} : vector<8x16xf32>, vector<16x32xf32>, vector<8x32xf32> -> vector<8x32xf32>
    %c4 = arith.constant 4 : index
    %c0_82 = arith.constant 0 : index
    %c0_83 = arith.constant 0 : index
    %94 = vector.load %arg11[%c4, %c0_82, %c0_83] : memref<6x8x32xf32, #tpu.memory_space<vmem>>, vector<1x8x32xf32>
    %95 = vector.shape_cast %94 : vector<1x8x32xf32> to vector<8x32xf32>
    %96 = vector.shape_cast %93 : vector<8x32xf32> to vector<1x8x32xf32>
    tpu.vector_store %arg11[%c4, %c0_82, %c0_83], %96 {strides = array<i32>} : memref<6x8x32xf32, #tpu.memory_space<vmem>>, vector<1x8x32xf32>,
    %c5_i32 = arith.constant 5 : i32
    %97 = arith.addi %1, %c5_i32 : i32
    %c0_84 = arith.constant 0 : index
    %c0_85 = arith.constant 0 : index
    %98 = arith.index_cast %97 : i32 to index
    %c0_86 = arith.constant 0 : index
    %99 = vector.load %arg5[%c0_84, %c0_85, %98, %c0_86] : memref<1x8x16x16xf32, #tpu.memory_space<vmem>>, vector<1x8x1x16xf32>
    %100 = vector.shape_cast %99 : vector<1x8x1x16xf32> to vector<8x16xf32>
    %c5_i32_87 = arith.constant 5 : i32
    %101 = arith.addi %1, %c5_i32_87 : i32
    %c0_88 = arith.constant 0 : index
    %c0_89 = arith.constant 0 : index
    %102 = arith.index_cast %101 : i32 to index
    %c0_90 = arith.constant 0 : index
    %103 = vector.load %arg6[%c0_88, %c0_89, %102, %c0_90] : memref<1x8x16x16xf32, #tpu.memory_space<vmem>>, vector<1x8x1x16xf32>
    %104 = vector.shape_cast %103 : vector<1x8x1x16xf32> to vector<8x16xf32>
    %105 = arith.addf %100, %104 : vector<8x16xf32>
    %c0_91 = arith.constant 0 : index
    %c0_92 = arith.constant 0 : index
    %106 = vector.load %arg7[%c0_91, %c0_92] : memref<8x8xf32, #tpu.memory_space<vmem>>, vector<8x8xf32>
    %cst_93 = arith.constant dense<0.000000e+00> : vector<8x16xf32>
    %107 = tpu.matmul %106, %105, %cst_93 {dimension_numbers = #tpu.dot_dimension_numbers<[1], [0], [0], [1], [0, 0, 1, 1], [], []>} : vector<8x8xf32>, vector<8x16xf32>, vector<8x16xf32> -> vector<8x16xf32>
    %c0_94 = arith.constant 0 : index
    %c0_95 = arith.constant 0 : index
    %108 = vector.load %arg9[%c0_94, %c0_95] : memref<8x1xf32, #tpu.memory_space<vmem>>, vector<8x1xf32>
    %109 = vector.broadcast %108 : vector<8x1xf32> to vector<8x16xf32>
    %110 = arith.addf %107, %109 : vector<8x16xf32>
    %c0_96 = arith.constant 0 : index
    %c0_97 = arith.constant 0 : index
    %111 = vector.load %arg8[%c0_96, %c0_97] : memref<16x32xf32, #tpu.memory_space<vmem>>, vector<16x32xf32>
    %cst_98 = arith.constant dense<0.000000e+00> : vector<8x32xf32>
    %112 = tpu.matmul %110, %111, %cst_98 {dimension_numbers = #tpu.dot_dimension_numbers<[1], [0], [0], [1], [0, 0, 1, 1], [], []>} : vector<8x16xf32>, vector<16x32xf32>, vector<8x32xf32> -> vector<8x32xf32>
    %c5 = arith.constant 5 : index
    %c0_99 = arith.constant 0 : index
    %c0_100 = arith.constant 0 : index
    %113 = vector.load %arg11[%c5, %c0_99, %c0_100] : memref<6x8x32xf32, #tpu.memory_space<vmem>>, vector<1x8x32xf32>
    %114 = vector.shape_cast %113 : vector<1x8x32xf32> to vector<8x32xf32>
    %115 = vector.shape_cast %112 : vector<8x32xf32> to vector<1x8x32xf32>
    tpu.vector_store %arg11[%c5, %c0_99, %c0_100], %115 {strides = array<i32>} : memref<6x8x32xf32, #tpu.memory_space<vmem>>, vector<1x8x32xf32>,
    %c8_i32 = arith.constant 8 : i32
    %116 = arith.muli %arg1, %c8_i32 : i32
    %c0_i32_101 = arith.constant 0 : i32
    %117 = arith.addi %116, %c0_i32_101 : i32
    %118 = arith.index_cast %117 : i32 to index
    %119 = memref.load %arg3[%118] : memref<32xi32, #tpu.memory_space<smem>>
    %c8_i32_102 = arith.constant 8 : i32
    %120 = arith.muli %arg1, %c8_i32_102 : i32
    %c0_i32_103 = arith.constant 0 : i32
    %121 = arith.addi %120, %c0_i32_103 : i32
    %122 = arith.index_cast %121 : i32 to index
    %123 = memref.load %arg4[%122] : memref<32xf32, #tpu.memory_space<smem>>
    %cst_104 = arith.constant 1.000000e+00 : f32
    %124 = arith.subf %cst_104, %123 : f32
    %125 = arith.index_cast %119 : i32 to index
    %c0_105 = arith.constant 0 : index
    %c0_106 = arith.constant 0 : index
    %126 = vector.load %arg11[%125, %c0_105, %c0_106] : memref<6x8x32xf32, #tpu.memory_space<vmem>>, vector<1x8x32xf32>
    %127 = vector.shape_cast %126 : vector<1x8x32xf32> to vector<8x32xf32>
    %128 = vector.broadcast %124 : f32 to vector<8x32xf32>
    %129 = arith.mulf %128, %127 : vector<8x32xf32>
    %c1_i32_107 = arith.constant 1 : i32
    %130 = arith.addi %119, %c1_i32_107 : i32
    %131 = arith.index_cast %130 : i32 to index
    %c0_108 = arith.constant 0 : index
    %c0_109 = arith.constant 0 : index
    %132 = vector.load %arg11[%131, %c0_108, %c0_109] : memref<6x8x32xf32, #tpu.memory_space<vmem>>, vector<1x8x32xf32>
    %133 = vector.shape_cast %132 : vector<1x8x32xf32> to vector<8x32xf32>
    %134 = vector.broadcast %123 : f32 to vector<8x32xf32>
    %135 = arith.mulf %134, %133 : vector<8x32xf32>
    %136 = arith.addf %129, %135 : vector<8x32xf32>
    %c0_110 = arith.constant 0 : index
    %c0_111 = arith.constant 0 : index
    %c0_112 = arith.constant 0 : index
    %137 = vector.load %arg10[%c0_110, %c0_111, %c0_112] : memref<1x8x256xf32, #tpu.memory_space<vmem>>, vector<1x8x32xf32>
    %138 = vector.shape_cast %137 : vector<1x8x32xf32> to vector<8x32xf32>
    %139 = vector.shape_cast %136 : vector<8x32xf32> to vector<1x8x32xf32>
    tpu.vector_store %arg10[%c0_110, %c0_111, %c0_112], %139 {strides = array<i32>} : memref<1x8x256xf32, #tpu.memory_space<vmem>>, vector<1x8x32xf32>,
    %c8_i32_113 = arith.constant 8 : i32
    %140 = arith.muli %arg1, %c8_i32_113 : i32
    %c1_i32_114 = arith.constant 1 : i32
    %141 = arith.addi %140, %c1_i32_114 : i32
    %142 = arith.index_cast %141 : i32 to index
    %143 = memref.load %arg3[%142] : memref<32xi32, #tpu.memory_space<smem>>
    %c8_i32_115 = arith.constant 8 : i32
    %144 = arith.muli %arg1, %c8_i32_115 : i32
    %c1_i32_116 = arith.constant 1 : i32
    %145 = arith.addi %144, %c1_i32_116 : i32
    %146 = arith.index_cast %145 : i32 to index
    %147 = memref.load %arg4[%146] : memref<32xf32, #tpu.memory_space<smem>>
    %cst_117 = arith.constant 1.000000e+00 : f32
    %148 = arith.subf %cst_117, %147 : f32
    %149 = arith.index_cast %143 : i32 to index
    %c0_118 = arith.constant 0 : index
    %c0_119 = arith.constant 0 : index
    %150 = vector.load %arg11[%149, %c0_118, %c0_119] : memref<6x8x32xf32, #tpu.memory_space<vmem>>, vector<1x8x32xf32>
    %151 = vector.shape_cast %150 : vector<1x8x32xf32> to vector<8x32xf32>
    %152 = vector.broadcast %148 : f32 to vector<8x32xf32>
    %153 = arith.mulf %152, %151 : vector<8x32xf32>
    %c1_i32_120 = arith.constant 1 : i32
    %154 = arith.addi %143, %c1_i32_120 : i32
    %155 = arith.index_cast %154 : i32 to index
    %c0_121 = arith.constant 0 : index
    %c0_122 = arith.constant 0 : index
    %156 = vector.load %arg11[%155, %c0_121, %c0_122] : memref<6x8x32xf32, #tpu.memory_space<vmem>>, vector<1x8x32xf32>
    %157 = vector.shape_cast %156 : vector<1x8x32xf32> to vector<8x32xf32>
    %158 = vector.broadcast %147 : f32 to vector<8x32xf32>
    %159 = arith.mulf %158, %157 : vector<8x32xf32>
    %160 = arith.addf %153, %159 : vector<8x32xf32>
    %c0_123 = arith.constant 0 : index
    %c0_124 = arith.constant 0 : index
    %c32 = arith.constant 32 : index
    %161 = vector.load %arg10[%c0_123, %c0_124, %c32] : memref<1x8x256xf32, #tpu.memory_space<vmem>>, vector<1x8x32xf32>
    %162 = vector.shape_cast %161 : vector<1x8x32xf32> to vector<8x32xf32>
    %163 = vector.shape_cast %160 : vector<8x32xf32> to vector<1x8x32xf32>
    tpu.vector_store %arg10[%c0_123, %c0_124, %c32], %163 {strides = array<i32>} : memref<1x8x256xf32, #tpu.memory_space<vmem>>, vector<1x8x32xf32>,
    %c8_i32_125 = arith.constant 8 : i32
    %164 = arith.muli %arg1, %c8_i32_125 : i32
    %c2_i32_126 = arith.constant 2 : i32
    %165 = arith.addi %164, %c2_i32_126 : i32
    %166 = arith.index_cast %165 : i32 to index
    %167 = memref.load %arg3[%166] : memref<32xi32, #tpu.memory_space<smem>>
    %c8_i32_127 = arith.constant 8 : i32
    %168 = arith.muli %arg1, %c8_i32_127 : i32
    %c2_i32_128 = arith.constant 2 : i32
    %169 = arith.addi %168, %c2_i32_128 : i32
    %170 = arith.index_cast %169 : i32 to index
    %171 = memref.load %arg4[%170] : memref<32xf32, #tpu.memory_space<smem>>
    %cst_129 = arith.constant 1.000000e+00 : f32
    %172 = arith.subf %cst_129, %171 : f32
    %173 = arith.index_cast %167 : i32 to index
    %c0_130 = arith.constant 0 : index
    %c0_131 = arith.constant 0 : index
    %174 = vector.load %arg11[%173, %c0_130, %c0_131] : memref<6x8x32xf32, #tpu.memory_space<vmem>>, vector<1x8x32xf32>
    %175 = vector.shape_cast %174 : vector<1x8x32xf32> to vector<8x32xf32>
    %176 = vector.broadcast %172 : f32 to vector<8x32xf32>
    %177 = arith.mulf %176, %175 : vector<8x32xf32>
    %c1_i32_132 = arith.constant 1 : i32
    %178 = arith.addi %167, %c1_i32_132 : i32
    %179 = arith.index_cast %178 : i32 to index
    %c0_133 = arith.constant 0 : index
    %c0_134 = arith.constant 0 : index
    %180 = vector.load %arg11[%179, %c0_133, %c0_134] : memref<6x8x32xf32, #tpu.memory_space<vmem>>, vector<1x8x32xf32>
    %181 = vector.shape_cast %180 : vector<1x8x32xf32> to vector<8x32xf32>
    %182 = vector.broadcast %171 : f32 to vector<8x32xf32>
    %183 = arith.mulf %182, %181 : vector<8x32xf32>
    %184 = arith.addf %177, %183 : vector<8x32xf32>
    %c0_135 = arith.constant 0 : index
    %c0_136 = arith.constant 0 : index
    %c64 = arith.constant 64 : index
    %185 = vector.load %arg10[%c0_135, %c0_136, %c64] : memref<1x8x256xf32, #tpu.memory_space<vmem>>, vector<1x8x32xf32>
    %186 = vector.shape_cast %185 : vector<1x8x32xf32> to vector<8x32xf32>
    %187 = vector.shape_cast %184 : vector<8x32xf32> to vector<1x8x32xf32>
    tpu.vector_store %arg10[%c0_135, %c0_136, %c64], %187 {strides = array<i32>} : memref<1x8x256xf32, #tpu.memory_space<vmem>>, vector<1x8x32xf32>,
    %c8_i32_137 = arith.constant 8 : i32
    %188 = arith.muli %arg1, %c8_i32_137 : i32
    %c3_i32_138 = arith.constant 3 : i32
    %189 = arith.addi %188, %c3_i32_138 : i32
    %190 = arith.index_cast %189 : i32 to index
    %191 = memref.load %arg3[%190] : memref<32xi32, #tpu.memory_space<smem>>
    %c8_i32_139 = arith.constant 8 : i32
    %192 = arith.muli %arg1, %c8_i32_139 : i32
    %c3_i32_140 = arith.constant 3 : i32
    %193 = arith.addi %192, %c3_i32_140 : i32
    %194 = arith.index_cast %193 : i32 to index
    %195 = memref.load %arg4[%194] : memref<32xf32, #tpu.memory_space<smem>>
    %cst_141 = arith.constant 1.000000e+00 : f32
    %196 = arith.subf %cst_141, %195 : f32
    %197 = arith.index_cast %191 : i32 to index
    %c0_142 = arith.constant 0 : index
    %c0_143 = arith.constant 0 : index
    %198 = vector.load %arg11[%197, %c0_142, %c0_143] : memref<6x8x32xf32, #tpu.memory_space<vmem>>, vector<1x8x32xf32>
    %199 = vector.shape_cast %198 : vector<1x8x32xf32> to vector<8x32xf32>
    %200 = vector.broadcast %196 : f32 to vector<8x32xf32>
    %201 = arith.mulf %200, %199 : vector<8x32xf32>
    %c1_i32_144 = arith.constant 1 : i32
    %202 = arith.addi %191, %c1_i32_144 : i32
    %203 = arith.index_cast %202 : i32 to index
    %c0_145 = arith.constant 0 : index
    %c0_146 = arith.constant 0 : index
    %204 = vector.load %arg11[%203, %c0_145, %c0_146] : memref<6x8x32xf32, #tpu.memory_space<vmem>>, vector<1x8x32xf32>
    %205 = vector.shape_cast %204 : vector<1x8x32xf32> to vector<8x32xf32>
    %206 = vector.broadcast %195 : f32 to vector<8x32xf32>
    %207 = arith.mulf %206, %205 : vector<8x32xf32>
    %208 = arith.addf %201, %207 : vector<8x32xf32>
    %c0_147 = arith.constant 0 : index
    %c0_148 = arith.constant 0 : index
    %c96 = arith.constant 96 : index
    %209 = vector.load %arg10[%c0_147, %c0_148, %c96] : memref<1x8x256xf32, #tpu.memory_space<vmem>>, vector<1x8x32xf32>
    %210 = vector.shape_cast %209 : vector<1x8x32xf32> to vector<8x32xf32>
    %211 = vector.shape_cast %208 : vector<8x32xf32> to vector<1x8x32xf32>
    tpu.vector_store %arg10[%c0_147, %c0_148, %c96], %211 {strides = array<i32>} : memref<1x8x256xf32, #tpu.memory_space<vmem>>, vector<1x8x32xf32>,
    %c8_i32_149 = arith.constant 8 : i32
    %212 = arith.muli %arg1, %c8_i32_149 : i32
    %c4_i32_150 = arith.constant 4 : i32
    %213 = arith.addi %212, %c4_i32_150 : i32
    %214 = arith.index_cast %213 : i32 to index
    %215 = memref.load %arg3[%214] : memref<32xi32, #tpu.memory_space<smem>>
    %c8_i32_151 = arith.constant 8 : i32
    %216 = arith.muli %arg1, %c8_i32_151 : i32
    %c4_i32_152 = arith.constant 4 : i32
    %217 = arith.addi %216, %c4_i32_152 : i32
    %218 = arith.index_cast %217 : i32 to index
    %219 = memref.load %arg4[%218] : memref<32xf32, #tpu.memory_space<smem>>
    %cst_153 = arith.constant 1.000000e+00 : f32
    %220 = arith.subf %cst_153, %219 : f32
    %221 = arith.index_cast %215 : i32 to index
    %c0_154 = arith.constant 0 : index
    %c0_155 = arith.constant 0 : index
    %222 = vector.load %arg11[%221, %c0_154, %c0_155] : memref<6x8x32xf32, #tpu.memory_space<vmem>>, vector<1x8x32xf32>
    %223 = vector.shape_cast %222 : vector<1x8x32xf32> to vector<8x32xf32>
    %224 = vector.broadcast %220 : f32 to vector<8x32xf32>
    %225 = arith.mulf %224, %223 : vector<8x32xf32>
    %c1_i32_156 = arith.constant 1 : i32
    %226 = arith.addi %215, %c1_i32_156 : i32
    %227 = arith.index_cast %226 : i32 to index
    %c0_157 = arith.constant 0 : index
    %c0_158 = arith.constant 0 : index
    %228 = vector.load %arg11[%227, %c0_157, %c0_158] : memref<6x8x32xf32, #tpu.memory_space<vmem>>, vector<1x8x32xf32>
    %229 = vector.shape_cast %228 : vector<1x8x32xf32> to vector<8x32xf32>
    %230 = vector.broadcast %219 : f32 to vector<8x32xf32>
    %231 = arith.mulf %230, %229 : vector<8x32xf32>
    %232 = arith.addf %225, %231 : vector<8x32xf32>
    %c0_159 = arith.constant 0 : index
    %c0_160 = arith.constant 0 : index
    %c128 = arith.constant 128 : index
    %233 = vector.load %arg10[%c0_159, %c0_160, %c128] : memref<1x8x256xf32, #tpu.memory_space<vmem>>, vector<1x8x32xf32>
    %234 = vector.shape_cast %233 : vector<1x8x32xf32> to vector<8x32xf32>
    %235 = vector.shape_cast %232 : vector<8x32xf32> to vector<1x8x32xf32>
    tpu.vector_store %arg10[%c0_159, %c0_160, %c128], %235 {strides = array<i32>} : memref<1x8x256xf32, #tpu.memory_space<vmem>>, vector<1x8x32xf32>,
    %c8_i32_161 = arith.constant 8 : i32
    %236 = arith.muli %arg1, %c8_i32_161 : i32
    %c5_i32_162 = arith.constant 5 : i32
    %237 = arith.addi %236, %c5_i32_162 : i32
    %238 = arith.index_cast %237 : i32 to index
    %239 = memref.load %arg3[%238] : memref<32xi32, #tpu.memory_space<smem>>
    %c8_i32_163 = arith.constant 8 : i32
    %240 = arith.muli %arg1, %c8_i32_163 : i32
    %c5_i32_164 = arith.constant 5 : i32
    %241 = arith.addi %240, %c5_i32_164 : i32
    %242 = arith.index_cast %241 : i32 to index
    %243 = memref.load %arg4[%242] : memref<32xf32, #tpu.memory_space<smem>>
    %cst_165 = arith.constant 1.000000e+00 : f32
    %244 = arith.subf %cst_165, %243 : f32
    %245 = arith.index_cast %239 : i32 to index
    %c0_166 = arith.constant 0 : index
    %c0_167 = arith.constant 0 : index
    %246 = vector.load %arg11[%245, %c0_166, %c0_167] : memref<6x8x32xf32, #tpu.memory_space<vmem>>, vector<1x8x32xf32>
    %247 = vector.shape_cast %246 : vector<1x8x32xf32> to vector<8x32xf32>
    %248 = vector.broadcast %244 : f32 to vector<8x32xf32>
    %249 = arith.mulf %248, %247 : vector<8x32xf32>
    %c1_i32_168 = arith.constant 1 : i32
    %250 = arith.addi %239, %c1_i32_168 : i32
    %251 = arith.index_cast %250 : i32 to index
    %c0_169 = arith.constant 0 : index
    %c0_170 = arith.constant 0 : index
    %252 = vector.load %arg11[%251, %c0_169, %c0_170] : memref<6x8x32xf32, #tpu.memory_space<vmem>>, vector<1x8x32xf32>
    %253 = vector.shape_cast %252 : vector<1x8x32xf32> to vector<8x32xf32>
    %254 = vector.broadcast %243 : f32 to vector<8x32xf32>
    %255 = arith.mulf %254, %253 : vector<8x32xf32>
    %256 = arith.addf %249, %255 : vector<8x32xf32>
    %c0_171 = arith.constant 0 : index
    %c0_172 = arith.constant 0 : index
    %c160 = arith.constant 160 : index
    %257 = vector.load %arg10[%c0_171, %c0_172, %c160] : memref<1x8x256xf32, #tpu.memory_space<vmem>>, vector<1x8x32xf32>
    %258 = vector.shape_cast %257 : vector<1x8x32xf32> to vector<8x32xf32>
    %259 = vector.shape_cast %256 : vector<8x32xf32> to vector<1x8x32xf32>
    tpu.vector_store %arg10[%c0_171, %c0_172, %c160], %259 {strides = array<i32>} : memref<1x8x256xf32, #tpu.memory_space<vmem>>, vector<1x8x32xf32>,
    %c8_i32_173 = arith.constant 8 : i32
    %260 = arith.muli %arg1, %c8_i32_173 : i32
    %c6_i32 = arith.constant 6 : i32
    %261 = arith.addi %260, %c6_i32 : i32
    %262 = arith.index_cast %261 : i32 to index
    %263 = memref.load %arg3[%262] : memref<32xi32, #tpu.memory_space<smem>>
    %c8_i32_174 = arith.constant 8 : i32
    %264 = arith.muli %arg1, %c8_i32_174 : i32
    %c6_i32_175 = arith.constant 6 : i32
    %265 = arith.addi %264, %c6_i32_175 : i32
    %266 = arith.index_cast %265 : i32 to index
    %267 = memref.load %arg4[%266] : memref<32xf32, #tpu.memory_space<smem>>
    %cst_176 = arith.constant 1.000000e+00 : f32
    %268 = arith.subf %cst_176, %267 : f32
    %269 = arith.index_cast %263 : i32 to index
    %c0_177 = arith.constant 0 : index
    %c0_178 = arith.constant 0 : index
    %270 = vector.load %arg11[%269, %c0_177, %c0_178] : memref<6x8x32xf32, #tpu.memory_space<vmem>>, vector<1x8x32xf32>
    %271 = vector.shape_cast %270 : vector<1x8x32xf32> to vector<8x32xf32>
    %272 = vector.broadcast %268 : f32 to vector<8x32xf32>
    %273 = arith.mulf %272, %271 : vector<8x32xf32>
    %c1_i32_179 = arith.constant 1 : i32
    %274 = arith.addi %263, %c1_i32_179 : i32
    %275 = arith.index_cast %274 : i32 to index
    %c0_180 = arith.constant 0 : index
    %c0_181 = arith.constant 0 : index
    %276 = vector.load %arg11[%275, %c0_180, %c0_181] : memref<6x8x32xf32, #tpu.memory_space<vmem>>, vector<1x8x32xf32>
    %277 = vector.shape_cast %276 : vector<1x8x32xf32> to vector<8x32xf32>
    %278 = vector.broadcast %267 : f32 to vector<8x32xf32>
    %279 = arith.mulf %278, %277 : vector<8x32xf32>
    %280 = arith.addf %273, %279 : vector<8x32xf32>
    %c0_182 = arith.constant 0 : index
    %c0_183 = arith.constant 0 : index
    %c192 = arith.constant 192 : index
    %281 = vector.load %arg10[%c0_182, %c0_183, %c192] : memref<1x8x256xf32, #tpu.memory_space<vmem>>, vector<1x8x32xf32>
    %282 = vector.shape_cast %281 : vector<1x8x32xf32> to vector<8x32xf32>
    %283 = vector.shape_cast %280 : vector<8x32xf32> to vector<1x8x32xf32>
    tpu.vector_store %arg10[%c0_182, %c0_183, %c192], %283 {strides = array<i32>} : memref<1x8x256xf32, #tpu.memory_space<vmem>>, vector<1x8x32xf32>,
    %c8_i32_184 = arith.constant 8 : i32
    %284 = arith.muli %arg1, %c8_i32_184 : i32
    %c7_i32 = arith.constant 7 : i32
    %285 = arith.addi %284, %c7_i32 : i32
    %286 = arith.index_cast %285 : i32 to index
    %287 = memref.load %arg3[%286] : memref<32xi32, #tpu.memory_space<smem>>
    %c8_i32_185 = arith.constant 8 : i32
    %288 = arith.muli %arg1, %c8_i32_185 : i32
    %c7_i32_186 = arith.constant 7 : i32
    %289 = arith.addi %288, %c7_i32_186 : i32
    %290 = arith.index_cast %289 : i32 to index
    %291 = memref.load %arg4[%290] : memref<32xf32, #tpu.memory_space<smem>>
    %cst_187 = arith.constant 1.000000e+00 : f32
    %292 = arith.subf %cst_187, %291 : f32
    %293 = arith.index_cast %287 : i32 to index
    %c0_188 = arith.constant 0 : index
    %c0_189 = arith.constant 0 : index
    %294 = vector.load %arg11[%293, %c0_188, %c0_189] : memref<6x8x32xf32, #tpu.memory_space<vmem>>, vector<1x8x32xf32>
    %295 = vector.shape_cast %294 : vector<1x8x32xf32> to vector<8x32xf32>
    %296 = vector.broadcast %292 : f32 to vector<8x32xf32>
    %297 = arith.mulf %296, %295 : vector<8x32xf32>
    %c1_i32_190 = arith.constant 1 : i32
    %298 = arith.addi %287, %c1_i32_190 : i32
    %299 = arith.index_cast %298 : i32 to index
    %c0_191 = arith.constant 0 : index
    %c0_192 = arith.constant 0 : index
    %300 = vector.load %arg11[%299, %c0_191, %c0_192] : memref<6x8x32xf32, #tpu.memory_space<vmem>>, vector<1x8x32xf32>
    %301 = vector.shape_cast %300 : vector<1x8x32xf32> to vector<8x32xf32>
    %302 = vector.broadcast %291 : f32 to vector<8x32xf32>
    %303 = arith.mulf %302, %301 : vector<8x32xf32>
    %304 = arith.addf %297, %303 : vector<8x32xf32>
    %c0_193 = arith.constant 0 : index
    %c0_194 = arith.constant 0 : index
    %c224 = arith.constant 224 : index
    %305 = vector.load %arg10[%c0_193, %c0_194, %c224] : memref<1x8x256xf32, #tpu.memory_space<vmem>>, vector<1x8x32xf32>
    %306 = vector.shape_cast %305 : vector<1x8x32xf32> to vector<8x32xf32>
    %307 = vector.shape_cast %304 : vector<8x32xf32> to vector<1x8x32xf32>
    tpu.vector_store %arg10[%c0_193, %c0_194, %c224], %307 {strides = array<i32>} : memref<1x8x256xf32, #tpu.memory_space<vmem>>, vector<1x8x32xf32>,
    return
  }
  func.func @transform_0(%arg0: i32, %arg1: i32, %arg2: memref<4xi32, #tpu.memory_space<smem>>, %arg3: memref<32xi32, #tpu.memory_space<smem>>, %arg4: memref<32xf32, #tpu.memory_space<smem>>) -> (i32, i32, i32, i32) {
    %c0_i32 = arith.constant 0 : i32
    %c0_i32_0 = arith.constant 0 : i32
    %c0_i32_1 = arith.constant 0 : i32
    %c0_i32_2 = arith.constant 0 : i32
    return %arg0, %c0_i32, %c0_i32_0, %c0_i32_1 : i32, i32, i32, i32
  }
  func.func @transform_1(%arg0: i32, %arg1: i32, %arg2: memref<4xi32, #tpu.memory_space<smem>>, %arg3: memref<32xi32, #tpu.memory_space<smem>>, %arg4: memref<32xf32, #tpu.memory_space<smem>>) -> (i32, i32, i32, i32) {
    %c0_i32 = arith.constant 0 : i32
    %c0_i32_0 = arith.constant 0 : i32
    %c0_i32_1 = arith.constant 0 : i32
    %c0_i32_2 = arith.constant 0 : i32
    return %arg0, %c0_i32, %c0_i32_0, %c0_i32_1 : i32, i32, i32, i32
  }
  func.func @transform_2(%arg0: i32, %arg1: i32, %arg2: memref<4xi32, #tpu.memory_space<smem>>, %arg3: memref<32xi32, #tpu.memory_space<smem>>, %arg4: memref<32xf32, #tpu.memory_space<smem>>) -> (i32, i32) {
    %c0_i32 = arith.constant 0 : i32
    %c0_i32_0 = arith.constant 0 : i32
    %c0_i32_1 = arith.constant 0 : i32
    return %c0_i32, %c0_i32_0 : i32, i32
  }
  func.func @transform_3(%arg0: i32, %arg1: i32, %arg2: memref<4xi32, #tpu.memory_space<smem>>, %arg3: memref<32xi32, #tpu.memory_space<smem>>, %arg4: memref<32xf32, #tpu.memory_space<smem>>) -> (i32, i32) {
    %c0_i32 = arith.constant 0 : i32
    %c0_i32_0 = arith.constant 0 : i32
    %c0_i32_1 = arith.constant 0 : i32
    return %c0_i32, %c0_i32_0 : i32, i32
  }
  func.func @transform_4(%arg0: i32, %arg1: i32, %arg2: memref<4xi32, #tpu.memory_space<smem>>, %arg3: memref<32xi32, #tpu.memory_space<smem>>, %arg4: memref<32xf32, #tpu.memory_space<smem>>) -> (i32, i32) {
    %c0_i32 = arith.constant 0 : i32
    %c0_i32_0 = arith.constant 0 : i32
    %c0_i32_1 = arith.constant 0 : i32
    return %c0_i32, %c0_i32_0 : i32, i32
  }
  func.func @transform_5(%arg0: i32, %arg1: i32, %arg2: memref<4xi32, #tpu.memory_space<smem>>, %arg3: memref<32xi32, #tpu.memory_space<smem>>, %arg4: memref<32xf32, #tpu.memory_space<smem>>) -> (i32, i32, i32) {
    %c0_i32 = arith.constant 0 : i32
    %c0_i32_0 = arith.constant 0 : i32
    return %arg0, %c0_i32, %arg1 : i32, i32, i32
  }
}

</mosaic_0001>

<llo_original>
// kernel: tpu_custom_call.1
$region0: #{tpu_custom_call.1}
  #allocation0 [shape = 'u32[]', space=smem, size = 0x4, offset = 0x4, fixed_abs, tag = 'smem constant byte address 0x4 - core index']
  #allocation1 [shape = 'u32[144,128]{1,0:T(1,128)}', space=vmem, size = 0x12000, scoped, tag = 'internal scratch']
  #allocation2 [shape = 'f32[6,8,32]{2,1,0:T(8,128)}', space=vmem, size = 0x6000, scoped, tag = 'scratch operand']
  #allocation3 [shape = 's32[1]{0}', space=sflag, size = 0x4, scoped, tag = 'scoped memory for tpu_custom_call.1']
  #allocation4 [shape = 'u8[512]{0}', space=smem, size = 0x200, scoped, tag = 'prefetched SMEM operand 0']
  #allocation5 [shape = 'u8[512]{0}', space=smem, size = 0x200, scoped, tag = 'prefetched SMEM operand 1']
  #allocation6 [shape = 'u8[512]{0}', space=smem, size = 0x200, scoped, tag = 'prefetched SMEM operand 2']
  %s0 = inlined_call_operand.vmem [shape: s32[4], index: 0, kind: input, shape index: {}]
  %s1 = inlined_call_operand.vmem [shape: s32[32], index: 1, kind: input, shape index: {}]
  %s2 = inlined_call_operand.vmem [shape: f32[32], index: 2, kind: input, shape index: {}]
  %s3 = inlined_call_operand.hbm [shape: f32[2,8,16,16], index: 3, kind: input, shape index: {}]
  %s4 = inlined_call_operand.hbm [shape: f32[2,8,16,16], index: 4, kind: input, shape index: {}]
  %s5 = inlined_call_operand.vmem [shape: f32[8,8], index: 5, kind: input, shape index: {}]
  %s6 = inlined_call_operand.vmem [shape: f32[16,32], index: 6, kind: input, shape index: {}]
  %s7 = inlined_call_operand.vmem [shape: f32[8,1], index: 7, kind: input, shape index: {}]
  %s8 = inlined_call_operand.hbm [shape: f32[2,8,1024], index: 8, kind: output, shape index: {}]
  %s9 = sld [smem:[#allocation0]]
  $region61: #{tpu_custom_call.1} parent=0
    _
  %s11 = ssub.s32 1, %s9
  %s12 = scalar_select 0, %s11, %s9
  %s13 = sshll.u32 %s0, 4
  %s14 = int_to_ptr.vmem [resolvable:$true] %s13
  %16 = dma.vmem_to_smem %s14, 16, [#allocation4], [#allocation3]
  %s17 = sshll.u32 %s1, 4
  %s18 = int_to_ptr.vmem [resolvable:$true] %s17
  %20 = dma.vmem_to_smem %s18, 16, [#allocation5], [#allocation3]
  %s21 = sshll.u32 %s2, 4
  %s22 = int_to_ptr.vmem [resolvable:$true] %s21
  %24 = dma.vmem_to_smem %s22, 16, [#allocation6], [#allocation3]
  %25 = dma.done [#allocation3], 48
  %26 = sfence
  $region1: #{tpu_custom_call.1} parent=0
    #allocation7 [shape = 'u8[131072]{0}', space=vmem, size = 0x20000, scoped, tag = 'input window, operand 3']
    #allocation8 [shape = 's32[2]{0}', space=sflag, size = 0x8, scoped, tag = 'scoped memory for tpu_custom_call.1']
    #allocation9 [shape = 's32[2]{0}', space=sflag, size = 0x8, scoped, tag = 'scoped memory for tpu_custom_call.1']
    #allocation10 [shape = 'u8[131072]{0}', space=vmem, size = 0x20000, scoped, tag = 'input window, operand 4']
    #allocation11 [shape = 's32[2]{0}', space=sflag, size = 0x8, scoped, tag = 'scoped memory for tpu_custom_call.1']
    #allocation12 [shape = 'u8[16384]{0}', space=vmem, size = 0x4000, scoped, tag = 'output window, operand 0']
    %27 = vsyncpa [#allocation8], 0
    %s28 = scalar_lea.sflag [#allocation8], 1
    %29 = vsyncpa %s28, 0
    %30 = vsyncpa [#allocation11], 0
    %s31 = scalar_lea.sflag [#allocation11], 1
    %32 = vsyncpa %s31, 0
    %33 = vsyncpa [#allocation9], 0
    %s34 = scalar_lea.sflag [#allocation9], 1
    %35 = vsyncpa %s34, 0
    loop: start=0, step=1, limit=10
    $region2: #{tpu_custom_call.1} parent=1 // loop_pre_header
      _
    $region3: #{tpu_custom_call.1} parent=1 // loop_header
      %s37 = sphi 0, %s41
      %p38 = scmp.ge.s32.totalorder %s37, 10
      %s44 = sphi 0, %s56
      %s45 = sphi 0, %s52
      %s46 = sphi 0, %s44
      %s47 = sphi 0, %s45
      %s48 = sphi 0, %s46
      %s49 = sphi 0, %s47
      %s59 = sphi 0, %s61
      %s62 = sphi 0, %s59
      %s63 = sphi 0, %s62
      %s79 = sphi 0, %s63
      %s85 = sphi 0, %s87
      %s88 = sphi 0, %s85
      %s89 = sphi 0, %s88
      %s105 = sphi 0, %s89
      %s109 = sphi 0, %s109
      %s111 = sphi 0, %s109
      %s112 = sphi 0, %s111
      %s126 = sphi 0, %s112
      %s130 = sphi 0, %s130
      %s132 = sphi 0, %s130
      %s133 = sphi 0, %s132
      %s147 = sphi 0, %s133
      %s151 = sphi 0, %s151
      %s153 = sphi 0, %s151
      %s154 = sphi 0, %s153
      %s168 = sphi 0, %s154
      %s176 = sphi 0, %s178
      %s179 = sphi 0, %s176
      %s180 = sphi 0, %s179
      %s196 = sphi 0, %s180
    $region4: #{tpu_custom_call.1} parent=1 // loop_header_branch
      %40 = sbr.rel (%p38) target = $region8
    $region5: #{tpu_custom_call.1} parent=1 // loop_body
      %s42 = ssub.s32 %s37, 1
      %s43 = ssub.s32 %s37, 2
      %s50 = sadd.s32 1, %s45
      %p51 = scmp.ge.s32.totalorder %s50, 4
      %s52 = scalar_select %p51, 0, %s50
      %s53 = sadd.s32 1, %s44
      %s54 = scalar_select %p51, %s53, %s44
      %p55 = scmp.ge.s32.totalorder %s54, 2
      %s56 = scalar_select %p55, 0, %s54
      %s57 = ssub.s32 %s44, %s56
      %p58 = scmp.eq.s32.totalorder %s57, 0
      %s60 = sadd.s32 %s59, 1
      %s61 = scalar_select %p58, %s59, %s60
      %p64 = pneg %p58
      %p65 = scmp.eq.s32.totalorder %s37, 7
      %p66 = por %p64, %p65
      %p67 = scmp.ne.s32.totalorder %s59, %s62
      %p68 = scmp.eq.s32.totalorder %s37, 0
      %p69 = por %p67, %p68
      %p70 = scmp.ne.s32.totalorder %s59, %s62
      %p71 = scmp.eq.s32.totalorder %s42, 7
      %p72 = por %p70, %p71
      %p73 = scmp.ne.s32.totalorder %s62, %s63
      %p74 = scmp.eq.s32.totalorder %s42, 0
      %p75 = por %p73, %p74
      %p76 = scmp.ne.s32.totalorder %s62, %s63
      %p77 = scmp.eq.s32.totalorder %s43, 7
      %p78 = por %p76, %p77
      %p80 = scmp.ne.s32.totalorder %s63, %s79
      %p81 = scmp.eq.s32.totalorder %s43, 0
      %p82 = por %p80, %p81
      %s83 = ssub.s32 %s44, %s56
      %p84 = scmp.eq.s32.totalorder %s83, 0
      %s86 = sadd.s32 %s85, 1
      %s87 = scalar_select %p84, %s85, %s86
      %p90 = pneg %p84
      %p91 = scmp.eq.s32.totalorder %s37, 7
      %p92 = por %p90, %p91
      %p93 = scmp.ne.s32.totalorder %s85, %s88
      %p94 = scmp.eq.s32.totalorder %s37, 0
      %p95 = por %p93, %p94
      %p96 = scmp.ne.s32.totalorder %s85, %s88
      %p97 = scmp.eq.s32.totalorder %s42, 7
      %p98 = por %p96, %p97
      %p99 = scmp.ne.s32.totalorder %s88, %s89
      %p100 = scmp.eq.s32.totalorder %s42, 0
      %p101 = por %p99, %p100
      %p102 = scmp.ne.s32.totalorder %s88, %s89
      %p103 = scmp.eq.s32.totalorder %s43, 7
      %p104 = por %p102, %p103
      %p106 = scmp.ne.s32.totalorder %s89, %s105
      %p107 = scmp.eq.s32.totalorder %s43, 0
      %p108 = por %p106, %p107
      %s110 = sadd.s32 %s109, 1
      %p113 = scmp.eq.s32.totalorder %s37, 7
      %p114 = scmp.ne.s32.totalorder %s109, %s111
      %p115 = scmp.eq.s32.totalorder %s37, 0
      %p116 = por %p114, %p115
      %p117 = scmp.ne.s32.totalorder %s109, %s111
      %p118 = scmp.eq.s32.totalorder %s42, 7
      %p119 = por %p117, %p118
      %p120 = scmp.ne.s32.totalorder %s111, %s112
      %p121 = scmp.eq.s32.totalorder %s42, 0
      %p122 = por %p120, %p121
      %p123 = scmp.ne.s32.totalorder %s111, %s112
      %p124 = scmp.eq.s32.totalorder %s43, 7
      %p125 = por %p123, %p124
      %p127 = scmp.ne.s32.totalorder %s112, %s126
      %p128 = scmp.eq.s32.totalorder %s43, 0
      %p129 = por %p127, %p128
      %s131 = sadd.s32 %s130, 1
      %p134 = scmp.eq.s32.totalorder %s37, 7
      %p135 = scmp.ne.s32.totalorder %s130, %s132
      %p136 = scmp.eq.s32.totalorder %s37, 0
      %p137 = por %p135, %p136
      %p138 = scmp.ne.s32.totalorder %s130, %s132
      %p139 = scmp.eq.s32.totalorder %s42, 7
      %p140 = por %p138, %p139
      %p141 = scmp.ne.s32.totalorder %s132, %s133
      %p142 = scmp.eq.s32.totalorder %s42, 0
      %p143 = por %p141, %p142
      %p144 = scmp.ne.s32.totalorder %s132, %s133
      %p145 = scmp.eq.s32.totalorder %s43, 7
      %p146 = por %p144, %p145
      %p148 = scmp.ne.s32.totalorder %s133, %s147
      %p149 = scmp.eq.s32.totalorder %s43, 0
      %p150 = por %p148, %p149
      %s152 = sadd.s32 %s151, 1
      %p155 = scmp.eq.s32.totalorder %s37, 7
      %p156 = scmp.ne.s32.totalorder %s151, %s153
      %p157 = scmp.eq.s32.totalorder %s37, 0
      %p158 = por %p156, %p157
      %p159 = scmp.ne.s32.totalorder %s151, %s153
      %p160 = scmp.eq.s32.totalorder %s42, 7
      %p161 = por %p159, %p160
      %p162 = scmp.ne.s32.totalorder %s153, %s154
      %p163 = scmp.eq.s32.totalorder %s42, 0
      %p164 = por %p162, %p163
      %p165 = scmp.ne.s32.totalorder %s153, %s154
      %p166 = scmp.eq.s32.totalorder %s43, 7
      %p167 = por %p165, %p166
      %p169 = scmp.ne.s32.totalorder %s154, %s168
      %p170 = scmp.eq.s32.totalorder %s43, 0
      %p171 = por %p169, %p170
      %s172 = ssub.s32 %s44, %s56
      %s173 = ssub.s32 %s45, %s52
      %s174 = sor.u32 %s172, %s173
      %p175 = scmp.eq.s32.totalorder %s174, 0
      %s177 = sadd.s32 %s176, 1
      %s178 = scalar_select %p175, %s176, %s177
      %p181 = pneg %p175
      %p182 = scmp.eq.s32.totalorder %s37, 7
      %p183 = por %p181, %p182
      %p184 = scmp.ne.s32.totalorder %s176, %s179
      %p185 = scmp.eq.s32.totalorder %s37, 0
      %p186 = por %p184, %p185
      %p187 = scmp.ne.s32.totalorder %s176, %s179
      %p188 = scmp.eq.s32.totalorder %s42, 7
      %p189 = por %p187, %p188
      %p190 = scmp.ne.s32.totalorder %s179, %s180
      %p191 = scmp.eq.s32.totalorder %s42, 0
      %p192 = por %p190, %p191
      %p193 = scmp.ne.s32.totalorder %s179, %s180
      %p194 = scmp.eq.s32.totalorder %s43, 7
      %p195 = por %p193, %p194
      %p197 = scmp.ne.s32.totalorder %s180, %s196
      %p198 = scmp.eq.s32.totalorder %s43, 0
      %p199 = por %p197, %p198
      %p200 = scmp.le.s32.totalorder 1, %s37
      %p201 = scmp.lt.s32.totalorder %s37, 9
      %p202 = pnand %p200, %p201
      %p203 = pneg %p202
      // Predicated region
      $region9: #{tpu_custom_call.1} parent=5 // pred_check
        _
      $region10: #{tpu_custom_call.1} parent=5 // pred_check_branch
        %205 = sbr.rel (%p202) target = $region12
      $region11: #{tpu_custom_call.1} parent=5 // pred_region
        %s206 = ssub.s32 %s37, 1
        // Predicated region
        $region13: #{tpu_custom_call.1} parent=11 // pred_check
          %p207 = pneg %p122
        $region14: #{tpu_custom_call.1} parent=11 // pred_check_branch
          %209 = sbr.rel (%p207) target = $region16
        $region15: #{tpu_custom_call.1} parent=11 // pred_region
          _
        $region16: #{tpu_custom_call.1} parent=11 // pred_fallthru
          _
        // Predicated region
        $region17: #{tpu_custom_call.1} parent=11 // pred_check
          %p210 = pneg %p143
        $region18: #{tpu_custom_call.1} parent=11 // pred_check_branch
          %212 = sbr.rel (%p210) target = $region20
        $region19: #{tpu_custom_call.1} parent=11 // pred_region
          _
        $region20: #{tpu_custom_call.1} parent=11 // pred_fallthru
          _
        // Predicated region
        $region21: #{tpu_custom_call.1} parent=11 // pred_check
          %p213 = pneg %p164
        $region22: #{tpu_custom_call.1} parent=11 // pred_check_branch
          %215 = sbr.rel (%p213) target = $region24
        $region23: #{tpu_custom_call.1} parent=11 // pred_region
          _
        $region24: #{tpu_custom_call.1} parent=11 // pred_fallthru
          _
      $region12: #{tpu_custom_call.1} parent=5 // pred_fallthru
        _
      %p216 = scmp.lt.s32.totalorder %s37, 8
      // Predicated region
      $region25: #{tpu_custom_call.1} parent=5 // pred_check
        %p217 = pneg %p216
      $region26: #{tpu_custom_call.1} parent=5 // pred_check_branch
        %219 = sbr.rel (%p217) target = $region28
      $region27: #{tpu_custom_call.1} parent=5 // pred_region
        // Predicated region
        $region29: #{tpu_custom_call.1} parent=27 // pred_check
          %p220 = pneg %p69
        $region30: #{tpu_custom_call.1} parent=27 // pred_check_branch
          %222 = sbr.rel (%p220) target = $region32
        $region31: #{tpu_custom_call.1} parent=27 // pred_region
          %s223 = sand.u32 %s59, 1
          %s224 = scalar_lea.sflag [#allocation8], %s223
          %s225 = sand.u32 %s59, 1
          %s226 = smul.addr %s225, 128
          %s227 = scalar_lea.vmem [#allocation7], %s226
          %s229 = ssub.s32 2048, 2048
          %230 = vsyncadd %s224, %s229
          %s231 = smul.addr %s44, 16
          %s232 = smul.addr %s231, 128
          %s233 = scalar_lea.hbm %s3, %s232
          %s234 = sshll.u32 %s227, 4
          %s235 = int_to_ptr.vmem [resolvable:$true] %s234
          %240 = dma.hbm_to_vmem [thread:$0]  %s233, 2048, %s235, %s224, 128, 128, 8
        $region32: #{tpu_custom_call.1} parent=27 // pred_fallthru
          _
        // Predicated region
        $region33: #{tpu_custom_call.1} parent=27 // pred_check
          %p241 = pneg %p95
        $region34: #{tpu_custom_call.1} parent=27 // pred_check_branch
          %243 = sbr.rel (%p241) target = $region36
        $region35: #{tpu_custom_call.1} parent=27 // pred_region
          %s244 = sand.u32 %s85, 1
          %s245 = scalar_lea.sflag [#allocation11], %s244
          %s246 = sand.u32 %s85, 1
          %s247 = smul.addr %s246, 128
          %s248 = scalar_lea.vmem [#allocation10], %s247
          %s250 = ssub.s32 2048, 2048
          %251 = vsyncadd %s245, %s250
          %s252 = smul.addr %s44, 16
          %s253 = smul.addr %s252, 128
          %s254 = scalar_lea.hbm %s4, %s253
          %s255 = sshll.u32 %s248, 4
          %s256 = int_to_ptr.vmem [resolvable:$true] %s255
          %261 = dma.hbm_to_vmem [thread:$0]  %s254, 2048, %s256, %s245, 128, 128, 8
        $region36: #{tpu_custom_call.1} parent=27 // pred_fallthru
          _
      $region28: #{tpu_custom_call.1} parent=5 // pred_fallthru
        _
      %p262 = scmp.le.s32.totalorder 1, %s37
      %p263 = scmp.lt.s32.totalorder %s37, 9
      %p264 = pnand %p262, %p263
      %p265 = pneg %p264
      // Predicated region
      $region37: #{tpu_custom_call.1} parent=5 // pred_check
        _
      $region38: #{tpu_custom_call.1} parent=5 // pred_check_branch
        %267 = sbr.rel (%p264) target = $region40
      $region39: #{tpu_custom_call.1} parent=5 // pred_region
        %s268 = ssub.s32 %s37, 1
        %s269 = sand.u32 %s62, 1
        %s270 = scalar_lea.sflag [#allocation8], %s269
        %s271 = sand.u32 %s62, 1
        %s272 = smul.addr %s271, 128
        %s273 = scalar_lea.vmem [#allocation7], %s272
        // Predicated region
        $region41: #{tpu_custom_call.1} parent=39 // pred_check
          %p274 = pneg %p75
        $region42: #{tpu_custom_call.1} parent=39 // pred_check_branch
          %276 = sbr.rel (%p274) target = $region44
        $region43: #{tpu_custom_call.1} parent=39 // pred_region
          %277 = dma.done %s270, 2048
        $region44: #{tpu_custom_call.1} parent=39 // pred_fallthru
          _
        %s278 = sand.u32 %s88, 1
        %s279 = scalar_lea.sflag [#allocation11], %s278
        %s280 = sand.u32 %s88, 1
        %s281 = smul.addr %s280, 128
        %s282 = scalar_lea.vmem [#allocation10], %s281
        // Predicated region
        $region45: #{tpu_custom_call.1} parent=39 // pred_check
          %p283 = pneg %p101
        $region46: #{tpu_custom_call.1} parent=39 // pred_check_branch
          %285 = sbr.rel (%p283) target = $region48
        $region47: #{tpu_custom_call.1} parent=39 // pred_region
          %286 = dma.done %s279, 2048
        $region48: #{tpu_custom_call.1} parent=39 // pred_fallthru
          _
        %s287 = sand.u32 %s62, 1
        %s288 = scalar_lea.sflag [#allocation8], %s287
        %s289 = sand.u32 %s62, 1
        %s290 = smul.addr %s289, 128
        %s291 = scalar_lea.vmem [#allocation7], %s290
        %p292 = pneg %p75
        %p293 = pneg %p72
        %s294 = sand.u32 %s88, 1
        %s295 = scalar_lea.sflag [#allocation11], %s294
        %s296 = sand.u32 %s88, 1
        %s297 = smul.addr %s296, 128
        %s298 = scalar_lea.vmem [#allocation10], %s297
        %p299 = pneg %p101
        %p300 = pneg %p98
        %p301 = pneg %p122
        %p302 = pneg %p119
        %p303 = pneg %p143
        %p304 = pneg %p140
        %p305 = pneg %p164
        %p306 = pneg %p161
        %p307 = pneg %p192
        %p308 = pneg %p189
        %s309 = sand.u32 %s179, 1
        %s310 = scalar_lea.sflag [#allocation9], %s309
        %s311 = sand.u32 %s179, 1
        %s312 = smul.addr %s311, 16
        %s313 = scalar_lea.vmem [#allocation12], %s312
        %s314 = smul.u32 2, %s47
        %s315 = sld [smem:[#allocation4 + %s47]]
        %s316 = scalar_lea.vmem %s273, %s315 [#allocation7]
        %v317 = vld [vmem:[%s316] sm:$0x1]
        %v318 = vld [vmem:[%s316 + $0x10] sm:$0x1]
        %v319 = vld [vmem:[%s316 + $0x20] sm:$0x1]
        %v320 = vld [vmem:[%s316 + $0x30] sm:$0x1]
        %v321 = vld [vmem:[%s316 + $0x40] sm:$0x1]
        %v322 = vld [vmem:[%s316 + $0x50] sm:$0x1]
        %v323 = vld [vmem:[%s316 + $0x60] sm:$0x1]
        %v324 = vld [vmem:[%s316 + $0x70] sm:$0x1]
        %s325 = scalar_lea.vmem %s282, %s315 [#allocation10]
        %v326 = vld [vmem:[%s325] sm:$0x1]
        %v327 = vld [vmem:[%s325 + $0x10] sm:$0x1]
        %v328 = vld [vmem:[%s325 + $0x20] sm:$0x1]
        %v329 = vld [vmem:[%s325 + $0x30] sm:$0x1]
        %v330 = vld [vmem:[%s325 + $0x40] sm:$0x1]
        %v331 = vld [vmem:[%s325 + $0x50] sm:$0x1]
        %v332 = vld [vmem:[%s325 + $0x60] sm:$0x1]
        %v333 = vld [vmem:[%s325 + $0x70] sm:$0x1]
        %v334 = vadd.f32 %v317, %v326
        %v335 = vadd.f32 %v318, %v327
        %v336 = vadd.f32 %v319, %v328
        %v337 = vadd.f32 %v320, %v329
        %v338 = vadd.f32 %v321, %v330
        %v339 = vadd.f32 %v322, %v331
        %v340 = vadd.f32 %v323, %v332
        %v341 = vadd.f32 %v324, %v333
        %v342 = vld [vmem:[%s5] sm:$0xff]
        %v343 = vld [vmem:[%s7] sm:$0xff]
        %345 = vset.pattern.permute.xlu0 0
        %346 = vperm.xlu0 %345, %v343
        %v347 = vpop.permute.xlu0 %346
        %v357 = vrot.slane %v335, 7
        %vm358 = vcmask 1041409
        %v359 = vsel %vm358, %v357, %v334
        %v360 = vrot.slane %v336, 6
        %vm361 = vcmask 1042434
        %v362 = vsel %vm361, %v360, %v359
        %v363 = vrot.slane %v337, 5
        %vm364 = vcmask 1043459
        %v365 = vsel %vm364, %v363, %v362
        %v366 = vrot.slane %v338, 4
        %vm367 = vcmask 1044484
        %v368 = vsel %vm367, %v366, %v365
        %v369 = vrot.slane %v339, 3
        %vm370 = vcmask 1045509
        %v371 = vsel %vm370, %v369, %v368
        %v372 = vrot.slane %v340, 2
        %vm373 = vcmask 1046534
        %v374 = vsel %vm373, %v372, %v371
        %v375 = vrot.slane %v341, 1
        %vm376 = vcmask 1047559
        %v377 = vsel %vm376, %v375, %v374
        %vm379 = vcmask 64512
        %v381 = vsel %vm379, %v342, 0
        %383 = vmatprep.subr.mxu0 0.0
        %384 = vmatpush1.msra.mxu0 %v377
        %385 = vmatprep.subr.mxu0 0.0
        %386 = vmatpush1.msra.mxu0 0.0
        %387 = vmatprep.subr.mxu0 0.0
        %388 = vmatpush1.msra.mxu0 0.0
        %389 = vmatprep.subr.mxu0 0.0
        %390 = vmatpush1.msra.mxu0 0.0
        %391 = vmatprep.subr.mxu0 0.0
        %392 = vmatpush1.msra.mxu0 0.0
        %393 = vmatprep.subr.mxu0 0.0
        %394 = vmatpush1.msra.mxu0 0.0
        %395 = vmatprep.subr.mxu0 0.0
        %396 = vmatpush1.msra.mxu0 0.0
        %397 = vmatprep.subr.mxu0 0.0
        %398 = vmatpush1.msra.mxu0 0.0
        %399 = vmatprep.subr.mxu0 0.0
        %400 = vmatpush1.msra.mxu0 0.0
        %401 = vmatprep.subr.mxu0 0.0
        %402 = vmatpush1.msra.mxu0 0.0
        %403 = vmatprep.subr.mxu0 0.0
        %404 = vmatpush1.msra.mxu0 0.0
        %405 = vmatprep.subr.mxu0 0.0
        %406 = vmatpush1.msra.mxu0 0.0
        %407 = vmatprep.subr.mxu0 0.0
        %408 = vmatpush1.msra.mxu0 0.0
        %409 = vmatprep.subr.mxu0 0.0
        %410 = vmatpush1.msra.mxu0 0.0
        %411 = vmatprep.subr.mxu0 0.0
        %412 = vmatpush1.msra.mxu0 0.0
        %413 = vmatprep.subr.mxu0 0.0
        %414 = vmatpush1.msra.mxu0 0.0
        %415 = vmatprep.subr.mxu0 0.0
        %416 = vmatpush1.msra.mxu0 0.0
        %417 = vmatprep.subr.mxu0 0.0
        %418 = vmatpush1.msra.mxu0 0.0
        %419 = vmatprep.subr.mxu0 0.0
        %420 = vmatpush1.msra.mxu0 0.0
        %421 = vmatprep.subr.mxu0 0.0
        %422 = vmatpush1.msra.mxu0 0.0
        %423 = vmatprep.subr.mxu0 0.0
        %424 = vmatpush1.msra.mxu0 0.0
        %425 = vmatprep.subr.mxu0 0.0
        %426 = vmatpush1.msra.mxu0 0.0
        %427 = vmatprep.subr.mxu0 0.0
        %428 = vmatpush1.msra.mxu0 0.0
        %429 = vmatprep.subr.mxu0 0.0
        %430 = vmatpush1.msra.mxu0 0.0
        %431 = vmatprep.subr.mxu0 0.0
        %432 = vmatpush1.msra.mxu0 0.0
        %433 = vmatprep.subr.mxu0 0.0
        %434 = vmatpush1.msra.mxu0 0.0
        %435 = vmatprep.subr.mxu0 0.0
        %436 = vmatpush1.msra.mxu0 0.0
        %437 = vmatprep.subr.mxu0 0.0
        %438 = vmatpush1.msra.mxu0 0.0
        %439 = vmatprep.subr.mxu0 0.0
        %440 = vmatpush1.msra.mxu0 0.0
        %441 = vmatprep.subr.mxu0 0.0
        %442 = vmatpush1.msra.mxu0 0.0
        %443 = vmatprep.subr.mxu0 0.0
        %444 = vmatpush1.msra.mxu0 0.0
        %445 = vmatprep.subr.mxu0 0.0
        %446 = vmatpush1.msra.mxu0 0.0
        %447 = vmatprep.mubr.f32.mxu0 0.0
        %448 = vmatmul.mubr.f32.gmra.mrb[0].mxu0 %v381
        %v449 = vpop.f32.mrb[0].mxu0
        %v450 = vadd.f32 %v347, %v449
        %v451 = vpop.f32.mrb[0].mxu0
        %452 = vdwg.mxu0
        %v453 = vld [vmem:[%s6] sm:$0xff]
        %v454 = vld [vmem:[%s6 + $0x8] sm:$0xff]
        %vm455 = vcmask 130048
        %v457 = vsel %vm455, %v450, 0
        %459 = vmatprep.subr.mxu0 0.0
        %460 = vmatpush1.msra.mxu0 %v453
        %461 = vmatprep.subr.mxu0 0.0
        %462 = vmatpush1.msra.mxu0 %v454
        %463 = vmatprep.subr.mxu0 0.0
        %464 = vmatpush1.msra.mxu0 0.0
        %465 = vmatprep.subr.mxu0 0.0
        %466 = vmatpush1.msra.mxu0 0.0
        %467 = vmatprep.subr.mxu0 0.0
        %468 = vmatpush1.msra.mxu0 0.0
        %469 = vmatprep.subr.mxu0 0.0
        %470 = vmatpush1.msra.mxu0 0.0
        %471 = vmatprep.subr.mxu0 0.0
        %472 = vmatpush1.msra.mxu0 0.0
        %473 = vmatprep.subr.mxu0 0.0
        %474 = vmatpush1.msra.mxu0 0.0
        %475 = vmatprep.subr.mxu0 0.0
        %476 = vmatpush1.msra.mxu0 0.0
        %477 = vmatprep.subr.mxu0 0.0
        %478 = vmatpush1.msra.mxu0 0.0
        %479 = vmatprep.subr.mxu0 0.0
        %480 = vmatpush1.msra.mxu0 0.0
        %481 = vmatprep.subr.mxu0 0.0
        %482 = vmatpush1.msra.mxu0 0.0
        %483 = vmatprep.subr.mxu0 0.0
        %484 = vmatpush1.msra.mxu0 0.0
        %485 = vmatprep.subr.mxu0 0.0
        %486 = vmatpush1.msra.mxu0 0.0
        %487 = vmatprep.subr.mxu0 0.0
        %488 = vmatpush1.msra.mxu0 0.0
        %489 = vmatprep.subr.mxu0 0.0
        %490 = vmatpush1.msra.mxu0 0.0
        %491 = vmatprep.subr.mxu0 0.0
        %492 = vmatpush1.msra.mxu0 0.0
        %493 = vmatprep.subr.mxu0 0.0
        %494 = vmatpush1.msra.mxu0 0.0
        %495 = vmatprep.subr.mxu0 0.0
        %496 = vmatpush1.msra.mxu0 0.0
        %497 = vmatprep.subr.mxu0 0.0
        %498 = vmatpush1.msra.mxu0 0.0
        %499 = vmatprep.subr.mxu0 0.0
        %500 = vmatpush1.msra.mxu0 0.0
        %501 = vmatprep.subr.mxu0 0.0
        %502 = vmatpush1.msra.mxu0 0.0
        %503 = vmatprep.subr.mxu0 0.0
        %504 = vmatpush1.msra.mxu0 0.0
        %505 = vmatprep.subr.mxu0 0.0
        %506 = vmatpush1.msra.mxu0 0.0
        %507 = vmatprep.subr.mxu0 0.0
        %508 = vmatpush1.msra.mxu0 0.0
        %509 = vmatprep.subr.mxu0 0.0
        %510 = vmatpush1.msra.mxu0 0.0
        %511 = vmatprep.subr.mxu0 0.0
        %512 = vmatpush1.msra.mxu0 0.0
        %513 = vmatprep.subr.mxu0 0.0
        %514 = vmatpush1.msra.mxu0 0.0
        %515 = vmatprep.subr.mxu0 0.0
        %516 = vmatpush1.msra.mxu0 0.0
        %517 = vmatprep.subr.mxu0 0.0
        %518 = vmatpush1.msra.mxu0 0.0
        %519 = vmatprep.subr.mxu0 0.0
        %520 = vmatpush1.msra.mxu0 0.0
        %521 = vmatprep.subr.mxu0 0.0
        %522 = vmatpush1.msra.mxu0 0.0
        %523 = vmatprep.mubr.f32.mxu0 0.0
        %524 = vmatmul.mubr.f32.gmra.mrb[0].mxu0 %v457
        %v525 = vpop.f32.mrb[0].mxu0
        %v526 = vadd.f32 0.0, %v525
        %v527 = vpop.f32.mrb[0].mxu0
        %528 = vdwg.mxu0
        %vm529 = vcmask 261120
        %530 = vst.msk [vmem:[#allocation2] sm:$0xff] %vm529, %v526
        %s531 = sadd.s32 %s315, 1
        %s532 = scalar_lea.vmem %s273, %s531 [#allocation7]
        %v533 = vld [vmem:[%s532] sm:$0x1]
        %v534 = vld [vmem:[%s532 + $0x10] sm:$0x1]
        %v535 = vld [vmem:[%s532 + $0x20] sm:$0x1]
        %v536 = vld [vmem:[%s532 + $0x30] sm:$0x1]
        %v537 = vld [vmem:[%s532 + $0x40] sm:$0x1]
        %v538 = vld [vmem:[%s532 + $0x50] sm:$0x1]
        %v539 = vld [vmem:[%s532 + $0x60] sm:$0x1]
        %v540 = vld [vmem:[%s532 + $0x70] sm:$0x1]
        %s541 = scalar_lea.vmem %s282, %s531 [#allocation10]
        %v542 = vld [vmem:[%s541] sm:$0x1]
        %v543 = vld [vmem:[%s541 + $0x10] sm:$0x1]
        %v544 = vld [vmem:[%s541 + $0x20] sm:$0x1]
        %v545 = vld [vmem:[%s541 + $0x30] sm:$0x1]
        %v546 = vld [vmem:[%s541 + $0x40] sm:$0x1]
        %v547 = vld [vmem:[%s541 + $0x50] sm:$0x1]
        %v548 = vld [vmem:[%s541 + $0x60] sm:$0x1]
        %v549 = vld [vmem:[%s541 + $0x70] sm:$0x1]
        %v550 = vadd.f32 %v533, %v542
        %v551 = vadd.f32 %v534, %v543
        %v552 = vadd.f32 %v535, %v544
        %v553 = vadd.f32 %v536, %v545
        %v554 = vadd.f32 %v537, %v546
        %v555 = vadd.f32 %v538, %v547
        %v556 = vadd.f32 %v539, %v548
        %v557 = vadd.f32 %v540, %v549
        %v558 = vld [vmem:[%s5] sm:$0xff]
        %v559 = vld [vmem:[%s7] sm:$0xff]
        %561 = vset.pattern.permute.xlu0 0
        %562 = vperm.xlu0 %561, %v559
        %v563 = vpop.permute.xlu0 %562
        %v573 = vrot.slane %v551, 7
        %v574 = vsel %vm358, %v573, %v550
        %v575 = vrot.slane %v552, 6
        %v576 = vsel %vm361, %v575, %v574
        %v577 = vrot.slane %v553, 5
        %v578 = vsel %vm364, %v577, %v576
        %v579 = vrot.slane %v554, 4
        %v580 = vsel %vm367, %v579, %v578
        %v581 = vrot.slane %v555, 3
        %v582 = vsel %vm370, %v581, %v580
        %v583 = vrot.slane %v556, 2
        %v584 = vsel %vm373, %v583, %v582
        %v585 = vrot.slane %v557, 1
        %v586 = vsel %vm376, %v585, %v584
        %v589 = vsel %vm379, %v558, 0
        %591 = vmatprep.subr.mxu0 0.0
        %592 = vmatpush1.msra.mxu0 %v586
        %593 = vmatprep.subr.mxu0 0.0
        %594 = vmatpush1.msra.mxu0 0.0
        %595 = vmatprep.subr.mxu0 0.0
        %596 = vmatpush1.msra.mxu0 0.0
        %597 = vmatprep.subr.mxu0 0.0
        %598 = vmatpush1.msra.mxu0 0.0
        %599 = vmatprep.subr.mxu0 0.0
        %600 = vmatpush1.msra.mxu0 0.0
        %601 = vmatprep.subr.mxu0 0.0
        %602 = vmatpush1.msra.mxu0 0.0
        %603 = vmatprep.subr.mxu0 0.0
        %604 = vmatpush1.msra.mxu0 0.0
        %605 = vmatprep.subr.mxu0 0.0
        %606 = vmatpush1.msra.mxu0 0.0
        %607 = vmatprep.subr.mxu0 0.0
        %608 = vmatpush1.msra.mxu0 0.0
        %609 = vmatprep.subr.mxu0 0.0
        %610 = vmatpush1.msra.mxu0 0.0
        %611 = vmatprep.subr.mxu0 0.0
        %612 = vmatpush1.msra.mxu0 0.0
        %613 = vmatprep.subr.mxu0 0.0
        %614 = vmatpush1.msra.mxu0 0.0
        %615 = vmatprep.subr.mxu0 0.0
        %616 = vmatpush1.msra.mxu0 0.0
        %617 = vmatprep.subr.mxu0 0.0
        %618 = vmatpush1.msra.mxu0 0.0
        %619 = vmatprep.subr.mxu0 0.0
        %620 = vmatpush1.msra.mxu0 0.0
        %621 = vmatprep.subr.mxu0 0.0
        %622 = vmatpush1.msra.mxu0 0.0
        %623 = vmatprep.subr.mxu0 0.0
        %624 = vmatpush1.msra.mxu0 0.0
        %625 = vmatprep.subr.mxu0 0.0
        %626 = vmatpush1.msra.mxu0 0.0
        %627 = vmatprep.subr.mxu0 0.0
        %628 = vmatpush1.msra.mxu0 0.0
        %629 = vmatprep.subr.mxu0 0.0
        %630 = vmatpush1.msra.mxu0 0.0
        %631 = vmatprep.subr.mxu0 0.0
        %632 = vmatpush1.msra.mxu0 0.0
        %633 = vmatprep.subr.mxu0 0.0
        %634 = vmatpush1.msra.mxu0 0.0
        %635 = vmatprep.subr.mxu0 0.0
        %636 = vmatpush1.msra.mxu0 0.0
        %637 = vmatprep.subr.mxu0 0.0
        %638 = vmatpush1.msra.mxu0 0.0
        %639 = vmatprep.subr.mxu0 0.0
        %640 = vmatpush1.msra.mxu0 0.0
        %641 = vmatprep.subr.mxu0 0.0
        %642 = vmatpush1.msra.mxu0 0.0
        %643 = vmatprep.subr.mxu0 0.0
        %644 = vmatpush1.msra.mxu0 0.0
        %645 = vmatprep.subr.mxu0 0.0
        %646 = vmatpush1.msra.mxu0 0.0
        %647 = vmatprep.subr.mxu0 0.0
        %648 = vmatpush1.msra.mxu0 0.0
        %649 = vmatprep.subr.mxu0 0.0
        %650 = vmatpush1.msra.mxu0 0.0
        %651 = vmatprep.subr.mxu0 0.0
        %652 = vmatpush1.msra.mxu0 0.0
        %653 = vmatprep.subr.mxu0 0.0
        %654 = vmatpush1.msra.mxu0 0.0
        %655 = vmatprep.mubr.f32.mxu0 0.0
        %656 = vmatmul.mubr.f32.gmra.mrb[0].mxu0 %v589
        %v657 = vpop.f32.mrb[0].mxu0
        %v658 = vadd.f32 %v563, %v657
        %v659 = vpop.f32.mrb[0].mxu0
        %660 = vdwg.mxu0
        %v661 = vld [vmem:[%s6] sm:$0xff]
        %v662 = vld [vmem:[%s6 + $0x8] sm:$0xff]
        %v664 = vsel %vm455, %v658, 0
        %666 = vmatprep.subr.mxu0 0.0
        %667 = vmatpush1.msra.mxu0 %v661
        %668 = vmatprep.subr.mxu0 0.0
        %669 = vmatpush1.msra.mxu0 %v662
        %670 = vmatprep.subr.mxu0 0.0
        %671 = vmatpush1.msra.mxu0 0.0
        %672 = vmatprep.subr.mxu0 0.0
        %673 = vmatpush1.msra.mxu0 0.0
        %674 = vmatprep.subr.mxu0 0.0
        %675 = vmatpush1.msra.mxu0 0.0
        %676 = vmatprep.subr.mxu0 0.0
        %677 = vmatpush1.msra.mxu0 0.0
        %678 = vmatprep.subr.mxu0 0.0
        %679 = vmatpush1.msra.mxu0 0.0
        %680 = vmatprep.subr.mxu0 0.0
        %681 = vmatpush1.msra.mxu0 0.0
        %682 = vmatprep.subr.mxu0 0.0
        %683 = vmatpush1.msra.mxu0 0.0
        %684 = vmatprep.subr.mxu0 0.0
        %685 = vmatpush1.msra.mxu0 0.0
        %686 = vmatprep.subr.mxu0 0.0
        %687 = vmatpush1.msra.mxu0 0.0
        %688 = vmatprep.subr.mxu0 0.0
        %689 = vmatpush1.msra.mxu0 0.0
        %690 = vmatprep.subr.mxu0 0.0
        %691 = vmatpush1.msra.mxu0 0.0
        %692 = vmatprep.subr.mxu0 0.0
        %693 = vmatpush1.msra.mxu0 0.0
        %694 = vmatprep.subr.mxu0 0.0
        %695 = vmatpush1.msra.mxu0 0.0
        %696 = vmatprep.subr.mxu0 0.0
        %697 = vmatpush1.msra.mxu0 0.0
        %698 = vmatprep.subr.mxu0 0.0
        %699 = vmatpush1.msra.mxu0 0.0
        %700 = vmatprep.subr.mxu0 0.0
        %701 = vmatpush1.msra.mxu0 0.0
        %702 = vmatprep.subr.mxu0 0.0
        %703 = vmatpush1.msra.mxu0 0.0
        %704 = vmatprep.subr.mxu0 0.0
        %705 = vmatpush1.msra.mxu0 0.0
        %706 = vmatprep.subr.mxu0 0.0
        %707 = vmatpush1.msra.mxu0 0.0
        %708 = vmatprep.subr.mxu0 0.0
        %709 = vmatpush1.msra.mxu0 0.0
        %710 = vmatprep.subr.mxu0 0.0
        %711 = vmatpush1.msra.mxu0 0.0
        %712 = vmatprep.subr.mxu0 0.0
        %713 = vmatpush1.msra.mxu0 0.0
        %714 = vmatprep.subr.mxu0 0.0
        %715 = vmatpush1.msra.mxu0 0.0
        %716 = vmatprep.subr.mxu0 0.0
        %717 = vmatpush1.msra.mxu0 0.0
        %718 = vmatprep.subr.mxu0 0.0
        %719 = vmatpush1.msra.mxu0 0.0
        %720 = vmatprep.subr.mxu0 0.0
        %721 = vmatpush1.msra.mxu0 0.0
        %722 = vmatprep.subr.mxu0 0.0
        %723 = vmatpush1.msra.mxu0 0.0
        %724 = vmatprep.subr.mxu0 0.0
        %725 = vmatpush1.msra.mxu0 0.0
        %726 = vmatprep.subr.mxu0 0.0
        %727 = vmatpush1.msra.mxu0 0.0
        %728 = vmatprep.subr.mxu0 0.0
        %729 = vmatpush1.msra.mxu0 0.0
        %730 = vmatprep.mubr.f32.mxu0 0.0
        %731 = vmatmul.mubr.f32.gmra.mrb[0].mxu0 %v664
        %v732 = vpop.f32.mrb[0].mxu0
        %v733 = vadd.f32 0.0, %v732
        %v734 = vpop.f32.mrb[0].mxu0
        %735 = vdwg.mxu0
        %s736 = scalar_lea.vmem [#allocation2], 8
        %737 = vst.msk [vmem:[%s736] sm:$0xff] %vm529, %v733
        %s738 = sadd.s32 %s315, 2
        %s739 = scalar_lea.vmem %s273, %s738 [#allocation7]
        %v740 = vld [vmem:[%s739] sm:$0x1]
        %v741 = vld [vmem:[%s739 + $0x10] sm:$0x1]
        %v742 = vld [vmem:[%s739 + $0x20] sm:$0x1]
        %v743 = vld [vmem:[%s739 + $0x30] sm:$0x1]
        %v744 = vld [vmem:[%s739 + $0x40] sm:$0x1]
        %v745 = vld [vmem:[%s739 + $0x50] sm:$0x1]
        %v746 = vld [vmem:[%s739 + $0x60] sm:$0x1]
        %v747 = vld [vmem:[%s739 + $0x70] sm:$0x1]
        %s748 = scalar_lea.vmem %s282, %s738 [#allocation10]
        %v749 = vld [vmem:[%s748] sm:$0x1]
        %v750 = vld [vmem:[%s748 + $0x10] sm:$0x1]
        %v751 = vld [vmem:[%s748 + $0x20] sm:$0x1]
        %v752 = vld [vmem:[%s748 + $0x30] sm:$0x1]
        %v753 = vld [vmem:[%s748 + $0x40] sm:$0x1]
        %v754 = vld [vmem:[%s748 + $0x50] sm:$0x1]
        %v755 = vld [vmem:[%s748 + $0x60] sm:$0x1]
        %v756 = vld [vmem:[%s748 + $0x70] sm:$0x1]
        %v757 = vadd.f32 %v740, %v749
        %v758 = vadd.f32 %v741, %v750
        %v759 = vadd.f32 %v742, %v751
        %v760 = vadd.f32 %v743, %v752
        %v761 = vadd.f32 %v744, %v753
        %v762 = vadd.f32 %v745, %v754
        %v763 = vadd.f32 %v746, %v755
        %v764 = vadd.f32 %v747, %v756
        %v765 = vld [vmem:[%s5] sm:$0xff]
        %v766 = vld [vmem:[%s7] sm:$0xff]
        %768 = vset.pattern.permute.xlu0 0
        %769 = vperm.xlu0 %768, %v766
        %v770 = vpop.permute.xlu0 %769
        %v780 = vrot.slane %v758, 7
        %v781 = vsel %vm358, %v780, %v757
        %v782 = vrot.slane %v759, 6
        %v783 = vsel %vm361, %v782, %v781
        %v784 = vrot.slane %v760, 5
        %v785 = vsel %vm364, %v784, %v783
        %v786 = vrot.slane %v761, 4
        %v787 = vsel %vm367, %v786, %v785
        %v788 = vrot.slane %v762, 3
        %v789 = vsel %vm370, %v788, %v787
        %v790 = vrot.slane %v763, 2
        %v791 = vsel %vm373, %v790, %v789
        %v792 = vrot.slane %v764, 1
        %v793 = vsel %vm376, %v792, %v791
        %v796 = vsel %vm379, %v765, 0
        %798 = vmatprep.subr.mxu0 0.0
        %799 = vmatpush1.msra.mxu0 %v793
        %800 = vmatprep.subr.mxu0 0.0
        %801 = vmatpush1.msra.mxu0 0.0
        %802 = vmatprep.subr.mxu0 0.0
        %803 = vmatpush1.msra.mxu0 0.0
        %804 = vmatprep.subr.mxu0 0.0
        %805 = vmatpush1.msra.mxu0 0.0
        %806 = vmatprep.subr.mxu0 0.0
        %807 = vmatpush1.msra.mxu0 0.0
        %808 = vmatprep.subr.mxu0 0.0
        %809 = vmatpush1.msra.mxu0 0.0
        %810 = vmatprep.subr.mxu0 0.0
        %811 = vmatpush1.msra.mxu0 0.0
        %812 = vmatprep.subr.mxu0 0.0
        %813 = vmatpush1.msra.mxu0 0.0
        %814 = vmatprep.subr.mxu0 0.0
        %815 = vmatpush1.msra.mxu0 0.0
        %816 = vmatprep.subr.mxu0 0.0
        %817 = vmatpush1.msra.mxu0 0.0
        %818 = vmatprep.subr.mxu0 0.0
        %819 = vmatpush1.msra.mxu0 0.0
        %820 = vmatprep.subr.mxu0 0.0
        %821 = vmatpush1.msra.mxu0 0.0
        %822 = vmatprep.subr.mxu0 0.0
        %823 = vmatpush1.msra.mxu0 0.0
        %824 = vmatprep.subr.mxu0 0.0
        %825 = vmatpush1.msra.mxu0 0.0
        %826 = vmatprep.subr.mxu0 0.0
        %827 = vmatpush1.msra.mxu0 0.0
        %828 = vmatprep.subr.mxu0 0.0
        %829 = vmatpush1.msra.mxu0 0.0
        %830 = vmatprep.subr.mxu0 0.0
        %831 = vmatpush1.msra.mxu0 0.0
        %832 = vmatprep.subr.mxu0 0.0
        %833 = vmatpush1.msra.mxu0 0.0
        %834 = vmatprep.subr.mxu0 0.0
        %835 = vmatpush1.msra.mxu0 0.0
        %836 = vmatprep.subr.mxu0 0.0
        %837 = vmatpush1.msra.mxu0 0.0
        %838 = vmatprep.subr.mxu0 0.0
        %839 = vmatpush1.msra.mxu0 0.0
        %840 = vmatprep.subr.mxu0 0.0
        %841 = vmatpush1.msra.mxu0 0.0
        %842 = vmatprep.subr.mxu0 0.0
        %843 = vmatpush1.msra.mxu0 0.0
        %844 = vmatprep.subr.mxu0 0.0
        %845 = vmatpush1.msra.mxu0 0.0
        %846 = vmatprep.subr.mxu0 0.0
        %847 = vmatpush1.msra.mxu0 0.0
        %848 = vmatprep.subr.mxu0 0.0
        %849 = vmatpush1.msra.mxu0 0.0
        %850 = vmatprep.subr.mxu0 0.0
        %851 = vmatpush1.msra.mxu0 0.0
        %852 = vmatprep.subr.mxu0 0.0
        %853 = vmatpush1.msra.mxu0 0.0
        %854 = vmatprep.subr.mxu0 0.0
        %855 = vmatpush1.msra.mxu0 0.0
        %856 = vmatprep.subr.mxu0 0.0
        %857 = vmatpush1.msra.mxu0 0.0
        %858 = vmatprep.subr.mxu0 0.0
        %859 = vmatpush1.msra.mxu0 0.0
        %860 = vmatprep.subr.mxu0 0.0
        %861 = vmatpush1.msra.mxu0 0.0
        %862 = vmatprep.mubr.f32.mxu0 0.0
        %863 = vmatmul.mubr.f32.gmra.mrb[0].mxu0 %v796
        %v864 = vpop.f32.mrb[0].mxu0
        %v865 = vadd.f32 %v770, %v864
        %v866 = vpop.f32.mrb[0].mxu0
        %867 = vdwg.mxu0
        %v868 = vld [vmem:[%s6] sm:$0xff]
        %v869 = vld [vmem:[%s6 + $0x8] sm:$0xff]
        %v871 = vsel %vm455, %v865, 0
        %873 = vmatprep.subr.mxu0 0.0
        %874 = vmatpush1.msra.mxu0 %v868
        %875 = vmatprep.subr.mxu0 0.0
        %876 = vmatpush1.msra.mxu0 %v869
        %877 = vmatprep.subr.mxu0 0.0
        %878 = vmatpush1.msra.mxu0 0.0
        %879 = vmatprep.subr.mxu0 0.0
        %880 = vmatpush1.msra.mxu0 0.0
        %881 = vmatprep.subr.mxu0 0.0
        %882 = vmatpush1.msra.mxu0 0.0
        %883 = vmatprep.subr.mxu0 0.0
        %884 = vmatpush1.msra.mxu0 0.0
        %885 = vmatprep.subr.mxu0 0.0
        %886 = vmatpush1.msra.mxu0 0.0
        %887 = vmatprep.subr.mxu0 0.0
        %888 = vmatpush1.msra.mxu0 0.0
        %889 = vmatprep.subr.mxu0 0.0
        %890 = vmatpush1.msra.mxu0 0.0
        %891 = vmatprep.subr.mxu0 0.0
        %892 = vmatpush1.msra.mxu0 0.0
        %893 = vmatprep.subr.mxu0 0.0
        %894 = vmatpush1.msra.mxu0 0.0
        %895 = vmatprep.subr.mxu0 0.0
        %896 = vmatpush1.msra.mxu0 0.0
        %897 = vmatprep.subr.mxu0 0.0
        %898 = vmatpush1.msra.mxu0 0.0
        %899 = vmatprep.subr.mxu0 0.0
        %900 = vmatpush1.msra.mxu0 0.0
        %901 = vmatprep.subr.mxu0 0.0
        %902 = vmatpush1.msra.mxu0 0.0
        %903 = vmatprep.subr.mxu0 0.0
        %904 = vmatpush1.msra.mxu0 0.0
        %905 = vmatprep.subr.mxu0 0.0
        %906 = vmatpush1.msra.mxu0 0.0
        %907 = vmatprep.subr.mxu0 0.0
        %908 = vmatpush1.msra.mxu0 0.0
        %909 = vmatprep.subr.mxu0 0.0
        %910 = vmatpush1.msra.mxu0 0.0
        %911 = vmatprep.subr.mxu0 0.0
        %912 = vmatpush1.msra.mxu0 0.0
        %913 = vmatprep.subr.mxu0 0.0
        %914 = vmatpush1.msra.mxu0 0.0
        %915 = vmatprep.subr.mxu0 0.0
        %916 = vmatpush1.msra.mxu0 0.0
        %917 = vmatprep.subr.mxu0 0.0
        %918 = vmatpush1.msra.mxu0 0.0
        %919 = vmatprep.subr.mxu0 0.0
        %920 = vmatpush1.msra.mxu0 0.0
        %921 = vmatprep.subr.mxu0 0.0
        %922 = vmatpush1.msra.mxu0 0.0
        %923 = vmatprep.subr.mxu0 0.0
        %924 = vmatpush1.msra.mxu0 0.0
        %925 = vmatprep.subr.mxu0 0.0
        %926 = vmatpush1.msra.mxu0 0.0
        %927 = vmatprep.subr.mxu0 0.0
        %928 = vmatpush1.msra.mxu0 0.0
        %929 = vmatprep.subr.mxu0 0.0
        %930 = vmatpush1.msra.mxu0 0.0
        %931 = vmatprep.subr.mxu0 0.0
        %932 = vmatpush1.msra.mxu0 0.0
        %933 = vmatprep.subr.mxu0 0.0
        %934 = vmatpush1.msra.mxu0 0.0
        %935 = vmatprep.subr.mxu0 0.0
        %936 = vmatpush1.msra.mxu0 0.0
        %937 = vmatprep.mubr.f32.mxu0 0.0
        %938 = vmatmul.mubr.f32.gmra.mrb[0].mxu0 %v871
        %v939 = vpop.f32.mrb[0].mxu0
        %v940 = vadd.f32 0.0, %v939
        %v941 = vpop.f32.mrb[0].mxu0
        %942 = vdwg.mxu0
        %s943 = scalar_lea.vmem [#allocation2], 16
        %944 = vst.msk [vmem:[%s943] sm:$0xff] %vm529, %v940
        %s945 = sadd.s32 %s315, 3
        %s946 = scalar_lea.vmem %s273, %s945 [#allocation7]
        %v947 = vld [vmem:[%s946] sm:$0x1]
        %v948 = vld [vmem:[%s946 + $0x10] sm:$0x1]
        %v949 = vld [vmem:[%s946 + $0x20] sm:$0x1]
        %v950 = vld [vmem:[%s946 + $0x30] sm:$0x1]
        %v951 = vld [vmem:[%s946 + $0x40] sm:$0x1]
        %v952 = vld [vmem:[%s946 + $0x50] sm:$0x1]
        %v953 = vld [vmem:[%s946 + $0x60] sm:$0x1]
        %v954 = vld [vmem:[%s946 + $0x70] sm:$0x1]
        %s955 = scalar_lea.vmem %s282, %s945 [#allocation10]
        %v956 = vld [vmem:[%s955] sm:$0x1]
        %v957 = vld [vmem:[%s955 + $0x10] sm:$0x1]
        %v958 = vld [vmem:[%s955 + $0x20] sm:$0x1]
        %v959 = vld [vmem:[%s955 + $0x30] sm:$0x1]
        %v960 = vld [vmem:[%s955 + $0x40] sm:$0x1]
        %v961 = vld [vmem:[%s955 + $0x50] sm:$0x1]
        %v962 = vld [vmem:[%s955 + $0x60] sm:$0x1]
        %v963 = vld [vmem:[%s955 + $0x70] sm:$0x1]
        %v964 = vadd.f32 %v947, %v956
        %v965 = vadd.f32 %v948, %v957
        %v966 = vadd.f32 %v949, %v958
        %v967 = vadd.f32 %v950, %v959
        %v968 = vadd.f32 %v951, %v960
        %v969 = vadd.f32 %v952, %v961
        %v970 = vadd.f32 %v953, %v962
        %v971 = vadd.f32 %v954, %v963
        %v972 = vld [vmem:[%s5] sm:$0xff]
        %v973 = vld [vmem:[%s7] sm:$0xff]
        %975 = vset.pattern.permute.xlu0 0
        %976 = vperm.xlu0 %975, %v973
        %v977 = vpop.permute.xlu0 %976
        %v987 = vrot.slane %v965, 7
        %v988 = vsel %vm358, %v987, %v964
        %v989 = vrot.slane %v966, 6
        %v990 = vsel %vm361, %v989, %v988
        %v991 = vrot.slane %v967, 5
        %v992 = vsel %vm364, %v991, %v990
        %v993 = vrot.slane %v968, 4
        %v994 = vsel %vm367, %v993, %v992
        %v995 = vrot.slane %v969, 3
        %v996 = vsel %vm370, %v995, %v994
        %v997 = vrot.slane %v970, 2
        %v998 = vsel %vm373, %v997, %v996
        %v999 = vrot.slane %v971, 1
        %v1000 = vsel %vm376, %v999, %v998
        %v1003 = vsel %vm379, %v972, 0
        %1005 = vmatprep.subr.mxu0 0.0
        %1006 = vmatpush1.msra.mxu0 %v1000
        %1007 = vmatprep.subr.mxu0 0.0
        %1008 = vmatpush1.msra.mxu0 0.0
        %1009 = vmatprep.subr.mxu0 0.0
        %1010 = vmatpush1.msra.mxu0 0.0
        %1011 = vmatprep.subr.mxu0 0.0
        %1012 = vmatpush1.msra.mxu0 0.0
        %1013 = vmatprep.subr.mxu0 0.0
        %1014 = vmatpush1.msra.mxu0 0.0
        %1015 = vmatprep.subr.mxu0 0.0
        %1016 = vmatpush1.msra.mxu0 0.0
        %1017 = vmatprep.subr.mxu0 0.0
        %1018 = vmatpush1.msra.mxu0 0.0
        %1019 = vmatprep.subr.mxu0 0.0
        %1020 = vmatpush1.msra.mxu0 0.0
        %1021 = vmatprep.subr.mxu0 0.0
        %1022 = vmatpush1.msra.mxu0 0.0
        %1023 = vmatprep.subr.mxu0 0.0
        %1024 = vmatpush1.msra.mxu0 0.0
        %1025 = vmatprep.subr.mxu0 0.0
        %1026 = vmatpush1.msra.mxu0 0.0
        %1027 = vmatprep.subr.mxu0 0.0
        %1028 = vmatpush1.msra.mxu0 0.0
        %1029 = vmatprep.subr.mxu0 0.0
        %1030 = vmatpush1.msra.mxu0 0.0
        %1031 = vmatprep.subr.mxu0 0.0
        %1032 = vmatpush1.msra.mxu0 0.0
        %1033 = vmatprep.subr.mxu0 0.0
        %1034 = vmatpush1.msra.mxu0 0.0
        %1035 = vmatprep.subr.mxu0 0.0
        %1036 = vmatpush1.msra.mxu0 0.0
        %1037 = vmatprep.subr.mxu0 0.0
        %1038 = vmatpush1.msra.mxu0 0.0
        %1039 = vmatprep.subr.mxu0 0.0
        %1040 = vmatpush1.msra.mxu0 0.0
        %1041 = vmatprep.subr.mxu0 0.0
        %1042 = vmatpush1.msra.mxu0 0.0
        %1043 = vmatprep.subr.mxu0 0.0
        %1044 = vmatpush1.msra.mxu0 0.0
        %1045 = vmatprep.subr.mxu0 0.0
        %1046 = vmatpush1.msra.mxu0 0.0
        %1047 = vmatprep.subr.mxu0 0.0
        %1048 = vmatpush1.msra.mxu0 0.0
        %1049 = vmatprep.subr.mxu0 0.0
        %1050 = vmatpush1.msra.mxu0 0.0
        %1051 = vmatprep.subr.mxu0 0.0
        %1052 = vmatpush1.msra.mxu0 0.0
        %1053 = vmatprep.subr.mxu0 0.0
        %1054 = vmatpush1.msra.mxu0 0.0
        %1055 = vmatprep.subr.mxu0 0.0
        %1056 = vmatpush1.msra.mxu0 0.0
        %1057 = vmatprep.subr.mxu0 0.0
        %1058 = vmatpush1.msra.mxu0 0.0
        %1059 = vmatprep.subr.mxu0 0.0
        %1060 = vmatpush1.msra.mxu0 0.0
        %1061 = vmatprep.subr.mxu0 0.0
        %1062 = vmatpush1.msra.mxu0 0.0
        %1063 = vmatprep.subr.mxu0 0.0
        %1064 = vmatpush1.msra.mxu0 0.0
        %1065 = vmatprep.subr.mxu0 0.0
        %1066 = vmatpush1.msra.mxu0 0.0
        %1067 = vmatprep.subr.mxu0 0.0
        %1068 = vmatpush1.msra.mxu0 0.0
        %1069 = vmatprep.mubr.f32.mxu0 0.0
        %1070 = vmatmul.mubr.f32.gmra.mrb[0].mxu0 %v1003
        %v1071 = vpop.f32.mrb[0].mxu0
        %v1072 = vadd.f32 %v977, %v1071
        %v1073 = vpop.f32.mrb[0].mxu0
        %1074 = vdwg.mxu0
        %v1075 = vld [vmem:[%s6] sm:$0xff]
        %v1076 = vld [vmem:[%s6 + $0x8] sm:$0xff]
        %v1078 = vsel %vm455, %v1072, 0
        %1080 = vmatprep.subr.mxu0 0.0
        %1081 = vmatpush1.msra.mxu0 %v1075
        %1082 = vmatprep.subr.mxu0 0.0
        %1083 = vmatpush1.msra.mxu0 %v1076
        %1084 = vmatprep.subr.mxu0 0.0
        %1085 = vmatpush1.msra.mxu0 0.0
        %1086 = vmatprep.subr.mxu0 0.0
        %1087 = vmatpush1.msra.mxu0 0.0
        %1088 = vmatprep.subr.mxu0 0.0
        %1089 = vmatpush1.msra.mxu0 0.0
        %1090 = vmatprep.subr.mxu0 0.0
        %1091 = vmatpush1.msra.mxu0 0.0
        %1092 = vmatprep.subr.mxu0 0.0
        %1093 = vmatpush1.msra.mxu0 0.0
        %1094 = vmatprep.subr.mxu0 0.0
        %1095 = vmatpush1.msra.mxu0 0.0
        %1096 = vmatprep.subr.mxu0 0.0
        %1097 = vmatpush1.msra.mxu0 0.0
        %1098 = vmatprep.subr.mxu0 0.0
        %1099 = vmatpush1.msra.mxu0 0.0
        %1100 = vmatprep.subr.mxu0 0.0
        %1101 = vmatpush1.msra.mxu0 0.0
        %1102 = vmatprep.subr.mxu0 0.0
        %1103 = vmatpush1.msra.mxu0 0.0
        %1104 = vmatprep.subr.mxu0 0.0
        %1105 = vmatpush1.msra.mxu0 0.0
        %1106 = vmatprep.subr.mxu0 0.0
        %1107 = vmatpush1.msra.mxu0 0.0
        %1108 = vmatprep.subr.mxu0 0.0
        %1109 = vmatpush1.msra.mxu0 0.0
        %1110 = vmatprep.subr.mxu0 0.0
        %1111 = vmatpush1.msra.mxu0 0.0
        %1112 = vmatprep.subr.mxu0 0.0
        %1113 = vmatpush1.msra.mxu0 0.0
        %1114 = vmatprep.subr.mxu0 0.0
        %1115 = vmatpush1.msra.mxu0 0.0
        %1116 = vmatprep.subr.mxu0 0.0
        %1117 = vmatpush1.msra.mxu0 0.0
        %1118 = vmatprep.subr.mxu0 0.0
        %1119 = vmatpush1.msra.mxu0 0.0
        %1120 = vmatprep.subr.mxu0 0.0
        %1121 = vmatpush1.msra.mxu0 0.0
        %1122 = vmatprep.subr.mxu0 0.0
        %1123 = vmatpush1.msra.mxu0 0.0
        %1124 = vmatprep.subr.mxu0 0.0
        %1125 = vmatpush1.msra.mxu0 0.0
        %1126 = vmatprep.subr.mxu0 0.0
        %1127 = vmatpush1.msra.mxu0 0.0
        %1128 = vmatprep.subr.mxu0 0.0
        %1129 = vmatpush1.msra.mxu0 0.0
        %1130 = vmatprep.subr.mxu0 0.0
        %1131 = vmatpush1.msra.mxu0 0.0
        %1132 = vmatprep.subr.mxu0 0.0
        %1133 = vmatpush1.msra.mxu0 0.0
        %1134 = vmatprep.subr.mxu0 0.0
        %1135 = vmatpush1.msra.mxu0 0.0
        %1136 = vmatprep.subr.mxu0 0.0
        %1137 = vmatpush1.msra.mxu0 0.0
        %1138 = vmatprep.subr.mxu0 0.0
        %1139 = vmatpush1.msra.mxu0 0.0
        %1140 = vmatprep.subr.mxu0 0.0
        %1141 = vmatpush1.msra.mxu0 0.0
        %1142 = vmatprep.subr.mxu0 0.0
        %1143 = vmatpush1.msra.mxu0 0.0
        %1144 = vmatprep.mubr.f32.mxu0 0.0
        %1145 = vmatmul.mubr.f32.gmra.mrb[0].mxu0 %v1078
        %v1146 = vpop.f32.mrb[0].mxu0
        %v1147 = vadd.f32 0.0, %v1146
        %v1148 = vpop.f32.mrb[0].mxu0
        %1149 = vdwg.mxu0
        %s1150 = scalar_lea.vmem [#allocation2], 24
        %1151 = vst.msk [vmem:[%s1150] sm:$0xff] %vm529, %v1147
        %s1152 = sadd.s32 %s315, 4
        %s1153 = scalar_lea.vmem %s273, %s1152 [#allocation7]
        %v1154 = vld [vmem:[%s1153] sm:$0x1]
        %v1155 = vld [vmem:[%s1153 + $0x10] sm:$0x1]
        %v1156 = vld [vmem:[%s1153 + $0x20] sm:$0x1]
        %v1157 = vld [vmem:[%s1153 + $0x30] sm:$0x1]
        %v1158 = vld [vmem:[%s1153 + $0x40] sm:$0x1]
        %v1159 = vld [vmem:[%s1153 + $0x50] sm:$0x1]
        %v1160 = vld [vmem:[%s1153 + $0x60] sm:$0x1]
        %v1161 = vld [vmem:[%s1153 + $0x70] sm:$0x1]
        %s1162 = scalar_lea.vmem %s282, %s1152 [#allocation10]
        %v1163 = vld [vmem:[%s1162] sm:$0x1]
        %v1164 = vld [vmem:[%s1162 + $0x10] sm:$0x1]
        %v1165 = vld [vmem:[%s1162 + $0x20] sm:$0x1]
        %v1166 = vld [vmem:[%s1162 + $0x30] sm:$0x1]
        %v1167 = vld [vmem:[%s1162 + $0x40] sm:$0x1]
        %v1168 = vld [vmem:[%s1162 + $0x50] sm:$0x1]
        %v1169 = vld [vmem:[%s1162 + $0x60] sm:$0x1]
        %v1170 = vld [vmem:[%s1162 + $0x70] sm:$0x1]
        %v1171 = vadd.f32 %v1154, %v1163
        %v1172 = vadd.f32 %v1155, %v1164
        %v1173 = vadd.f32 %v1156, %v1165
        %v1174 = vadd.f32 %v1157, %v1166
        %v1175 = vadd.f32 %v1158, %v1167
        %v1176 = vadd.f32 %v1159, %v1168
        %v1177 = vadd.f32 %v1160, %v1169
        %v1178 = vadd.f32 %v1161, %v1170
        %v1179 = vld [vmem:[%s5] sm:$0xff]
        %v1180 = vld [vmem:[%s7] sm:$0xff]
        %1182 = vset.pattern.permute.xlu0 0
        %1183 = vperm.xlu0 %1182, %v1180
        %v1184 = vpop.permute.xlu0 %1183
        %v1194 = vrot.slane %v1172, 7
        %v1195 = vsel %vm358, %v1194, %v1171
        %v1196 = vrot.slane %v1173, 6
        %v1197 = vsel %vm361, %v1196, %v1195
        %v1198 = vrot.slane %v1174, 5
        %v1199 = vsel %vm364, %v1198, %v1197
        %v1200 = vrot.slane %v1175, 4
        %v1201 = vsel %vm367, %v1200, %v1199
        %v1202 = vrot.slane %v1176, 3
        %v1203 = vsel %vm370, %v1202, %v1201
        %v1204 = vrot.slane %v1177, 2
        %v1205 = vsel %vm373, %v1204, %v1203
        %v1206 = vrot.slane %v1178, 1
        %v1207 = vsel %vm376, %v1206, %v1205
        %v1210 = vsel %vm379, %v1179, 0
        %1212 = vmatprep.subr.mxu0 0.0
        %1213 = vmatpush1.msra.mxu0 %v1207
        %1214 = vmatprep.subr.mxu0 0.0
        %1215 = vmatpush1.msra.mxu0 0.0
        %1216 = vmatprep.subr.mxu0 0.0
        %1217 = vmatpush1.msra.mxu0 0.0
        %1218 = vmatprep.subr.mxu0 0.0
        %1219 = vmatpush1.msra.mxu0 0.0
        %1220 = vmatprep.subr.mxu0 0.0
        %1221 = vmatpush1.msra.mxu0 0.0
        %1222 = vmatprep.subr.mxu0 0.0
        %1223 = vmatpush1.msra.mxu0 0.0
        %1224 = vmatprep.subr.mxu0 0.0
        %1225 = vmatpush1.msra.mxu0 0.0
        %1226 = vmatprep.subr.mxu0 0.0
        %1227 = vmatpush1.msra.mxu0 0.0
        %1228 = vmatprep.subr.mxu0 0.0
        %1229 = vmatpush1.msra.mxu0 0.0
        %1230 = vmatprep.subr.mxu0 0.0
        %1231 = vmatpush1.msra.mxu0 0.0
        %1232 = vmatprep.subr.mxu0 0.0
        %1233 = vmatpush1.msra.mxu0 0.0
        %1234 = vmatprep.subr.mxu0 0.0
        %1235 = vmatpush1.msra.mxu0 0.0
        %1236 = vmatprep.subr.mxu0 0.0
        %1237 = vmatpush1.msra.mxu0 0.0
        %1238 = vmatprep.subr.mxu0 0.0
        %1239 = vmatpush1.msra.mxu0 0.0
        %1240 = vmatprep.subr.mxu0 0.0
        %1241 = vmatpush1.msra.mxu0 0.0
        %1242 = vmatprep.subr.mxu0 0.0
        %1243 = vmatpush1.msra.mxu0 0.0
        %1244 = vmatprep.subr.mxu0 0.0
        %1245 = vmatpush1.msra.mxu0 0.0
        %1246 = vmatprep.subr.mxu0 0.0
        %1247 = vmatpush1.msra.mxu0 0.0
        %1248 = vmatprep.subr.mxu0 0.0
        %1249 = vmatpush1.msra.mxu0 0.0
        %1250 = vmatprep.subr.mxu0 0.0
        %1251 = vmatpush1.msra.mxu0 0.0
        %1252 = vmatprep.subr.mxu0 0.0
        %1253 = vmatpush1.msra.mxu0 0.0
        %1254 = vmatprep.subr.mxu0 0.0
        %1255 = vmatpush1.msra.mxu0 0.0
        %1256 = vmatprep.subr.mxu0 0.0
        %1257 = vmatpush1.msra.mxu0 0.0
        %1258 = vmatprep.subr.mxu0 0.0
        %1259 = vmatpush1.msra.mxu0 0.0
        %1260 = vmatprep.subr.mxu0 0.0
        %1261 = vmatpush1.msra.mxu0 0.0
        %1262 = vmatprep.subr.mxu0 0.0
        %1263 = vmatpush1.msra.mxu0 0.0
        %1264 = vmatprep.subr.mxu0 0.0
        %1265 = vmatpush1.msra.mxu0 0.0
        %1266 = vmatprep.subr.mxu0 0.0
        %1267 = vmatpush1.msra.mxu0 0.0
        %1268 = vmatprep.subr.mxu0 0.0
        %1269 = vmatpush1.msra.mxu0 0.0
        %1270 = vmatprep.subr.mxu0 0.0
        %1271 = vmatpush1.msra.mxu0 0.0
        %1272 = vmatprep.subr.mxu0 0.0
        %1273 = vmatpush1.msra.mxu0 0.0
        %1274 = vmatprep.subr.mxu0 0.0
        %1275 = vmatpush1.msra.mxu0 0.0
        %1276 = vmatprep.mubr.f32.mxu0 0.0
        %1277 = vmatmul.mubr.f32.gmra.mrb[0].mxu0 %v1210
        %v1278 = vpop.f32.mrb[0].mxu0
        %v1279 = vadd.f32 %v1184, %v1278
        %v1280 = vpop.f32.mrb[0].mxu0
        %1281 = vdwg.mxu0
        %v1282 = vld [vmem:[%s6] sm:$0xff]
        %v1283 = vld [vmem:[%s6 + $0x8] sm:$0xff]
        %v1285 = vsel %vm455, %v1279, 0
        %1287 = vmatprep.subr.mxu0 0.0
        %1288 = vmatpush1.msra.mxu0 %v1282
        %1289 = vmatprep.subr.mxu0 0.0
        %1290 = vmatpush1.msra.mxu0 %v1283
        %1291 = vmatprep.subr.mxu0 0.0
        %1292 = vmatpush1.msra.mxu0 0.0
        %1293 = vmatprep.subr.mxu0 0.0
        %1294 = vmatpush1.msra.mxu0 0.0
        %1295 = vmatprep.subr.mxu0 0.0
        %1296 = vmatpush1.msra.mxu0 0.0
        %1297 = vmatprep.subr.mxu0 0.0
        %1298 = vmatpush1.msra.mxu0 0.0
        %1299 = vmatprep.subr.mxu0 0.0
        %1300 = vmatpush1.msra.mxu0 0.0
        %1301 = vmatprep.subr.mxu0 0.0
        %1302 = vmatpush1.msra.mxu0 0.0
        %1303 = vmatprep.subr.mxu0 0.0
        %1304 = vmatpush1.msra.mxu0 0.0
        %1305 = vmatprep.subr.mxu0 0.0
        %1306 = vmatpush1.msra.mxu0 0.0
        %1307 = vmatprep.subr.mxu0 0.0
        %1308 = vmatpush1.msra.mxu0 0.0
        %1309 = vmatprep.subr.mxu0 0.0
        %1310 = vmatpush1.msra.mxu0 0.0
        %1311 = vmatprep.subr.mxu0 0.0
        %1312 = vmatpush1.msra.mxu0 0.0
        %1313 = vmatprep.subr.mxu0 0.0
        %1314 = vmatpush1.msra.mxu0 0.0
        %1315 = vmatprep.subr.mxu0 0.0
        %1316 = vmatpush1.msra.mxu0 0.0
        %1317 = vmatprep.subr.mxu0 0.0
        %1318 = vmatpush1.msra.mxu0 0.0
        %1319 = vmatprep.subr.mxu0 0.0
        %1320 = vmatpush1.msra.mxu0 0.0
        %1321 = vmatprep.subr.mxu0 0.0
        %1322 = vmatpush1.msra.mxu0 0.0
        %1323 = vmatprep.subr.mxu0 0.0
        %1324 = vmatpush1.msra.mxu0 0.0
        %1325 = vmatprep.subr.mxu0 0.0
        %1326 = vmatpush1.msra.mxu0 0.0
        %1327 = vmatprep.subr.mxu0 0.0
        %1328 = vmatpush1.msra.mxu0 0.0
        %1329 = vmatprep.subr.mxu0 0.0
        %1330 = vmatpush1.msra.mxu0 0.0
        %1331 = vmatprep.subr.mxu0 0.0
        %1332 = vmatpush1.msra.mxu0 0.0
        %1333 = vmatprep.subr.mxu0 0.0
        %1334 = vmatpush1.msra.mxu0 0.0
        %1335 = vmatprep.subr.mxu0 0.0
        %1336 = vmatpush1.msra.mxu0 0.0
        %1337 = vmatprep.subr.mxu0 0.0
        %1338 = vmatpush1.msra.mxu0 0.0
        %1339 = vmatprep.subr.mxu0 0.0
        %1340 = vmatpush1.msra.mxu0 0.0
        %1341 = vmatprep.subr.mxu0 0.0
        %1342 = vmatpush1.msra.mxu0 0.0
        %1343 = vmatprep.subr.mxu0 0.0
        %1344 = vmatpush1.msra.mxu0 0.0
        %1345 = vmatprep.subr.mxu0 0.0
        %1346 = vmatpush1.msra.mxu0 0.0
        %1347 = vmatprep.subr.mxu0 0.0
        %1348 = vmatpush1.msra.mxu0 0.0
        %1349 = vmatprep.subr.mxu0 0.0
        %1350 = vmatpush1.msra.mxu0 0.0
        %1351 = vmatprep.mubr.f32.mxu0 0.0
        %1352 = vmatmul.mubr.f32.gmra.mrb[0].mxu0 %v1285
        %v1353 = vpop.f32.mrb[0].mxu0
        %v1354 = vadd.f32 0.0, %v1353
        %v1355 = vpop.f32.mrb[0].mxu0
        %1356 = vdwg.mxu0
        %s1357 = scalar_lea.vmem [#allocation2], 32
        %1358 = vst.msk [vmem:[%s1357] sm:$0xff] %vm529, %v1354
        %s1359 = sadd.s32 %s315, 5
        %s1360 = scalar_lea.vmem %s273, %s1359 [#allocation7]
        %v1361 = vld [vmem:[%s1360] sm:$0x1]
        %v1362 = vld [vmem:[%s1360 + $0x10] sm:$0x1]
        %v1363 = vld [vmem:[%s1360 + $0x20] sm:$0x1]
        %v1364 = vld [vmem:[%s1360 + $0x30] sm:$0x1]
        %v1365 = vld [vmem:[%s1360 + $0x40] sm:$0x1]
        %v1366 = vld [vmem:[%s1360 + $0x50] sm:$0x1]
        %v1367 = vld [vmem:[%s1360 + $0x60] sm:$0x1]
        %v1368 = vld [vmem:[%s1360 + $0x70] sm:$0x1]
        %s1369 = scalar_lea.vmem %s282, %s1359 [#allocation10]
        %v1370 = vld [vmem:[%s1369] sm:$0x1]
        %v1371 = vld [vmem:[%s1369 + $0x10] sm:$0x1]
        %v1372 = vld [vmem:[%s1369 + $0x20] sm:$0x1]
        %v1373 = vld [vmem:[%s1369 + $0x30] sm:$0x1]
        %v1374 = vld [vmem:[%s1369 + $0x40] sm:$0x1]
        %v1375 = vld [vmem:[%s1369 + $0x50] sm:$0x1]
        %v1376 = vld [vmem:[%s1369 + $0x60] sm:$0x1]
        %v1377 = vld [vmem:[%s1369 + $0x70] sm:$0x1]
        %v1378 = vadd.f32 %v1361, %v1370
        %v1379 = vadd.f32 %v1362, %v1371
        %v1380 = vadd.f32 %v1363, %v1372
        %v1381 = vadd.f32 %v1364, %v1373
        %v1382 = vadd.f32 %v1365, %v1374
        %v1383 = vadd.f32 %v1366, %v1375
        %v1384 = vadd.f32 %v1367, %v1376
        %v1385 = vadd.f32 %v1368, %v1377
        %v1386 = vld [vmem:[%s5] sm:$0xff]
        %v1387 = vld [vmem:[%s7] sm:$0xff]
        %1389 = vset.pattern.permute.xlu0 0
        %1390 = vperm.xlu0 %1389, %v1387
        %v1391 = vpop.permute.xlu0 %1390
        %v1401 = vrot.slane %v1379, 7
        %v1402 = vsel %vm358, %v1401, %v1378
        %v1403 = vrot.slane %v1380, 6
        %v1404 = vsel %vm361, %v1403, %v1402
        %v1405 = vrot.slane %v1381, 5
        %v1406 = vsel %vm364, %v1405, %v1404
        %v1407 = vrot.slane %v1382, 4
        %v1408 = vsel %vm367, %v1407, %v1406
        %v1409 = vrot.slane %v1383, 3
        %v1410 = vsel %vm370, %v1409, %v1408
        %v1411 = vrot.slane %v1384, 2
        %v1412 = vsel %vm373, %v1411, %v1410
        %v1413 = vrot.slane %v1385, 1
        %v1414 = vsel %vm376, %v1413, %v1412
        %v1417 = vsel %vm379, %v1386, 0
        %1419 = vmatprep.subr.mxu0 0.0
        %1420 = vmatpush1.msra.mxu0 %v1414
        %1421 = vmatprep.subr.mxu0 0.0
        %1422 = vmatpush1.msra.mxu0 0.0
        %1423 = vmatprep.subr.mxu0 0.0
        %1424 = vmatpush1.msra.mxu0 0.0
        %1425 = vmatprep.subr.mxu0 0.0
        %1426 = vmatpush1.msra.mxu0 0.0
        %1427 = vmatprep.subr.mxu0 0.0
        %1428 = vmatpush1.msra.mxu0 0.0
        %1429 = vmatprep.subr.mxu0 0.0
        %1430 = vmatpush1.msra.mxu0 0.0
        %1431 = vmatprep.subr.mxu0 0.0
        %1432 = vmatpush1.msra.mxu0 0.0
        %1433 = vmatprep.subr.mxu0 0.0
        %1434 = vmatpush1.msra.mxu0 0.0
        %1435 = vmatprep.subr.mxu0 0.0
        %1436 = vmatpush1.msra.mxu0 0.0
        %1437 = vmatprep.subr.mxu0 0.0
        %1438 = vmatpush1.msra.mxu0 0.0
        %1439 = vmatprep.subr.mxu0 0.0
        %1440 = vmatpush1.msra.mxu0 0.0
        %1441 = vmatprep.subr.mxu0 0.0
        %1442 = vmatpush1.msra.mxu0 0.0
        %1443 = vmatprep.subr.mxu0 0.0
        %1444 = vmatpush1.msra.mxu0 0.0
        %1445 = vmatprep.subr.mxu0 0.0
        %1446 = vmatpush1.msra.mxu0 0.0
        %1447 = vmatprep.subr.mxu0 0.0
        %1448 = vmatpush1.msra.mxu0 0.0
        %1449 = vmatprep.subr.mxu0 0.0
        %1450 = vmatpush1.msra.mxu0 0.0
        %1451 = vmatprep.subr.mxu0 0.0
        %1452 = vmatpush1.msra.mxu0 0.0
        %1453 = vmatprep.subr.mxu0 0.0
        %1454 = vmatpush1.msra.mxu0 0.0
        %1455 = vmatprep.subr.mxu0 0.0
        %1456 = vmatpush1.msra.mxu0 0.0
        %1457 = vmatprep.subr.mxu0 0.0
        %1458 = vmatpush1.msra.mxu0 0.0
        %1459 = vmatprep.subr.mxu0 0.0
        %1460 = vmatpush1.msra.mxu0 0.0
        %1461 = vmatprep.subr.mxu0 0.0
        %1462 = vmatpush1.msra.mxu0 0.0
        %1463 = vmatprep.subr.mxu0 0.0
        %1464 = vmatpush1.msra.mxu0 0.0
        %1465 = vmatprep.subr.mxu0 0.0
        %1466 = vmatpush1.msra.mxu0 0.0
        %1467 = vmatprep.subr.mxu0 0.0
        %1468 = vmatpush1.msra.mxu0 0.0
        %1469 = vmatprep.subr.mxu0 0.0
        %1470 = vmatpush1.msra.mxu0 0.0
        %1471 = vmatprep.subr.mxu0 0.0
        %1472 = vmatpush1.msra.mxu0 0.0
        %1473 = vmatprep.subr.mxu0 0.0
        %1474 = vmatpush1.msra.mxu0 0.0
        %1475 = vmatprep.subr.mxu0 0.0
        %1476 = vmatpush1.msra.mxu0 0.0
        %1477 = vmatprep.subr.mxu0 0.0
        %1478 = vmatpush1.msra.mxu0 0.0
        %1479 = vmatprep.subr.mxu0 0.0
        %1480 = vmatpush1.msra.mxu0 0.0
        %1481 = vmatprep.subr.mxu0 0.0
        %1482 = vmatpush1.msra.mxu0 0.0
        %1483 = vmatprep.mubr.f32.mxu0 0.0
        %1484 = vmatmul.mubr.f32.gmra.mrb[0].mxu0 %v1417
        %v1485 = vpop.f32.mrb[0].mxu0
        %v1486 = vadd.f32 %v1391, %v1485
        %v1487 = vpop.f32.mrb[0].mxu0
        %1488 = vdwg.mxu0
        %v1489 = vld [vmem:[%s6] sm:$0xff]
        %v1490 = vld [vmem:[%s6 + $0x8] sm:$0xff]
        %v1492 = vsel %vm455, %v1486, 0
        %1494 = vmatprep.subr.mxu0 0.0
        %1495 = vmatpush1.msra.mxu0 %v1489
        %1496 = vmatprep.subr.mxu0 0.0
        %1497 = vmatpush1.msra.mxu0 %v1490
        %1498 = vmatprep.subr.mxu0 0.0
        %1499 = vmatpush1.msra.mxu0 0.0
        %1500 = vmatprep.subr.mxu0 0.0
        %1501 = vmatpush1.msra.mxu0 0.0
        %1502 = vmatprep.subr.mxu0 0.0
        %1503 = vmatpush1.msra.mxu0 0.0
        %1504 = vmatprep.subr.mxu0 0.0
        %1505 = vmatpush1.msra.mxu0 0.0
        %1506 = vmatprep.subr.mxu0 0.0
        %1507 = vmatpush1.msra.mxu0 0.0
        %1508 = vmatprep.subr.mxu0 0.0
        %1509 = vmatpush1.msra.mxu0 0.0
        %1510 = vmatprep.subr.mxu0 0.0
        %1511 = vmatpush1.msra.mxu0 0.0
        %1512 = vmatprep.subr.mxu0 0.0
        %1513 = vmatpush1.msra.mxu0 0.0
        %1514 = vmatprep.subr.mxu0 0.0
        %1515 = vmatpush1.msra.mxu0 0.0
        %1516 = vmatprep.subr.mxu0 0.0
        %1517 = vmatpush1.msra.mxu0 0.0
        %1518 = vmatprep.subr.mxu0 0.0
        %1519 = vmatpush1.msra.mxu0 0.0
        %1520 = vmatprep.subr.mxu0 0.0
        %1521 = vmatpush1.msra.mxu0 0.0
        %1522 = vmatprep.subr.mxu0 0.0
        %1523 = vmatpush1.msra.mxu0 0.0
        %1524 = vmatprep.subr.mxu0 0.0
        %1525 = vmatpush1.msra.mxu0 0.0
        %1526 = vmatprep.subr.mxu0 0.0
        %1527 = vmatpush1.msra.mxu0 0.0
        %1528 = vmatprep.subr.mxu0 0.0
        %1529 = vmatpush1.msra.mxu0 0.0
        %1530 = vmatprep.subr.mxu0 0.0
        %1531 = vmatpush1.msra.mxu0 0.0
        %1532 = vmatprep.subr.mxu0 0.0
        %1533 = vmatpush1.msra.mxu0 0.0
        %1534 = vmatprep.subr.mxu0 0.0
        %1535 = vmatpush1.msra.mxu0 0.0
        %1536 = vmatprep.subr.mxu0 0.0
        %1537 = vmatpush1.msra.mxu0 0.0
        %1538 = vmatprep.subr.mxu0 0.0
        %1539 = vmatpush1.msra.mxu0 0.0
        %1540 = vmatprep.subr.mxu0 0.0
        %1541 = vmatpush1.msra.mxu0 0.0
        %1542 = vmatprep.subr.mxu0 0.0
        %1543 = vmatpush1.msra.mxu0 0.0
        %1544 = vmatprep.subr.mxu0 0.0
        %1545 = vmatpush1.msra.mxu0 0.0
        %1546 = vmatprep.subr.mxu0 0.0
        %1547 = vmatpush1.msra.mxu0 0.0
        %1548 = vmatprep.subr.mxu0 0.0
        %1549 = vmatpush1.msra.mxu0 0.0
        %1550 = vmatprep.subr.mxu0 0.0
        %1551 = vmatpush1.msra.mxu0 0.0
        %1552 = vmatprep.subr.mxu0 0.0
        %1553 = vmatpush1.msra.mxu0 0.0
        %1554 = vmatprep.subr.mxu0 0.0
        %1555 = vmatpush1.msra.mxu0 0.0
        %1556 = vmatprep.subr.mxu0 0.0
        %1557 = vmatpush1.msra.mxu0 0.0
        %1558 = vmatprep.mubr.f32.mxu0 0.0
        %1559 = vmatmul.mubr.f32.gmra.mrb[0].mxu0 %v1492
        %v1560 = vpop.f32.mrb[0].mxu0
        %v1561 = vadd.f32 0.0, %v1560
        %v1562 = vpop.f32.mrb[0].mxu0
        %1563 = vdwg.mxu0
        %s1564 = scalar_lea.vmem [#allocation2], 40
        %1565 = vst.msk [vmem:[%s1564] sm:$0xff] %vm529, %v1561
        %s1566 = smul.u32 %s47, 8
        %s1567 = sld [smem:[#allocation5 + %s1566]]
        %s1568 = sld [smem:[#allocation6 + %s1566]]
        %s1569 = ssub.f32 1.0, %s1568
        %s1570 = smul.u32 %s1567, 8
        %s1571 = scalar_lea.vmem [#allocation2], %s1570
        %v1572 = vld [vmem:[%s1571] sm:$0xff]
        %v1573 = vstv %s1569
        %v1574 = vmul.f32 %v1573, %v1572
        %s1575 = sadd.s32 %s1567, 1
        %s1576 = smul.u32 %s1575, 8
        %s1577 = scalar_lea.vmem [#allocation2], %s1576
        %v1578 = vld [vmem:[%s1577] sm:$0xff]
        %v1579 = vstv %s1568
        %v1580 = vmul.f32 %v1579, %v1578
        %v1581 = vadd.f32 %v1574, %v1580
        %1582 = vst.msk [vmem:[%s313] sm:$0xff] %vm529, %v1581
        %s1583 = sadd.s32 %s1566, 1
        %s1584 = sld [smem:[#allocation5 + %s1583]]
        %s1585 = sld [smem:[#allocation6 + %s1583]]
        %s1586 = ssub.f32 1.0, %s1585
        %s1587 = smul.u32 %s1584, 8
        %s1588 = scalar_lea.vmem [#allocation2], %s1587
        %v1589 = vld [vmem:[%s1588] sm:$0xff]
        %v1590 = vstv %s1586
        %v1591 = vmul.f32 %v1590, %v1589
        %s1592 = sadd.s32 %s1584, 1
        %s1593 = smul.u32 %s1592, 8
        %s1594 = scalar_lea.vmem [#allocation2], %s1593
        %v1595 = vld [vmem:[%s1594] sm:$0xff]
        %v1596 = vstv %s1585
        %v1597 = vmul.f32 %v1596, %v1595
        %v1598 = vadd.f32 %v1591, %v1597
        %1600 = vrot.lane.b32.xlu0 %v1598, 32
        %v1601 = vpop.permute.xlu0 %1600
        %vm1603 = vcmask 523520
        %1604 = vst.msk [vmem:[%s313] sm:$0xff] %vm1603, %v1601
        %s1605 = sadd.s32 %s1566, 2
        %s1606 = sld [smem:[#allocation5 + %s1605]]
        %s1607 = sld [smem:[#allocation6 + %s1605]]
        %s1608 = ssub.f32 1.0, %s1607
        %s1609 = smul.u32 %s1606, 8
        %s1610 = scalar_lea.vmem [#allocation2], %s1609
        %v1611 = vld [vmem:[%s1610] sm:$0xff]
        %v1612 = vstv %s1608
        %v1613 = vmul.f32 %v1612, %v1611
        %s1614 = sadd.s32 %s1606, 1
        %s1615 = smul.u32 %s1614, 8
        %s1616 = scalar_lea.vmem [#allocation2], %s1615
        %v1617 = vld [vmem:[%s1616] sm:$0xff]
        %v1618 = vstv %s1607
        %v1619 = vmul.f32 %v1618, %v1617
        %v1620 = vadd.f32 %v1613, %v1619
        %1622 = vrot.lane.b32.xlu0 %v1620, 64
        %v1623 = vpop.permute.xlu0 %1622
        %vm1625 = vcmask 785920
        %1626 = vst.msk [vmem:[%s313] sm:$0xff] %vm1625, %v1623
        %s1627 = sadd.s32 %s1566, 3
        %s1628 = sld [smem:[#allocation5 + %s1627]]
        %s1629 = sld [smem:[#allocation6 + %s1627]]
        %s1630 = ssub.f32 1.0, %s1629
        %s1631 = smul.u32 %s1628, 8
        %s1632 = scalar_lea.vmem [#allocation2], %s1631
        %v1633 = vld [vmem:[%s1632] sm:$0xff]
        %v1634 = vstv %s1630
        %v1635 = vmul.f32 %v1634, %v1633
        %s1636 = sadd.s32 %s1628, 1
        %s1637 = smul.u32 %s1636, 8
        %s1638 = scalar_lea.vmem [#allocation2], %s1637
        %v1639 = vld [vmem:[%s1638] sm:$0xff]
        %v1640 = vstv %s1629
        %v1641 = vmul.f32 %v1640, %v1639
        %v1642 = vadd.f32 %v1635, %v1641
        %1644 = vrot.lane.b32.xlu0 %v1642, 96
        %v1645 = vpop.permute.xlu0 %1644
        %vm1647 = vcmask 1048320
        %1648 = vst.msk [vmem:[%s313] sm:$0xff] %vm1647, %v1645
        %s1649 = sadd.s32 %s1566, 4
        %s1650 = sld [smem:[#allocation5 + %s1649]]
        %s1651 = sld [smem:[#allocation6 + %s1649]]
        %s1652 = ssub.f32 1.0, %s1651
        %s1653 = smul.u32 %s1650, 8
        %s1654 = scalar_lea.vmem [#allocation2], %s1653
        %v1655 = vld [vmem:[%s1654] sm:$0xff]
        %v1656 = vstv %s1652
        %v1657 = vmul.f32 %v1656, %v1655
        %s1658 = sadd.s32 %s1650, 1
        %s1659 = smul.u32 %s1658, 8
        %s1660 = scalar_lea.vmem [#allocation2], %s1659
        %v1661 = vld [vmem:[%s1660] sm:$0xff]
        %v1662 = vstv %s1651
        %v1663 = vmul.f32 %v1662, %v1661
        %v1664 = vadd.f32 %v1657, %v1663
        %1665 = vst.msk [vmem:[%s313 + $0x8] sm:$0xff] %vm529, %v1664
        %s1666 = sadd.s32 %s1566, 5
        %s1667 = sld [smem:[#allocation5 + %s1666]]
        %s1668 = sld [smem:[#allocation6 + %s1666]]
        %s1669 = ssub.f32 1.0, %s1668
        %s1670 = smul.u32 %s1667, 8
        %s1671 = scalar_lea.vmem [#allocation2], %s1670
        %v1672 = vld [vmem:[%s1671] sm:$0xff]
        %v1673 = vstv %s1669
        %v1674 = vmul.f32 %v1673, %v1672
        %s1675 = sadd.s32 %s1667, 1
        %s1676 = smul.u32 %s1675, 8
        %s1677 = scalar_lea.vmem [#allocation2], %s1676
        %v1678 = vld [vmem:[%s1677] sm:$0xff]
        %v1679 = vstv %s1668
        %v1680 = vmul.f32 %v1679, %v1678
        %v1681 = vadd.f32 %v1674, %v1680
        %1683 = vrot.lane.b32.xlu0 %v1681, 32
        %v1684 = vpop.permute.xlu0 %1683
        %1686 = vst.msk [vmem:[%s313 + $0x8] sm:$0xff] %vm1603, %v1684
        %s1687 = sadd.s32 %s1566, 6
        %s1688 = sld [smem:[#allocation5 + %s1687]]
        %s1689 = sld [smem:[#allocation6 + %s1687]]
        %s1690 = ssub.f32 1.0, %s1689
        %s1691 = smul.u32 %s1688, 8
        %s1692 = scalar_lea.vmem [#allocation2], %s1691
        %v1693 = vld [vmem:[%s1692] sm:$0xff]
        %v1694 = vstv %s1690
        %v1695 = vmul.f32 %v1694, %v1693
        %s1696 = sadd.s32 %s1688, 1
        %s1697 = smul.u32 %s1696, 8
        %s1698 = scalar_lea.vmem [#allocation2], %s1697
        %v1699 = vld [vmem:[%s1698] sm:$0xff]
        %v1700 = vstv %s1689
        %v1701 = vmul.f32 %v1700, %v1699
        %v1702 = vadd.f32 %v1695, %v1701
        %1704 = vrot.lane.b32.xlu0 %v1702, 64
        %v1705 = vpop.permute.xlu0 %1704
        %1707 = vst.msk [vmem:[%s313 + $0x8] sm:$0xff] %vm1625, %v1705
        %s1708 = sadd.s32 %s1566, 7
        %s1709 = sld [smem:[#allocation5 + %s1708]]
        %s1710 = sld [smem:[#allocation6 + %s1708]]
        %s1711 = ssub.f32 1.0, %s1710
        %s1712 = smul.u32 %s1709, 8
        %s1713 = scalar_lea.vmem [#allocation2], %s1712
        %v1714 = vld [vmem:[%s1713] sm:$0xff]
        %v1715 = vstv %s1711
        %v1716 = vmul.f32 %v1715, %v1714
        %s1717 = sadd.s32 %s1709, 1
        %s1718 = smul.u32 %s1717, 8
        %s1719 = scalar_lea.vmem [#allocation2], %s1718
        %v1720 = vld [vmem:[%s1719] sm:$0xff]
        %v1721 = vstv %s1710
        %v1722 = vmul.f32 %v1721, %v1720
        %v1723 = vadd.f32 %v1716, %v1722
        %1725 = vrot.lane.b32.xlu0 %v1723, 96
        %v1726 = vpop.permute.xlu0 %1725
        %1728 = vst.msk [vmem:[%s313 + $0x8] sm:$0xff] %vm1647, %v1726
        %s1729 = sand.u32 %s179, 1
        %s1730 = scalar_lea.sflag [#allocation9], %s1729
        %s1731 = sand.u32 %s179, 1
        %s1732 = smul.addr %s1731, 16
        %s1733 = scalar_lea.vmem [#allocation12], %s1732
        // Predicated region
        $region49: #{tpu_custom_call.1} parent=39 // pred_check
          %p1734 = pneg %p189
        $region50: #{tpu_custom_call.1} parent=39 // pred_check_branch
          %1736 = sbr.rel (%p1734) target = $region52
        $region51: #{tpu_custom_call.1} parent=39 // pred_region
          %s1737 = smul.u32 2, %s47
          %s1739 = ssub.s32 256, 256
          %1740 = vsyncadd %s1730, %s1739
          %s1741 = smul.addr %s46, 8
          %s1742 = sadd.s32 %s1737, %s1741
          %s1743 = smul.addr %s1742, 128
          %s1744 = scalar_lea.hbm %s8, %s1743
          %s1746 = sshll.u32 %s1733, 4
          %s1747 = int_to_ptr.vmem [resolvable:$true] %s1746
          %1749 = dma.vmem_to_hbm [thread:$0]  %s1747, 256, %s1744, %s1730
        $region52: #{tpu_custom_call.1} parent=39 // pred_fallthru
          _
      $region40: #{tpu_custom_call.1} parent=5 // pred_fallthru
        _
      %p1750 = scmp.le.s32.totalorder 2, %s37
      // Predicated region
      $region53: #{tpu_custom_call.1} parent=5 // pred_check
        %p1751 = pneg %p1750
      $region54: #{tpu_custom_call.1} parent=5 // pred_check_branch
        %1753 = sbr.rel (%p1751) target = $region56
      $region55: #{tpu_custom_call.1} parent=5 // pred_region
        %s1754 = ssub.s32 %s37, 2
        // Predicated region
        $region57: #{tpu_custom_call.1} parent=55 // pred_check
          %p1755 = pneg %p195
        $region58: #{tpu_custom_call.1} parent=55 // pred_check_branch
          %1757 = sbr.rel (%p1755) target = $region60
        $region59: #{tpu_custom_call.1} parent=55 // pred_region
          %s1758 = sand.u32 %s180, 1
          %s1759 = scalar_lea.sflag [#allocation9], %s1758
          %s1760 = sand.u32 %s180, 1
          %s1761 = smul.addr %s1760, 16
          %s1762 = scalar_lea.vmem [#allocation12], %s1761
          %1763 = dma.done %s1759, 256
        $region60: #{tpu_custom_call.1} parent=55 // pred_fallthru
          _
      $region56: #{tpu_custom_call.1} parent=5 // pred_fallthru
        _
    $region6: #{tpu_custom_call.1} parent=1 // loop_footer
      %s41 = sadd.s32 1, %s37
    $region7: #{tpu_custom_call.1} parent=1 // loop_footer_branch
      %36 = sbr.rel target = $region3
    $region8: #{tpu_custom_call.1} parent=1 // loop_exit
      _
    %1764 = vsyncpa [#allocation8], 1
    %s1765 = scalar_lea.sflag [#allocation8], 1
    %1766 = vsyncpa %s1765, 1
    %1767 = vsyncpa [#allocation11], 1
    %s1768 = scalar_lea.sflag [#allocation11], 1
    %1769 = vsyncpa %s1768, 1
    %1770 = vsyncpa [#allocation9], 1
    %s1771 = scalar_lea.sflag [#allocation9], 1
    %1772 = vsyncpa %s1771, 1

// kernel: tpu_custom_call.1
$region0: #{tpu_custom_call.1}
  #allocation0 [shape = 'u32[]', space=smem, size = 0x4, offset = 0x4, fixed_abs, tag = 'smem constant byte address 0x4 - core index']
  #allocation1 [shape = 'u32[144,128]{1,0:T(1,128)}', space=vmem, size = 0x12000, scoped, tag = 'internal scratch']
  #allocation2 [shape = 'f32[6,8,32]{2,1,0:T(8,128)}', space=vmem, size = 0x6000, scoped, tag = 'scratch operand']
  #allocation3 [shape = 's32[1]{0}', space=sflag, size = 0x4, scoped, tag = 'scoped memory for tpu_custom_call.1']
  #allocation4 [shape = 'u8[512]{0}', space=smem, size = 0x200, scoped, tag = 'prefetched SMEM operand 0']
  #allocation5 [shape = 'u8[512]{0}', space=smem, size = 0x200, scoped, tag = 'prefetched SMEM operand 1']
  #allocation6 [shape = 'u8[512]{0}', space=smem, size = 0x200, scoped, tag = 'prefetched SMEM operand 2']
  %s0 = inlined_call_operand.vmem [shape: s32[4], index: 0, kind: input, shape index: {}]
  %s1 = inlined_call_operand.vmem [shape: s32[32], index: 1, kind: input, shape index: {}]
  %s2 = inlined_call_operand.vmem [shape: f32[32], index: 2, kind: input, shape index: {}]
  %s3 = inlined_call_operand.hbm [shape: f32[2,8,16,16], index: 3, kind: input, shape index: {}]
  %s4 = inlined_call_operand.hbm [shape: f32[2,8,16,16], index: 4, kind: input, shape index: {}]
  %s5 = inlined_call_operand.vmem [shape: f32[8,8], index: 5, kind: input, shape index: {}]
  %s6 = inlined_call_operand.vmem [shape: f32[16,32], index: 6, kind: input, shape index: {}]
  %s7 = inlined_call_operand.vmem [shape: f32[8,1], index: 7, kind: input, shape index: {}]
  %s8 = inlined_call_operand.hbm [shape: f32[2,8,1024], index: 8, kind: output, shape index: {}]
  %s9 = sld [smem:[#allocation0]]
  $region61: #{tpu_custom_call.1} parent=0
    _
  %s11 = ssub.s32 1, %s9
  %s12 = scalar_select 0, %s11, %s9
  %s13 = sshll.u32 %s0, 4
  %s14 = int_to_ptr.vmem [resolvable:$true] %s13
  %16 = dma.vmem_to_smem %s14, 16, [#allocation4], [#allocation3]
  %s17 = sshll.u32 %s1, 4
  %s18 = int_to_ptr.vmem [resolvable:$true] %s17
  %20 = dma.vmem_to_smem %s18, 16, [#allocation5], [#allocation3]
  %s21 = sshll.u32 %s2, 4
  %s22 = int_to_ptr.vmem [resolvable:$true] %s21
  %24 = dma.vmem_to_smem %s22, 16, [#allocation6], [#allocation3]
  %25 = dma.done [#allocation3], 48
  %26 = sfence
  $region1: #{tpu_custom_call.1} parent=0
    #allocation7 [shape = 'u8[131072]{0}', space=vmem, size = 0x20000, scoped, tag = 'input window, operand 3']
    #allocation8 [shape = 's32[2]{0}', space=sflag, size = 0x8, scoped, tag = 'scoped memory for tpu_custom_call.1']
    #allocation9 [shape = 's32[2]{0}', space=sflag, size = 0x8, scoped, tag = 'scoped memory for tpu_custom_call.1']
    #allocation10 [shape = 'u8[131072]{0}', space=vmem, size = 0x20000, scoped, tag = 'input window, operand 4']
    #allocation11 [shape = 's32[2]{0}', space=sflag, size = 0x8, scoped, tag = 'scoped memory for tpu_custom_call.1']
    #allocation12 [shape = 'u8[16384]{0}', space=vmem, size = 0x4000, scoped, tag = 'output window, operand 0']
    %27 = vsyncpa [#allocation8], 0
    %s28 = scalar_lea.sflag [#allocation8], 1
    %29 = vsyncpa %s28, 0
    %30 = vsyncpa [#allocation11], 0
    %s31 = scalar_lea.sflag [#allocation11], 1
    %32 = vsyncpa %s31, 0
    %33 = vsyncpa [#allocation9], 0
    %s34 = scalar_lea.sflag [#allocation9], 1
    %35 = vsyncpa %s34, 0
    loop: start=0, step=1, limit=10
    $region2: #{tpu_custom_call.1} parent=1 // loop_pre_header
      _
    $region3: #{tpu_custom_call.1} parent=1 // loop_header
      %s37 = sphi 0, %s41
      %p38 = scmp.ge.s32.totalorder %s37, 10
      %s44 = sphi 0, %s56
      %s45 = sphi 0, %s52
      %s46 = sphi 0, %s44
      %s47 = sphi 0, %s45
      %s48 = sphi 0, %s46
      %s49 = sphi 0, %s47
      %s59 = sphi 0, %s61
      %s62 = sphi 0, %s59
      %s63 = sphi 0, %s62
      %s79 = sphi 0, %s63
      %s85 = sphi 0, %s87
      %s88 = sphi 0, %s85
      %s89 = sphi 0, %s88
      %s105 = sphi 0, %s89
      %s109 = sphi 0, %s109
      %s111 = sphi 0, %s109
      %s112 = sphi 0, %s111
      %s126 = sphi 0, %s112
      %s130 = sphi 0, %s130
      %s132 = sphi 0, %s130
      %s133 = sphi 0, %s132
      %s147 = sphi 0, %s133
      %s151 = sphi 0, %s151
      %s153 = sphi 0, %s151
      %s154 = sphi 0, %s153
      %s168 = sphi 0, %s154
      %s176 = sphi 0, %s178
      %s179 = sphi 0, %s176
      %s180 = sphi 0, %s179
      %s196 = sphi 0, %s180
    $region4: #{tpu_custom_call.1} parent=1 // loop_header_branch
      %40 = sbr.rel (%p38) target = $region8
    $region5: #{tpu_custom_call.1} parent=1 // loop_body
      %s42 = ssub.s32 %s37, 1
      %s43 = ssub.s32 %s37, 2
      %s50 = sadd.s32 1, %s45
      %p51 = scmp.ge.s32.totalorder %s50, 4
      %s52 = scalar_select %p51, 0, %s50
      %s53 = sadd.s32 1, %s44
      %s54 = scalar_select %p51, %s53, %s44
      %p55 = scmp.ge.s32.totalorder %s54, 2
      %s56 = scalar_select %p55, 0, %s54
      %s57 = ssub.s32 %s44, %s56
      %p58 = scmp.eq.s32.totalorder %s57, 0
      %s60 = sadd.s32 %s59, 1
      %s61 = scalar_select %p58, %s59, %s60
      %p64 = pneg %p58
      %p65 = scmp.eq.s32.totalorder %s37, 7
      %p66 = por %p64, %p65
      %p67 = scmp.ne.s32.totalorder %s59, %s62
      %p68 = scmp.eq.s32.totalorder %s37, 0
      %p69 = por %p67, %p68
      %p70 = scmp.ne.s32.totalorder %s59, %s62
      %p71 = scmp.eq.s32.totalorder %s42, 7
      %p72 = por %p70, %p71
      %p73 = scmp.ne.s32.totalorder %s62, %s63
      %p74 = scmp.eq.s32.totalorder %s42, 0
      %p75 = por %p73, %p74
      %p76 = scmp.ne.s32.totalorder %s62, %s63
      %p77 = scmp.eq.s32.totalorder %s43, 7
      %p78 = por %p76, %p77
      %p80 = scmp.ne.s32.totalorder %s63, %s79
      %p81 = scmp.eq.s32.totalorder %s43, 0
      %p82 = por %p80, %p81
      %s83 = ssub.s32 %s44, %s56
      %p84 = scmp.eq.s32.totalorder %s83, 0
      %s86 = sadd.s32 %s85, 1
      %s87 = scalar_select %p84, %s85, %s86
      %p90 = pneg %p84
      %p91 = scmp.eq.s32.totalorder %s37, 7
      %p92 = por %p90, %p91
      %p93 = scmp.ne.s32.totalorder %s85, %s88
      %p94 = scmp.eq.s32.totalorder %s37, 0
      %p95 = por %p93, %p94
      %p96 = scmp.ne.s32.totalorder %s85, %s88
      %p97 = scmp.eq.s32.totalorder %s42, 7
      %p98 = por %p96, %p97
      %p99 = scmp.ne.s32.totalorder %s88, %s89
      %p100 = scmp.eq.s32.totalorder %s42, 0
      %p101 = por %p99, %p100
      %p102 = scmp.ne.s32.totalorder %s88, %s89
      %p103 = scmp.eq.s32.totalorder %s43, 7
      %p104 = por %p102, %p103
      %p106 = scmp.ne.s32.totalorder %s89, %s105
      %p107 = scmp.eq.s32.totalorder %s43, 0
      %p108 = por %p106, %p107
      %s110 = sadd.s32 %s109, 1
      %p113 = scmp.eq.s32.totalorder %s37, 7
      %p114 = scmp.ne.s32.totalorder %s109, %s111
      %p115 = scmp.eq.s32.totalorder %s37, 0
      %p116 = por %p114, %p115
      %p117 = scmp.ne.s32.totalorder %s109, %s111
      %p118 = scmp.eq.s32.totalorder %s42, 7
      %p119 = por %p117, %p118
      %p120 = scmp.ne.s32.totalorder %s111, %s112
      %p121 = scmp.eq.s32.totalorder %s42, 0
      %p122 = por %p120, %p121
      %p123 = scmp.ne.s32.totalorder %s111, %s112
      %p124 = scmp.eq.s32.totalorder %s43, 7
      %p125 = por %p123, %p124
      %p127 = scmp.ne.s32.totalorder %s112, %s126
      %p128 = scmp.eq.s32.totalorder %s43, 0
      %p129 = por %p127, %p128
      %s131 = sadd.s32 %s130, 1
      %p134 = scmp.eq.s32.totalorder %s37, 7
      %p135 = scmp.ne.s32.totalorder %s130, %s132
      %p136 = scmp.eq.s32.totalorder %s37, 0
      %p137 = por %p135, %p136
      %p138 = scmp.ne.s32.totalorder %s130, %s132
      %p139 = scmp.eq.s32.totalorder %s42, 7
      %p140 = por %p138, %p139
      %p141 = scmp.ne.s32.totalorder %s132, %s133
      %p142 = scmp.eq.s32.totalorder %s42, 0
      %p143 = por %p141, %p142
      %p144 = scmp.ne.s32.totalorder %s132, %s133
      %p145 = scmp.eq.s32.totalorder %s43, 7
      %p146 = por %p144, %p145
      %p148 = scmp.ne.s32.totalorder %s133, %s147
      %p149 = scmp.eq.s32.totalorder %s43, 0
      %p150 = por %p148, %p149
      %s152 = sadd.s32 %s151, 1
      %p155 = scmp.eq.s32.totalorder %s37, 7
      %p156 = scmp.ne.s32.totalorder %s151, %s153
      %p157 = scmp.eq.s32.totalorder %s37, 0
      %p158 = por %p156, %p157
      %p159 = scmp.ne.s32.totalorder %s151, %s153
      %p160 = scmp.eq.s32.totalorder %s42, 7
      %p161 = por %p159, %p160
      %p162 = scmp.ne.s32.totalorder %s153, %s154
      %p163 = scmp.eq.s32.totalorder %s42, 0
      %p164 = por %p162, %p163
      %p165 = scmp.ne.s32.totalorder %s153, %s154
      %p166 = scmp.eq.s32.totalorder %s43, 7
      %p167 = por %p165, %p166
      %p169 = scmp.ne.s32.totalorder %s154, %s168
      %p170 = scmp.eq.s32.totalorder %s43, 0
      %p171 = por %p169, %p170
      %s172 = ssub.s32 %s44, %s56
      %s173 = ssub.s32 %s45, %s52
      %s174 = sor.u32 %s172, %s173
      %p175 = scmp.eq.s32.totalorder %s174, 0
      %s177 = sadd.s32 %s176, 1
      %s178 = scalar_select %p175, %s176, %s177
      %p181 = pneg %p175
      %p182 = scmp.eq.s32.totalorder %s37, 7
      %p183 = por %p181, %p182
      %p184 = scmp.ne.s32.totalorder %s176, %s179
      %p185 = scmp.eq.s32.totalorder %s37, 0
      %p186 = por %p184, %p185
      %p187 = scmp.ne.s32.totalorder %s176, %s179
      %p188 = scmp.eq.s32.totalorder %s42, 7
      %p189 = por %p187, %p188
      %p190 = scmp.ne.s32.totalorder %s179, %s180
      %p191 = scmp.eq.s32.totalorder %s42, 0
      %p192 = por %p190, %p191
      %p193 = scmp.ne.s32.totalorder %s179, %s180
      %p194 = scmp.eq.s32.totalorder %s43, 7
      %p195 = por %p193, %p194
      %p197 = scmp.ne.s32.totalorder %s180, %s196
      %p198 = scmp.eq.s32.totalorder %s43, 0
      %p199 = por %p197, %p198
      %p200 = scmp.le.s32.totalorder 1, %s37
      %p201 = scmp.lt.s32.totalorder %s37, 9
      %p202 = pnand %p200, %p201
      %p203 = pneg %p202
      // Predicated region
      $region9: #{tpu_custom_call.1} parent=5 // pred_check
        _
      $region10: #{tpu_custom_call.1} parent=5 // pred_check_branch
        %205 = sbr.rel (%p202) target = $region12
      $region11: #{tpu_custom_call.1} parent=5 // pred_region
        %s206 = ssub.s32 %s37, 1
        // Predicated region
        $region13: #{tpu_custom_call.1} parent=11 // pred_check
          %p207 = pneg %p122
        $region14: #{tpu_custom_call.1} parent=11 // pred_check_branch
          %209 = sbr.rel (%p207) target = $region16
        $region15: #{tpu_custom_call.1} parent=11 // pred_region
          _
        $region16: #{tpu_custom_call.1} parent=11 // pred_fallthru
          _
        // Predicated region
        $region17: #{tpu_custom_call.1} parent=11 // pred_check
          %p210 = pneg %p143
        $region18: #{tpu_custom_call.1} parent=11 // pred_check_branch
          %212 = sbr.rel (%p210) target = $region20
        $region19: #{tpu_custom_call.1} parent=11 // pred_region
          _
        $region20: #{tpu_custom_call.1} parent=11 // pred_fallthru
          _
        // Predicated region
        $region21: #{tpu_custom_call.1} parent=11 // pred_check
          %p213 = pneg %p164
        $region22: #{tpu_custom_call.1} parent=11 // pred_check_branch
          %215 = sbr.rel (%p213) target = $region24
        $region23: #{tpu_custom_call.1} parent=11 // pred_region
          _
        $region24: #{tpu_custom_call.1} parent=11 // pred_fallthru
          _
      $region12: #{tpu_custom_call.1} parent=5 // pred_fallthru
        _
      %p216 = scmp.lt.s32.totalorder %s37, 8
      // Predicated region
      $region25: #{tpu_custom_call.1} parent=5 // pred_check
        %p217 = pneg %p216
      $region26: #{tpu_custom_call.1} parent=5 // pred_check_branch
        %219 = sbr.rel (%p217) target = $region28
      $region27: #{tpu_custom_call.1} parent=5 // pred_region
        // Predicated region
        $region29: #{tpu_custom_call.1} parent=27 // pred_check
          %p220 = pneg %p69
        $region30: #{tpu_custom_call.1} parent=27 // pred_check_branch
          %222 = sbr.rel (%p220) target = $region32
        $region31: #{tpu_custom_call.1} parent=27 // pred_region
          %s223 = sand.u32 %s59, 1
          %s224 = scalar_lea.sflag [#allocation8], %s223
          %s225 = sand.u32 %s59, 1
          %s226 = smul.addr %s225, 128
          %s227 = scalar_lea.vmem [#allocation7], %s226
          %s229 = ssub.s32 2048, 2048
          %230 = vsyncadd %s224, %s229
          %s231 = smul.addr %s44, 16
          %s232 = smul.addr %s231, 128
          %s233 = scalar_lea.hbm %s3, %s232
          %s234 = sshll.u32 %s227, 4
          %s235 = int_to_ptr.vmem [resolvable:$true] %s234
          %240 = dma.hbm_to_vmem [thread:$0]  %s233, 2048, %s235, %s224, 128, 128, 8
        $region32: #{tpu_custom_call.1} parent=27 // pred_fallthru
          _
        // Predicated region
        $region33: #{tpu_custom_call.1} parent=27 // pred_check
          %p241 = pneg %p95
        $region34: #{tpu_custom_call.1} parent=27 // pred_check_branch
          %243 = sbr.rel (%p241) target = $region36
        $region35: #{tpu_custom_call.1} parent=27 // pred_region
          %s244 = sand.u32 %s85, 1
          %s245 = scalar_lea.sflag [#allocation11], %s244
          %s246 = sand.u32 %s85, 1
          %s247 = smul.addr %s246, 128
          %s248 = scalar_lea.vmem [#allocation10], %s247
          %s250 = ssub.s32 2048, 2048
          %251 = vsyncadd %s245, %s250
          %s252 = smul.addr %s44, 16
          %s253 = smul.addr %s252, 128
          %s254 = scalar_lea.hbm %s4, %s253
          %s255 = sshll.u32 %s248, 4
          %s256 = int_to_ptr.vmem [resolvable:$true] %s255
          %261 = dma.hbm_to_vmem [thread:$0]  %s254, 2048, %s256, %s245, 128, 128, 8
        $region36: #{tpu_custom_call.1} parent=27 // pred_fallthru
          _
      $region28: #{tpu_custom_call.1} parent=5 // pred_fallthru
        _
      %p262 = scmp.le.s32.totalorder 1, %s37
      %p263 = scmp.lt.s32.totalorder %s37, 9
      %p264 = pnand %p262, %p263
      %p265 = pneg %p264
      // Predicated region
      $region37: #{tpu_custom_call.1} parent=5 // pred_check
        _
      $region38: #{tpu_custom_call.1} parent=5 // pred_check_branch
        %267 = sbr.rel (%p264) target = $region40
      $region39: #{tpu_custom_call.1} parent=5 // pred_region
        %s268 = ssub.s32 %s37, 1
        %s269 = sand.u32 %s62, 1
        %s270 = scalar_lea.sflag [#allocation8], %s269
        %s271 = sand.u32 %s62, 1
        %s272 = smul.addr %s271, 128
        %s273 = scalar_lea.vmem [#allocation7], %s272
        // Predicated region
        $region41: #{tpu_custom_call.1} parent=39 // pred_check
          %p274 = pneg %p75
        $region42: #{tpu_custom_call.1} parent=39 // pred_check_branch
          %276 = sbr.rel (%p274) target = $region44
        $region43: #{tpu_custom_call.1} parent=39 // pred_region
          %277 = dma.done %s270, 2048
        $region44: #{tpu_custom_call.1} parent=39 // pred_fallthru
          _
        %s278 = sand.u32 %s88, 1
        %s279 = scalar_lea.sflag [#allocation11], %s278
        %s280 = sand.u32 %s88, 1
        %s281 = smul.addr %s280, 128
        %s282 = scalar_lea.vmem [#allocation10], %s281
        // Predicated region
        $region45: #{tpu_custom_call.1} parent=39 // pred_check
          %p283 = pneg %p101
        $region46: #{tpu_custom_call.1} parent=39 // pred_check_branch
          %285 = sbr.rel (%p283) target = $region48
        $region47: #{tpu_custom_call.1} parent=39 // pred_region
          %286 = dma.done %s279, 2048
        $region48: #{tpu_custom_call.1} parent=39 // pred_fallthru
          _
        %s287 = sand.u32 %s62, 1
        %s288 = scalar_lea.sflag [#allocation8], %s287
        %s289 = sand.u32 %s62, 1
        %s290 = smul.addr %s289, 128
        %s291 = scalar_lea.vmem [#allocation7], %s290
        %p292 = pneg %p75
        %p293 = pneg %p72
        %s294 = sand.u32 %s88, 1
        %s295 = scalar_lea.sflag [#allocation11], %s294
        %s296 = sand.u32 %s88, 1
        %s297 = smul.addr %s296, 128
        %s298 = scalar_lea.vmem [#allocation10], %s297
        %p299 = pneg %p101
        %p300 = pneg %p98
        %p301 = pneg %p122
        %p302 = pneg %p119
        %p303 = pneg %p143
        %p304 = pneg %p140
        %p305 = pneg %p164
        %p306 = pneg %p161
        %p307 = pneg %p192
        %p308 = pneg %p189
        %s309 = sand.u32 %s179, 1
        %s310 = scalar_lea.sflag [#allocation9], %s309
        %s311 = sand.u32 %s179, 1
        %s312 = smul.addr %s311, 16
        %s313 = scalar_lea.vmem [#allocation12], %s312
        %s314 = smul.u32 2, %s47
        %s315 = sld [smem:[#allocation4 + %s47]]
        %s316 = scalar_lea.vmem %s273, %s315 [#allocation7]
        %v317 = vld [vmem:[%s316] sm:$0x1]
        %v318 = vld [vmem:[%s316 + $0x10] sm:$0x1]
        %v319 = vld [vmem:[%s316 + $0x20] sm:$0x1]
        %v320 = vld [vmem:[%s316 + $0x30] sm:$0x1]
        %v321 = vld [vmem:[%s316 + $0x40] sm:$0x1]
        %v322 = vld [vmem:[%s316 + $0x50] sm:$0x1]
        %v323 = vld [vmem:[%s316 + $0x60] sm:$0x1]
        %v324 = vld [vmem:[%s316 + $0x70] sm:$0x1]
        %s325 = scalar_lea.vmem %s282, %s315 [#allocation10]
        %v326 = vld [vmem:[%s325] sm:$0x1]
        %v327 = vld [vmem:[%s325 + $0x10] sm:$0x1]
        %v328 = vld [vmem:[%s325 + $0x20] sm:$0x1]
        %v329 = vld [vmem:[%s325 + $0x30] sm:$0x1]
        %v330 = vld [vmem:[%s325 + $0x40] sm:$0x1]
        %v331 = vld [vmem:[%s325 + $0x50] sm:$0x1]
        %v332 = vld [vmem:[%s325 + $0x60] sm:$0x1]
        %v333 = vld [vmem:[%s325 + $0x70] sm:$0x1]
        %v334 = vadd.f32 %v317, %v326
        %v335 = vadd.f32 %v318, %v327
        %v336 = vadd.f32 %v319, %v328
        %v337 = vadd.f32 %v320, %v329
        %v338 = vadd.f32 %v321, %v330
        %v339 = vadd.f32 %v322, %v331
        %v340 = vadd.f32 %v323, %v332
        %v341 = vadd.f32 %v324, %v333
        %v342 = vld [vmem:[%s5] sm:$0xff]
        %v343 = vld [vmem:[%s7] sm:$0xff]
        %345 = vset.pattern.permute.xlu0 0
        %346 = vperm.xlu0 %345, %v343
        %v347 = vpop.permute.xlu0 %346
        %v357 = vrot.slane %v335, 7
        %vm358 = vcmask 1041409
        %v359 = vsel %vm358, %v357, %v334
        %v360 = vrot.slane %v336, 6
        %vm361 = vcmask 1042434
        %v362 = vsel %vm361, %v360, %v359
        %v363 = vrot.slane %v337, 5
        %vm364 = vcmask 1043459
        %v365 = vsel %vm364, %v363, %v362
        %v366 = vrot.slane %v338, 4
        %vm367 = vcmask 1044484
        %v368 = vsel %vm367, %v366, %v365
        %v369 = vrot.slane %v339, 3
        %vm370 = vcmask 1045509
        %v371 = vsel %vm370, %v369, %v368
        %v372 = vrot.slane %v340, 2
        %vm373 = vcmask 1046534
        %v374 = vsel %vm373, %v372, %v371
        %v375 = vrot.slane %v341, 1
        %vm376 = vcmask 1047559
        %v377 = vsel %vm376, %v375, %v374
        %vm379 = vcmask 64512
        %v381 = vsel %vm379, %v342, 0
        %383 = vmatprep.subr.mxu0 0.0
        %384 = vmatpush1.msra.mxu0 %v377
        %385 = vmatprep.subr.mxu0 0.0
        %386 = vmatpush1.msra.mxu0 0.0
        %387 = vmatprep.subr.mxu0 0.0
        %388 = vmatpush1.msra.mxu0 0.0
        %389 = vmatprep.subr.mxu0 0.0
        %390 = vmatpush1.msra.mxu0 0.0
        %391 = vmatprep.subr.mxu0 0.0
        %392 = vmatpush1.msra.mxu0 0.0
        %393 = vmatprep.subr.mxu0 0.0
        %394 = vmatpush1.msra.mxu0 0.0
        %395 = vmatprep.subr.mxu0 0.0
        %396 = vmatpush1.msra.mxu0 0.0
        %397 = vmatprep.subr.mxu0 0.0
        %398 = vmatpush1.msra.mxu0 0.0
        %399 = vmatprep.subr.mxu0 0.0
        %400 = vmatpush1.msra.mxu0 0.0
        %401 = vmatprep.subr.mxu0 0.0
        %402 = vmatpush1.msra.mxu0 0.0
        %403 = vmatprep.subr.mxu0 0.0
        %404 = vmatpush1.msra.mxu0 0.0
        %405 = vmatprep.subr.mxu0 0.0
        %406 = vmatpush1.msra.mxu0 0.0
        %407 = vmatprep.subr.mxu0 0.0
        %408 = vmatpush1.msra.mxu0 0.0
        %409 = vmatprep.subr.mxu0 0.0
        %410 = vmatpush1.msra.mxu0 0.0
        %411 = vmatprep.subr.mxu0 0.0
        %412 = vmatpush1.msra.mxu0 0.0
        %413 = vmatprep.subr.mxu0 0.0
        %414 = vmatpush1.msra.mxu0 0.0
        %415 = vmatprep.subr.mxu0 0.0
        %416 = vmatpush1.msra.mxu0 0.0
        %417 = vmatprep.subr.mxu0 0.0
        %418 = vmatpush1.msra.mxu0 0.0
        %419 = vmatprep.subr.mxu0 0.0
        %420 = vmatpush1.msra.mxu0 0.0
        %421 = vmatprep.subr.mxu0 0.0
        %422 = vmatpush1.msra.mxu0 0.0
        %423 = vmatprep.subr.mxu0 0.0
        %424 = vmatpush1.msra.mxu0 0.0
        %425 = vmatprep.subr.mxu0 0.0
        %426 = vmatpush1.msra.mxu0 0.0
        %427 = vmatprep.subr.mxu0 0.0
        %428 = vmatpush1.msra.mxu0 0.0
        %429 = vmatprep.subr.mxu0 0.0
        %430 = vmatpush1.msra.mxu0 0.0
        %431 = vmatprep.subr.mxu0 0.0
        %432 = vmatpush1.msra.mxu0 0.0
        %433 = vmatprep.subr.mxu0 0.0
        %434 = vmatpush1.msra.mxu0 0.0
        %435 = vmatprep.subr.mxu0 0.0
        %436 = vmatpush1.msra.mxu0 0.0
        %437 = vmatprep.subr.mxu0 0.0
        %438 = vmatpush1.msra.mxu0 0.0
        %439 = vmatprep.subr.mxu0 0.0
        %440 = vmatpush1.msra.mxu0 0.0
        %441 = vmatprep.subr.mxu0 0.0
        %442 = vmatpush1.msra.mxu0 0.0
        %443 = vmatprep.subr.mxu0 0.0
        %444 = vmatpush1.msra.mxu0 0.0
        %445 = vmatprep.subr.mxu0 0.0
        %446 = vmatpush1.msra.mxu0 0.0
        %447 = vmatprep.mubr.f32.mxu0 0.0
        %448 = vmatmul.mubr.f32.gmra.mrb[0].mxu0 %v381
        %v449 = vpop.f32.mrb[0].mxu0
        %v450 = vadd.f32 %v347, %v449
        %v451 = vpop.f32.mrb[0].mxu0
        %452 = vdwg.mxu0
        %v453 = vld [vmem:[%s6] sm:$0xff]
        %v454 = vld [vmem:[%s6 + $0x8] sm:$0xff]
        %vm455 = vcmask 130048
        %v457 = vsel %vm455, %v450, 0
        %459 = vmatprep.subr.mxu0 0.0
        %460 = vmatpush1.msra.mxu0 %v453
        %461 = vmatprep.subr.mxu0 0.0
        %462 = vmatpush1.msra.mxu0 %v454
        %463 = vmatprep.subr.mxu0 0.0
        %464 = vmatpush1.msra.mxu0 0.0
        %465 = vmatprep.subr.mxu0 0.0
        %466 = vmatpush1.msra.mxu0 0.0
        %467 = vmatprep.subr.mxu0 0.0
        %468 = vmatpush1.msra.mxu0 0.0
        %469 = vmatprep.subr.mxu0 0.0
        %470 = vmatpush1.msra.mxu0 0.0
        %471 = vmatprep.subr.mxu0 0.0
        %472 = vmatpush1.msra.mxu0 0.0
        %473 = vmatprep.subr.mxu0 0.0
        %474 = vmatpush1.msra.mxu0 0.0
        %475 = vmatprep.subr.mxu0 0.0
        %476 = vmatpush1.msra.mxu0 0.0
        %477 = vmatprep.subr.mxu0 0.0
        %478 = vmatpush1.msra.mxu0 0.0
        %479 = vmatprep.subr.mxu0 0.0
        %480 = vmatpush1.msra.mxu0 0.0
        %481 = vmatprep.subr.mxu0 0.0
        %482 = vmatpush1.msra.mxu0 0.0
        %483 = vmatprep.subr.mxu0 0.0
        %484 = vmatpush1.msra.mxu0 0.0
        %485 = vmatprep.subr.mxu0 0.0
        %486 = vmatpush1.msra.mxu0 0.0
        %487 = vmatprep.subr.mxu0 0.0
        %488 = vmatpush1.msra.mxu0 0.0
        %489 = vmatprep.subr.mxu0 0.0
        %490 = vmatpush1.msra.mxu0 0.0
        %491 = vmatprep.subr.mxu0 0.0
        %492 = vmatpush1.msra.mxu0 0.0
        %493 = vmatprep.subr.mxu0 0.0
        %494 = vmatpush1.msra.mxu0 0.0
        %495 = vmatprep.subr.mxu0 0.0
        %496 = vmatpush1.msra.mxu0 0.0
        %497 = vmatprep.subr.mxu0 0.0
        %498 = vmatpush1.msra.mxu0 0.0
        %499 = vmatprep.subr.mxu0 0.0
        %500 = vmatpush1.msra.mxu0 0.0
        %501 = vmatprep.subr.mxu0 0.0
        %502 = vmatpush1.msra.mxu0 0.0
        %503 = vmatprep.subr.mxu0 0.0
        %504 = vmatpush1.msra.mxu0 0.0
        %505 = vmatprep.subr.mxu0 0.0
        %506 = vmatpush1.msra.mxu0 0.0
        %507 = vmatprep.subr.mxu0 0.0
        %508 = vmatpush1.msra.mxu0 0.0
        %509 = vmatprep.subr.mxu0 0.0
        %510 = vmatpush1.msra.mxu0 0.0
        %511 = vmatprep.subr.mxu0 0.0
        %512 = vmatpush1.msra.mxu0 0.0
        %513 = vmatprep.subr.mxu0 0.0
        %514 = vmatpush1.msra.mxu0 0.0
        %515 = vmatprep.subr.mxu0 0.0
        %516 = vmatpush1.msra.mxu0 0.0
        %517 = vmatprep.subr.mxu0 0.0
        %518 = vmatpush1.msra.mxu0 0.0
        %519 = vmatprep.subr.mxu0 0.0
        %520 = vmatpush1.msra.mxu0 0.0
        %521 = vmatprep.subr.mxu0 0.0
        %522 = vmatpush1.msra.mxu0 0.0
        %523 = vmatprep.mubr.f32.mxu0 0.0
        %524 = vmatmul.mubr.f32.gmra.mrb[0].mxu0 %v457
        %v525 = vpop.f32.mrb[0].mxu0
        %v526 = vadd.f32 0.0, %v525
        %v527 = vpop.f32.mrb[0].mxu0
        %528 = vdwg.mxu0
        %vm529 = vcmask 261120
        %530 = vst.msk [vmem:[#allocation2] sm:$0xff] %vm529, %v526
        %s531 = sadd.s32 %s315, 1
        %s532 = scalar_lea.vmem %s273, %s531 [#allocation7]
        %v533 = vld [vmem:[%s532] sm:$0x1]
        %v534 = vld [vmem:[%s532 + $0x10] sm:$0x1]
        %v535 = vld [vmem:[%s532 + $0x20] sm:$0x1]
        %v536 = vld [vmem:[%s532 + $0x30] sm:$0x1]
        %v537 = vld [vmem:[%s532 + $0x40] sm:$0x1]
        %v538 = vld [vmem:[%s532 + $0x50] sm:$0x1]
        %v539 = vld [vmem:[%s532 + $0x60] sm:$0x1]
        %v540 = vld [vmem:[%s532 + $0x70] sm:$0x1]
        %s541 = scalar_lea.vmem %s282, %s531 [#allocation10]
        %v542 = vld [vmem:[%s541] sm:$0x1]
        %v543 = vld [vmem:[%s541 + $0x10] sm:$0x1]
        %v544 = vld [vmem:[%s541 + $0x20] sm:$0x1]
        %v545 = vld [vmem:[%s541 + $0x30] sm:$0x1]
        %v546 = vld [vmem:[%s541 + $0x40] sm:$0x1]
        %v547 = vld [vmem:[%s541 + $0x50] sm:$0x1]
        %v548 = vld [vmem:[%s541 + $0x60] sm:$0x1]
        %v549 = vld [vmem:[%s541 + $0x70] sm:$0x1]
        %v550 = vadd.f32 %v533, %v542
        %v551 = vadd.f32 %v534, %v543
        %v552 = vadd.f32 %v535, %v544
        %v553 = vadd.f32 %v536, %v545
        %v554 = vadd.f32 %v537, %v546
        %v555 = vadd.f32 %v538, %v547
        %v556 = vadd.f32 %v539, %v548
        %v557 = vadd.f32 %v540, %v549
        %v558 = vld [vmem:[%s5] sm:$0xff]
        %v559 = vld [vmem:[%s7] sm:$0xff]
        %561 = vset.pattern.permute.xlu0 0
        %562 = vperm.xlu0 %561, %v559
        %v563 = vpop.permute.xlu0 %562
        %v573 = vrot.slane %v551, 7
        %v574 = vsel %vm358, %v573, %v550
        %v575 = vrot.slane %v552, 6
        %v576 = vsel %vm361, %v575, %v574
        %v577 = vrot.slane %v553, 5
        %v578 = vsel %vm364, %v577, %v576
        %v579 = vrot.slane %v554, 4
        %v580 = vsel %vm367, %v579, %v578
        %v581 = vrot.slane %v555, 3
        %v582 = vsel %vm370, %v581, %v580
        %v583 = vrot.slane %v556, 2
        %v584 = vsel %vm373, %v583, %v582
        %v585 = vrot.slane %v557, 1
        %v586 = vsel %vm376, %v585, %v584
        %v589 = vsel %vm379, %v558, 0
        %591 = vmatprep.subr.mxu0 0.0
        %592 = vmatpush1.msra.mxu0 %v586
        %593 = vmatprep.subr.mxu0 0.0
        %594 = vmatpush1.msra.mxu0 0.0
        %595 = vmatprep.subr.mxu0 0.0
        %596 = vmatpush1.msra.mxu0 0.0
        %597 = vmatprep.subr.mxu0 0.0
        %598 = vmatpush1.msra.mxu0 0.0
        %599 = vmatprep.subr.mxu0 0.0
        %600 = vmatpush1.msra.mxu0 0.0
        %601 = vmatprep.subr.mxu0 0.0
        %602 = vmatpush1.msra.mxu0 0.0
        %603 = vmatprep.subr.mxu0 0.0
        %604 = vmatpush1.msra.mxu0 0.0
        %605 = vmatprep.subr.mxu0 0.0
        %606 = vmatpush1.msra.mxu0 0.0
        %607 = vmatprep.subr.mxu0 0.0
        %608 = vmatpush1.msra.mxu0 0.0
        %609 = vmatprep.subr.mxu0 0.0
        %610 = vmatpush1.msra.mxu0 0.0
        %611 = vmatprep.subr.mxu0 0.0
        %612 = vmatpush1.msra.mxu0 0.0
        %613 = vmatprep.subr.mxu0 0.0
        %614 = vmatpush1.msra.mxu0 0.0
        %615 = vmatprep.subr.mxu0 0.0
        %616 = vmatpush1.msra.mxu0 0.0
        %617 = vmatprep.subr.mxu0 0.0
        %618 = vmatpush1.msra.mxu0 0.0
        %619 = vmatprep.subr.mxu0 0.0
        %620 = vmatpush1.msra.mxu0 0.0
        %621 = vmatprep.subr.mxu0 0.0
        %622 = vmatpush1.msra.mxu0 0.0
        %623 = vmatprep.subr.mxu0 0.0
        %624 = vmatpush1.msra.mxu0 0.0
        %625 = vmatprep.subr.mxu0 0.0
        %626 = vmatpush1.msra.mxu0 0.0
        %627 = vmatprep.subr.mxu0 0.0
        %628 = vmatpush1.msra.mxu0 0.0
        %629 = vmatprep.subr.mxu0 0.0
        %630 = vmatpush1.msra.mxu0 0.0
        %631 = vmatprep.subr.mxu0 0.0
        %632 = vmatpush1.msra.mxu0 0.0
        %633 = vmatprep.subr.mxu0 0.0
        %634 = vmatpush1.msra.mxu0 0.0
        %635 = vmatprep.subr.mxu0 0.0
        %636 = vmatpush1.msra.mxu0 0.0
        %637 = vmatprep.subr.mxu0 0.0
        %638 = vmatpush1.msra.mxu0 0.0
        %639 = vmatprep.subr.mxu0 0.0
        %640 = vmatpush1.msra.mxu0 0.0
        %641 = vmatprep.subr.mxu0 0.0
        %642 = vmatpush1.msra.mxu0 0.0
        %643 = vmatprep.subr.mxu0 0.0
        %644 = vmatpush1.msra.mxu0 0.0
        %645 = vmatprep.subr.mxu0 0.0
        %646 = vmatpush1.msra.mxu0 0.0
        %647 = vmatprep.subr.mxu0 0.0
        %648 = vmatpush1.msra.mxu0 0.0
        %649 = vmatprep.subr.mxu0 0.0
        %650 = vmatpush1.msra.mxu0 0.0
        %651 = vmatprep.subr.mxu0 0.0
        %652 = vmatpush1.msra.mxu0 0.0
        %653 = vmatprep.subr.mxu0 0.0
        %654 = vmatpush1.msra.mxu0 0.0
        %655 = vmatprep.mubr.f32.mxu0 0.0
        %656 = vmatmul.mubr.f32.gmra.mrb[0].mxu0 %v589
        %v657 = vpop.f32.mrb[0].mxu0
        %v658 = vadd.f32 %v563, %v657
        %v659 = vpop.f32.mrb[0].mxu0
        %660 = vdwg.mxu0
        %v661 = vld [vmem:[%s6] sm:$0xff]
        %v662 = vld [vmem:[%s6 + $0x8] sm:$0xff]
        %v664 = vsel %vm455, %v658, 0
        %666 = vmatprep.subr.mxu0 0.0
        %667 = vmatpush1.msra.mxu0 %v661
        %668 = vmatprep.subr.mxu0 0.0
        %669 = vmatpush1.msra.mxu0 %v662
        %670 = vmatprep.subr.mxu0 0.0
        %671 = vmatpush1.msra.mxu0 0.0
        %672 = vmatprep.subr.mxu0 0.0
        %673 = vmatpush1.msra.mxu0 0.0
        %674 = vmatprep.subr.mxu0 0.0
        %675 = vmatpush1.msra.mxu0 0.0
        %676 = vmatprep.subr.mxu0 0.0
        %677 = vmatpush1.msra.mxu0 0.0
        %678 = vmatprep.subr.mxu0 0.0
        %679 = vmatpush1.msra.mxu0 0.0
        %680 = vmatprep.subr.mxu0 0.0
        %681 = vmatpush1.msra.mxu0 0.0
        %682 = vmatprep.subr.mxu0 0.0
        %683 = vmatpush1.msra.mxu0 0.0
        %684 = vmatprep.subr.mxu0 0.0
        %685 = vmatpush1.msra.mxu0 0.0
        %686 = vmatprep.subr.mxu0 0.0
        %687 = vmatpush1.msra.mxu0 0.0
        %688 = vmatprep.subr.mxu0 0.0
        %689 = vmatpush1.msra.mxu0 0.0
        %690 = vmatprep.subr.mxu0 0.0
        %691 = vmatpush1.msra.mxu0 0.0
        %692 = vmatprep.subr.mxu0 0.0
        %693 = vmatpush1.msra.mxu0 0.0
        %694 = vmatprep.subr.mxu0 0.0
        %695 = vmatpush1.msra.mxu0 0.0
        %696 = vmatprep.subr.mxu0 0.0
        %697 = vmatpush1.msra.mxu0 0.0
        %698 = vmatprep.subr.mxu0 0.0
        %699 = vmatpush1.msra.mxu0 0.0
        %700 = vmatprep.subr.mxu0 0.0
        %701 = vmatpush1.msra.mxu0 0.0
        %702 = vmatprep.subr.mxu0 0.0
        %703 = vmatpush1.msra.mxu0 0.0
        %704 = vmatprep.subr.mxu0 0.0
        %705 = vmatpush1.msra.mxu0 0.0
        %706 = vmatprep.subr.mxu0 0.0
        %707 = vmatpush1.msra.mxu0 0.0
        %708 = vmatprep.subr.mxu0 0.0
        %709 = vmatpush1.msra.mxu0 0.0
        %710 = vmatprep.subr.mxu0 0.0
        %711 = vmatpush1.msra.mxu0 0.0
        %712 = vmatprep.subr.mxu0 0.0
        %713 = vmatpush1.msra.mxu0 0.0
        %714 = vmatprep.subr.mxu0 0.0
        %715 = vmatpush1.msra.mxu0 0.0
        %716 = vmatprep.subr.mxu0 0.0
        %717 = vmatpush1.msra.mxu0 0.0
        %718 = vmatprep.subr.mxu0 0.0
        %719 = vmatpush1.msra.mxu0 0.0
        %720 = vmatprep.subr.mxu0 0.0
        %721 = vmatpush1.msra.mxu0 0.0
        %722 = vmatprep.subr.mxu0 0.0
        %723 = vmatpush1.msra.mxu0 0.0
        %724 = vmatprep.subr.mxu0 0.0
        %725 = vmatpush1.msra.mxu0 0.0
        %726 = vmatprep.subr.mxu0 0.0
        %727 = vmatpush1.msra.mxu0 0.0
        %728 = vmatprep.subr.mxu0 0.0
        %729 = vmatpush1.msra.mxu0 0.0
        %730 = vmatprep.mubr.f32.mxu0 0.0
        %731 = vmatmul.mubr.f32.gmra.mrb[0].mxu0 %v664
        %v732 = vpop.f32.mrb[0].mxu0
        %v733 = vadd.f32 0.0, %v732
        %v734 = vpop.f32.mrb[0].mxu0
        %735 = vdwg.mxu0
        %s736 = scalar_lea.vmem [#allocation2], 8
        %737 = vst.msk [vmem:[%s736] sm:$0xff] %vm529, %v733
        %s738 = sadd.s32 %s315, 2
        %s739 = scalar_lea.vmem %s273, %s738 [#allocation7]
        %v740 = vld [vmem:[%s739] sm:$0x1]
        %v741 = vld [vmem:[%s739 + $0x10] sm:$0x1]
        %v742 = vld [vmem:[%s739 + $0x20] sm:$0x1]
        %v743 = vld [vmem:[%s739 + $0x30] sm:$0x1]
        %v744 = vld [vmem:[%s739 + $0x40] sm:$0x1]
        %v745 = vld [vmem:[%s739 + $0x50] sm:$0x1]
        %v746 = vld [vmem:[%s739 + $0x60] sm:$0x1]
        %v747 = vld [vmem:[%s739 + $0x70] sm:$0x1]
        %s748 = scalar_lea.vmem %s282, %s738 [#allocation10]
        %v749 = vld [vmem:[%s748] sm:$0x1]
        %v750 = vld [vmem:[%s748 + $0x10] sm:$0x1]
        %v751 = vld [vmem:[%s748 + $0x20] sm:$0x1]
        %v752 = vld [vmem:[%s748 + $0x30] sm:$0x1]
        %v753 = vld [vmem:[%s748 + $0x40] sm:$0x1]
        %v754 = vld [vmem:[%s748 + $0x50] sm:$0x1]
        %v755 = vld [vmem:[%s748 + $0x60] sm:$0x1]
        %v756 = vld [vmem:[%s748 + $0x70] sm:$0x1]
        %v757 = vadd.f32 %v740, %v749
        %v758 = vadd.f32 %v741, %v750
        %v759 = vadd.f32 %v742, %v751
        %v760 = vadd.f32 %v743, %v752
        %v761 = vadd.f32 %v744, %v753
        %v762 = vadd.f32 %v745, %v754
        %v763 = vadd.f32 %v746, %v755
        %v764 = vadd.f32 %v747, %v756
        %v765 = vld [vmem:[%s5] sm:$0xff]
        %v766 = vld [vmem:[%s7] sm:$0xff]
        %768 = vset.pattern.permute.xlu0 0
        %769 = vperm.xlu0 %768, %v766
        %v770 = vpop.permute.xlu0 %769
        %v780 = vrot.slane %v758, 7
        %v781 = vsel %vm358, %v780, %v757
        %v782 = vrot.slane %v759, 6
        %v783 = vsel %vm361, %v782, %v781
        %v784 = vrot.slane %v760, 5
        %v785 = vsel %vm364, %v784, %v783
        %v786 = vrot.slane %v761, 4
        %v787 = vsel %vm367, %v786, %v785
        %v788 = vrot.slane %v762, 3
        %v789 = vsel %vm370, %v788, %v787
        %v790 = vrot.slane %v763, 2
        %v791 = vsel %vm373, %v790, %v789
        %v792 = vrot.slane %v764, 1
        %v793 = vsel %vm376, %v792, %v791
        %v796 = vsel %vm379, %v765, 0
        %798 = vmatprep.subr.mxu0 0.0
        %799 = vmatpush1.msra.mxu0 %v793
        %800 = vmatprep.subr.mxu0 0.0
        %801 = vmatpush1.msra.mxu0 0.0
        %802 = vmatprep.subr.mxu0 0.0
        %803 = vmatpush1.msra.mxu0 0.0
        %804 = vmatprep.subr.mxu0 0.0
        %805 = vmatpush1.msra.mxu0 0.0
        %806 = vmatprep.subr.mxu0 0.0
        %807 = vmatpush1.msra.mxu0 0.0
        %808 = vmatprep.subr.mxu0 0.0
        %809 = vmatpush1.msra.mxu0 0.0
        %810 = vmatprep.subr.mxu0 0.0
        %811 = vmatpush1.msra.mxu0 0.0
        %812 = vmatprep.subr.mxu0 0.0
        %813 = vmatpush1.msra.mxu0 0.0
        %814 = vmatprep.subr.mxu0 0.0
        %815 = vmatpush1.msra.mxu0 0.0
        %816 = vmatprep.subr.mxu0 0.0
        %817 = vmatpush1.msra.mxu0 0.0
        %818 = vmatprep.subr.mxu0 0.0
        %819 = vmatpush1.msra.mxu0 0.0
        %820 = vmatprep.subr.mxu0 0.0
        %821 = vmatpush1.msra.mxu0 0.0
        %822 = vmatprep.subr.mxu0 0.0
        %823 = vmatpush1.msra.mxu0 0.0
        %824 = vmatprep.subr.mxu0 0.0
        %825 = vmatpush1.msra.mxu0 0.0
        %826 = vmatprep.subr.mxu0 0.0
        %827 = vmatpush1.msra.mxu0 0.0
        %828 = vmatprep.subr.mxu0 0.0
        %829 = vmatpush1.msra.mxu0 0.0
        %830 = vmatprep.subr.mxu0 0.0
        %831 = vmatpush1.msra.mxu0 0.0
        %832 = vmatprep.subr.mxu0 0.0
        %833 = vmatpush1.msra.mxu0 0.0
        %834 = vmatprep.subr.mxu0 0.0
        %835 = vmatpush1.msra.mxu0 0.0
        %836 = vmatprep.subr.mxu0 0.0
        %837 = vmatpush1.msra.mxu0 0.0
        %838 = vmatprep.subr.mxu0 0.0
        %839 = vmatpush1.msra.mxu0 0.0
        %840 = vmatprep.subr.mxu0 0.0
        %841 = vmatpush1.msra.mxu0 0.0
        %842 = vmatprep.subr.mxu0 0.0
        %843 = vmatpush1.msra.mxu0 0.0
        %844 = vmatprep.subr.mxu0 0.0
        %845 = vmatpush1.msra.mxu0 0.0
        %846 = vmatprep.subr.mxu0 0.0
        %847 = vmatpush1.msra.mxu0 0.0
        %848 = vmatprep.subr.mxu0 0.0
        %849 = vmatpush1.msra.mxu0 0.0
        %850 = vmatprep.subr.mxu0 0.0
        %851 = vmatpush1.msra.mxu0 0.0
        %852 = vmatprep.subr.mxu0 0.0
        %853 = vmatpush1.msra.mxu0 0.0
        %854 = vmatprep.subr.mxu0 0.0
        %855 = vmatpush1.msra.mxu0 0.0
        %856 = vmatprep.subr.mxu0 0.0
        %857 = vmatpush1.msra.mxu0 0.0
        %858 = vmatprep.subr.mxu0 0.0
        %859 = vmatpush1.msra.mxu0 0.0
        %860 = vmatprep.subr.mxu0 0.0
        %861 = vmatpush1.msra.mxu0 0.0
        %862 = vmatprep.mubr.f32.mxu0 0.0
        %863 = vmatmul.mubr.f32.gmra.mrb[0].mxu0 %v796
        %v864 = vpop.f32.mrb[0].mxu0
        %v865 = vadd.f32 %v770, %v864
        %v866 = vpop.f32.mrb[0].mxu0
        %867 = vdwg.mxu0
        %v868 = vld [vmem:[%s6] sm:$0xff]
        %v869 = vld [vmem:[%s6 + $0x8] sm:$0xff]
        %v871 = vsel %vm455, %v865, 0
        %873 = vmatprep.subr.mxu0 0.0
        %874 = vmatpush1.msra.mxu0 %v868
        %875 = vmatprep.subr.mxu0 0.0
        %876 = vmatpush1.msra.mxu0 %v869
        %877 = vmatprep.subr.mxu0 0.0
        %878 = vmatpush1.msra.mxu0 0.0
        %879 = vmatprep.subr.mxu0 0.0
        %880 = vmatpush1.msra.mxu0 0.0
        %881 = vmatprep.subr.mxu0 0.0
        %882 = vmatpush1.msra.mxu0 0.0
        %883 = vmatprep.subr.mxu0 0.0
        %884 = vmatpush1.msra.mxu0 0.0
        %885 = vmatprep.subr.mxu0 0.0
        %886 = vmatpush1.msra.mxu0 0.0
        %887 = vmatprep.subr.mxu0 0.0
        %888 = vmatpush1.msra.mxu0 0.0
        %889 = vmatprep.subr.mxu0 0.0
        %890 = vmatpush1.msra.mxu0 0.0
        %891 = vmatprep.subr.mxu0 0.0
        %892 = vmatpush1.msra.mxu0 0.0
        %893 = vmatprep.subr.mxu0 0.0
        %894 = vmatpush1.msra.mxu0 0.0
        %895 = vmatprep.subr.mxu0 0.0
        %896 = vmatpush1.msra.mxu0 0.0
        %897 = vmatprep.subr.mxu0 0.0
        %898 = vmatpush1.msra.mxu0 0.0
        %899 = vmatprep.subr.mxu0 0.0
        %900 = vmatpush1.msra.mxu0 0.0
        %901 = vmatprep.subr.mxu0 0.0
        %902 = vmatpush1.msra.mxu0 0.0
        %903 = vmatprep.subr.mxu0 0.0
        %904 = vmatpush1.msra.mxu0 0.0
        %905 = vmatprep.subr.mxu0 0.0
        %906 = vmatpush1.msra.mxu0 0.0
        %907 = vmatprep.subr.mxu0 0.0
        %908 = vmatpush1.msra.mxu0 0.0
        %909 = vmatprep.subr.mxu0 0.0
        %910 = vmatpush1.msra.mxu0 0.0
        %911 = vmatprep.subr.mxu0 0.0
        %912 = vmatpush1.msra.mxu0 0.0
        %913 = vmatprep.subr.mxu0 0.0
        %914 = vmatpush1.msra.mxu0 0.0
        %915 = vmatprep.subr.mxu0 0.0
        %916 = vmatpush1.msra.mxu0 0.0
        %917 = vmatprep.subr.mxu0 0.0
        %918 = vmatpush1.msra.mxu0 0.0
        %919 = vmatprep.subr.mxu0 0.0
        %920 = vmatpush1.msra.mxu0 0.0
        %921 = vmatprep.subr.mxu0 0.0
        %922 = vmatpush1.msra.mxu0 0.0
        %923 = vmatprep.subr.mxu0 0.0
        %924 = vmatpush1.msra.mxu0 0.0
        %925 = vmatprep.subr.mxu0 0.0
        %926 = vmatpush1.msra.mxu0 0.0
        %927 = vmatprep.subr.mxu0 0.0
        %928 = vmatpush1.msra.mxu0 0.0
        %929 = vmatprep.subr.mxu0 0.0
        %930 = vmatpush1.msra.mxu0 0.0
        %931 = vmatprep.subr.mxu0 0.0
        %932 = vmatpush1.msra.mxu0 0.0
        %933 = vmatprep.subr.mxu0 0.0
        %934 = vmatpush1.msra.mxu0 0.0
        %935 = vmatprep.subr.mxu0 0.0
        %936 = vmatpush1.msra.mxu0 0.0
        %937 = vmatprep.mubr.f32.mxu0 0.0
        %938 = vmatmul.mubr.f32.gmra.mrb[0].mxu0 %v871
        %v939 = vpop.f32.mrb[0].mxu0
        %v940 = vadd.f32 0.0, %v939
        %v941 = vpop.f32.mrb[0].mxu0
        %942 = vdwg.mxu0
        %s943 = scalar_lea.vmem [#allocation2], 16
        %944 = vst.msk [vmem:[%s943] sm:$0xff] %vm529, %v940
        %s945 = sadd.s32 %s315, 3
        %s946 = scalar_lea.vmem %s273, %s945 [#allocation7]
        %v947 = vld [vmem:[%s946] sm:$0x1]
        %v948 = vld [vmem:[%s946 + $0x10] sm:$0x1]
        %v949 = vld [vmem:[%s946 + $0x20] sm:$0x1]
        %v950 = vld [vmem:[%s946 + $0x30] sm:$0x1]
        %v951 = vld [vmem:[%s946 + $0x40] sm:$0x1]
        %v952 = vld [vmem:[%s946 + $0x50] sm:$0x1]
        %v953 = vld [vmem:[%s946 + $0x60] sm:$0x1]
        %v954 = vld [vmem:[%s946 + $0x70] sm:$0x1]
        %s955 = scalar_lea.vmem %s282, %s945 [#allocation10]
        %v956 = vld [vmem:[%s955] sm:$0x1]
        %v957 = vld [vmem:[%s955 + $0x10] sm:$0x1]
        %v958 = vld [vmem:[%s955 + $0x20] sm:$0x1]
        %v959 = vld [vmem:[%s955 + $0x30] sm:$0x1]
        %v960 = vld [vmem:[%s955 + $0x40] sm:$0x1]
        %v961 = vld [vmem:[%s955 + $0x50] sm:$0x1]
        %v962 = vld [vmem:[%s955 + $0x60] sm:$0x1]
        %v963 = vld [vmem:[%s955 + $0x70] sm:$0x1]
        %v964 = vadd.f32 %v947, %v956
        %v965 = vadd.f32 %v948, %v957
        %v966 = vadd.f32 %v949, %v958
        %v967 = vadd.f32 %v950, %v959
        %v968 = vadd.f32 %v951, %v960
        %v969 = vadd.f32 %v952, %v961
        %v970 = vadd.f32 %v953, %v962
        %v971 = vadd.f32 %v954, %v963
        %v972 = vld [vmem:[%s5] sm:$0xff]
        %v973 = vld [vmem:[%s7] sm:$0xff]
        %975 = vset.pattern.permute.xlu0 0
        %976 = vperm.xlu0 %975, %v973
        %v977 = vpop.permute.xlu0 %976
        %v987 = vrot.slane %v965, 7
        %v988 = vsel %vm358, %v987, %v964
        %v989 = vrot.slane %v966, 6
        %v990 = vsel %vm361, %v989, %v988
        %v991 = vrot.slane %v967, 5
        %v992 = vsel %vm364, %v991, %v990
        %v993 = vrot.slane %v968, 4
        %v994 = vsel %vm367, %v993, %v992
        %v995 = vrot.slane %v969, 3
        %v996 = vsel %vm370, %v995, %v994
        %v997 = vrot.slane %v970, 2
        %v998 = vsel %vm373, %v997, %v996
        %v999 = vrot.slane %v971, 1
        %v1000 = vsel %vm376, %v999, %v998
        %v1003 = vsel %vm379, %v972, 0
        %1005 = vmatprep.subr.mxu0 0.0
        %1006 = vmatpush1.msra.mxu0 %v1000
        %1007 = vmatprep.subr.mxu0 0.0
        %1008 = vmatpush1.msra.mxu0 0.0
        %1009 = vmatprep.subr.mxu0 0.0
        %1010 = vmatpush1.msra.mxu0 0.0
        %1011 = vmatprep.subr.mxu0 0.0
        %1012 = vmatpush1.msra.mxu0 0.0
        %1013 = vmatprep.subr.mxu0 0.0
        %1014 = vmatpush1.msra.mxu0 0.0
        %1015 = vmatprep.subr.mxu0 0.0
        %1016 = vmatpush1.msra.mxu0 0.0
        %1017 = vmatprep.subr.mxu0 0.0
        %1018 = vmatpush1.msra.mxu0 0.0
        %1019 = vmatprep.subr.mxu0 0.0
        %1020 = vmatpush1.msra.mxu0 0.0
        %1021 = vmatprep.subr.mxu0 0.0
        %1022 = vmatpush1.msra.mxu0 0.0
        %1023 = vmatprep.subr.mxu0 0.0
        %1024 = vmatpush1.msra.mxu0 0.0
        %1025 = vmatprep.subr.mxu0 0.0
        %1026 = vmatpush1.msra.mxu0 0.0
        %1027 = vmatprep.subr.mxu0 0.0
        %1028 = vmatpush1.msra.mxu0 0.0
        %1029 = vmatprep.subr.mxu0 0.0
        %1030 = vmatpush1.msra.mxu0 0.0
        %1031 = vmatprep.subr.mxu0 0.0
        %1032 = vmatpush1.msra.mxu0 0.0
        %1033 = vmatprep.subr.mxu0 0.0
        %1034 = vmatpush1.msra.mxu0 0.0
        %1035 = vmatprep.subr.mxu0 0.0
        %1036 = vmatpush1.msra.mxu0 0.0
        %1037 = vmatprep.subr.mxu0 0.0
        %1038 = vmatpush1.msra.mxu0 0.0
        %1039 = vmatprep.subr.mxu0 0.0
        %1040 = vmatpush1.msra.mxu0 0.0
        %1041 = vmatprep.subr.mxu0 0.0
        %1042 = vmatpush1.msra.mxu0 0.0
        %1043 = vmatprep.subr.mxu0 0.0
        %1044 = vmatpush1.msra.mxu0 0.0
        %1045 = vmatprep.subr.mxu0 0.0
        %1046 = vmatpush1.msra.mxu0 0.0
        %1047 = vmatprep.subr.mxu0 0.0
        %1048 = vmatpush1.msra.mxu0 0.0
        %1049 = vmatprep.subr.mxu0 0.0
        %1050 = vmatpush1.msra.mxu0 0.0
        %1051 = vmatprep.subr.mxu0 0.0
        %1052 = vmatpush1.msra.mxu0 0.0
        %1053 = vmatprep.subr.mxu0 0.0
        %1054 = vmatpush1.msra.mxu0 0.0
        %1055 = vmatprep.subr.mxu0 0.0
        %1056 = vmatpush1.msra.mxu0 0.0
        %1057 = vmatprep.subr.mxu0 0.0
        %1058 = vmatpush1.msra.mxu0 0.0
        %1059 = vmatprep.subr.mxu0 0.0
        %1060 = vmatpush1.msra.mxu0 0.0
        %1061 = vmatprep.subr.mxu0 0.0
        %1062 = vmatpush1.msra.mxu0 0.0
        %1063 = vmatprep.subr.mxu0 0.0
        %1064 = vmatpush1.msra.mxu0 0.0
        %1065 = vmatprep.subr.mxu0 0.0
        %1066 = vmatpush1.msra.mxu0 0.0
        %1067 = vmatprep.subr.mxu0 0.0
        %1068 = vmatpush1.msra.mxu0 0.0
        %1069 = vmatprep.mubr.f32.mxu0 0.0
        %1070 = vmatmul.mubr.f32.gmra.mrb[0].mxu0 %v1003
        %v1071 = vpop.f32.mrb[0].mxu0
        %v1072 = vadd.f32 %v977, %v1071
        %v1073 = vpop.f32.mrb[0].mxu0
        %1074 = vdwg.mxu0
        %v1075 = vld [vmem:[%s6] sm:$0xff]
        %v1076 = vld [vmem:[%s6 + $0x8] sm:$0xff]
        %v1078 = vsel %vm455, %v1072, 0
        %1080 = vmatprep.subr.mxu0 0.0
        %1081 = vmatpush1.msra.mxu0 %v1075
        %1082 = vmatprep.subr.mxu0 0.0
        %1083 = vmatpush1.msra.mxu0 %v1076
        %1084 = vmatprep.subr.mxu0 0.0
        %1085 = vmatpush1.msra.mxu0 0.0
        %1086 = vmatprep.subr.mxu0 0.0
        %1087 = vmatpush1.msra.mxu0 0.0
        %1088 = vmatprep.subr.mxu0 0.0
        %1089 = vmatpush1.msra.mxu0 0.0
        %1090 = vmatprep.subr.mxu0 0.0
        %1091 = vmatpush1.msra.mxu0 0.0
        %1092 = vmatprep.subr.mxu0 0.0
        %1093 = vmatpush1.msra.mxu0 0.0
        %1094 = vmatprep.subr.mxu0 0.0
        %1095 = vmatpush1.msra.mxu0 0.0
        %1096 = vmatprep.subr.mxu0 0.0
        %1097 = vmatpush1.msra.mxu0 0.0
        %1098 = vmatprep.subr.mxu0 0.0
        %1099 = vmatpush1.msra.mxu0 0.0
        %1100 = vmatprep.subr.mxu0 0.0
        %1101 = vmatpush1.msra.mxu0 0.0
        %1102 = vmatprep.subr.mxu0 0.0
        %1103 = vmatpush1.msra.mxu0 0.0
        %1104 = vmatprep.subr.mxu0 0.0
        %1105 = vmatpush1.msra.mxu0 0.0
        %1106 = vmatprep.subr.mxu0 0.0
        %1107 = vmatpush1.msra.mxu0 0.0
        %1108 = vmatprep.subr.mxu0 0.0
        %1109 = vmatpush1.msra.mxu0 0.0
        %1110 = vmatprep.subr.mxu0 0.0
        %1111 = vmatpush1.msra.mxu0 0.0
        %1112 = vmatprep.subr.mxu0 0.0
        %1113 = vmatpush1.msra.mxu0 0.0
        %1114 = vmatprep.subr.mxu0 0.0
        %1115 = vmatpush1.msra.mxu0 0.0
        %1116 = vmatprep.subr.mxu0 0.0
        %1117 = vmatpush1.msra.mxu0 0.0
        %1118 = vmatprep.subr.mxu0 0.0
        %1119 = vmatpush1.msra.mxu0 0.0
        %1120 = vmatprep.subr.mxu0 0.0
        %1121 = vmatpush1.msra.mxu0 0.0
        %1122 = vmatprep.subr.mxu0 0.0
        %1123 = vmatpush1.msra.mxu0 0.0
        %1124 = vmatprep.subr.mxu0 0.0
        %1125 = vmatpush1.msra.mxu0 0.0
        %1126 = vmatprep.subr.mxu0 0.0
        %1127 = vmatpush1.msra.mxu0 0.0
        %1128 = vmatprep.subr.mxu0 0.0
        %1129 = vmatpush1.msra.mxu0 0.0
        %1130 = vmatprep.subr.mxu0 0.0
        %1131 = vmatpush1.msra.mxu0 0.0
        %1132 = vmatprep.subr.mxu0 0.0
        %1133 = vmatpush1.msra.mxu0 0.0
        %1134 = vmatprep.subr.mxu0 0.0
        %1135 = vmatpush1.msra.mxu0 0.0
        %1136 = vmatprep.subr.mxu0 0.0
        %1137 = vmatpush1.msra.mxu0 0.0
        %1138 = vmatprep.subr.mxu0 0.0
        %1139 = vmatpush1.msra.mxu0 0.0
        %1140 = vmatprep.subr.mxu0 0.0
        %1141 = vmatpush1.msra.mxu0 0.0
        %1142 = vmatprep.subr.mxu0 0.0
        %1143 = vmatpush1.msra.mxu0 0.0
        %1144 = vmatprep.mubr.f32.mxu0 0.0
        %1145 = vmatmul.mubr.f32.gmra.mrb[0].mxu0 %v1078
        %v1146 = vpop.f32.mrb[0].mxu0
        %v1147 = vadd.f32 0.0, %v1146
        %v1148 = vpop.f32.mrb[0].mxu0
        %1149 = vdwg.mxu0
        %s1150 = scalar_lea.vmem [#allocation2], 24
        %1151 = vst.msk [vmem:[%s1150] sm:$0xff] %vm529, %v1147
        %s1152 = sadd.s32 %s315, 4
        %s1153 = scalar_lea.vmem %s273, %s1152 [#allocation7]
        %v1154 = vld [vmem:[%s1153] sm:$0x1]
        %v1155 = vld [vmem:[%s1153 + $0x10] sm:$0x1]
        %v1156 = vld [vmem:[%s1153 + $0x20] sm:$0x1]
        %v1157 = vld [vmem:[%s1153 + $0x30] sm:$0x1]
        %v1158 = vld [vmem:[%s1153 + $0x40] sm:$0x1]
        %v1159 = vld [vmem:[%s1153 + $0x50] sm:$0x1]
        %v1160 = vld [vmem:[%s1153 + $0x60] sm:$0x1]
        %v1161 = vld [vmem:[%s1153 + $0x70] sm:$0x1]
        %s1162 = scalar_lea.vmem %s282, %s1152 [#allocation10]
        %v1163 = vld [vmem:[%s1162] sm:$0x1]
        %v1164 = vld [vmem:[%s1162 + $0x10] sm:$0x1]
        %v1165 = vld [vmem:[%s1162 + $0x20] sm:$0x1]
        %v1166 = vld [vmem:[%s1162 + $0x30] sm:$0x1]
        %v1167 = vld [vmem:[%s1162 + $0x40] sm:$0x1]
        %v1168 = vld [vmem:[%s1162 + $0x50] sm:$0x1]
        %v1169 = vld [vmem:[%s1162 + $0x60] sm:$0x1]
        %v1170 = vld [vmem:[%s1162 + $0x70] sm:$0x1]
        %v1171 = vadd.f32 %v1154, %v1163
        %v1172 = vadd.f32 %v1155, %v1164
        %v1173 = vadd.f32 %v1156, %v1165
        %v1174 = vadd.f32 %v1157, %v1166
        %v1175 = vadd.f32 %v1158, %v1167
        %v1176 = vadd.f32 %v1159, %v1168
        %v1177 = vadd.f32 %v1160, %v1169
        %v1178 = vadd.f32 %v1161, %v1170
        %v1179 = vld [vmem:[%s5] sm:$0xff]
        %v1180 = vld [vmem:[%s7] sm:$0xff]
        %1182 = vset.pattern.permute.xlu0 0
        %1183 = vperm.xlu0 %1182, %v1180
        %v1184 = vpop.permute.xlu0 %1183
        %v1194 = vrot.slane %v1172, 7
        %v1195 = vsel %vm358, %v1194, %v1171
        %v1196 = vrot.slane %v1173, 6
        %v1197 = vsel %vm361, %v1196, %v1195
        %v1198 = vrot.slane %v1174, 5
        %v1199 = vsel %vm364, %v1198, %v1197
        %v1200 = vrot.slane %v1175, 4
        %v1201 = vsel %vm367, %v1200, %v1199
        %v1202 = vrot.slane %v1176, 3
        %v1203 = vsel %vm370, %v1202, %v1201
        %v1204 = vrot.slane %v1177, 2
        %v1205 = vsel %vm373, %v1204, %v1203
        %v1206 = vrot.slane %v1178, 1
        %v1207 = vsel %vm376, %v1206, %v1205
        %v1210 = vsel %vm379, %v1179, 0
        %1212 = vmatprep.subr.mxu0 0.0
        %1213 = vmatpush1.msra.mxu0 %v1207
        %1214 = vmatprep.subr.mxu0 0.0
        %1215 = vmatpush1.msra.mxu0 0.0
        %1216 = vmatprep.subr.mxu0 0.0
        %1217 = vmatpush1.msra.mxu0 0.0
        %1218 = vmatprep.subr.mxu0 0.0
        %1219 = vmatpush1.msra.mxu0 0.0
        %1220 = vmatprep.subr.mxu0 0.0
        %1221 = vmatpush1.msra.mxu0 0.0
        %1222 = vmatprep.subr.mxu0 0.0
        %1223 = vmatpush1.msra.mxu0 0.0
        %1224 = vmatprep.subr.mxu0 0.0
        %1225 = vmatpush1.msra.mxu0 0.0
        %1226 = vmatprep.subr.mxu0 0.0
        %1227 = vmatpush1.msra.mxu0 0.0
        %1228 = vmatprep.subr.mxu0 0.0
        %1229 = vmatpush1.msra.mxu0 0.0
        %1230 = vmatprep.subr.mxu0 0.0
        %1231 = vmatpush1.msra.mxu0 0.0
        %1232 = vmatprep.subr.mxu0 0.0
        %1233 = vmatpush1.msra.mxu0 0.0
        %1234 = vmatprep.subr.mxu0 0.0
        %1235 = vmatpush1.msra.mxu0 0.0
        %1236 = vmatprep.subr.mxu0 0.0
        %1237 = vmatpush1.msra.mxu0 0.0
        %1238 = vmatprep.subr.mxu0 0.0
        %1239 = vmatpush1.msra.mxu0 0.0
        %1240 = vmatprep.subr.mxu0 0.0
        %1241 = vmatpush1.msra.mxu0 0.0
        %1242 = vmatprep.subr.mxu0 0.0
        %1243 = vmatpush1.msra.mxu0 0.0
        %1244 = vmatprep.subr.mxu0 0.0
        %1245 = vmatpush1.msra.mxu0 0.0
        %1246 = vmatprep.subr.mxu0 0.0
        %1247 = vmatpush1.msra.mxu0 0.0
        %1248 = vmatprep.subr.mxu0 0.0
        %1249 = vmatpush1.msra.mxu0 0.0
        %1250 = vmatprep.subr.mxu0 0.0
        %1251 = vmatpush1.msra.mxu0 0.0
        %1252 = vmatprep.subr.mxu0 0.0
        %1253 = vmatpush1.msra.mxu0 0.0
        %1254 = vmatprep.subr.mxu0 0.0
        %1255 = vmatpush1.msra.mxu0 0.0
        %1256 = vmatprep.subr.mxu0 0.0
        %1257 = vmatpush1.msra.mxu0 0.0
        %1258 = vmatprep.subr.mxu0 0.0
        %1259 = vmatpush1.msra.mxu0 0.0
        %1260 = vmatprep.subr.mxu0 0.0
        %1261 = vmatpush1.msra.mxu0 0.0
        %1262 = vmatprep.subr.mxu0 0.0
        %1263 = vmatpush1.msra.mxu0 0.0
        %1264 = vmatprep.subr.mxu0 0.0
        %1265 = vmatpush1.msra.mxu0 0.0
        %1266 = vmatprep.subr.mxu0 0.0
        %1267 = vmatpush1.msra.mxu0 0.0
        %1268 = vmatprep.subr.mxu0 0.0
        %1269 = vmatpush1.msra.mxu0 0.0
        %1270 = vmatprep.subr.mxu0 0.0
        %1271 = vmatpush1.msra.mxu0 0.0
        %1272 = vmatprep.subr.mxu0 0.0
        %1273 = vmatpush1.msra.mxu0 0.0
        %1274 = vmatprep.subr.mxu0 0.0
        %1275 = vmatpush1.msra.mxu0 0.0
        %1276 = vmatprep.mubr.f32.mxu0 0.0
        %1277 = vmatmul.mubr.f32.gmra.mrb[0].mxu0 %v1210
        %v1278 = vpop.f32.mrb[0].mxu0
        %v1279 = vadd.f32 %v1184, %v1278
        %v1280 = vpop.f32.mrb[0].mxu0
        %1281 = vdwg.mxu0
        %v1282 = vld [vmem:[%s6] sm:$0xff]
        %v1283 = vld [vmem:[%s6 + $0x8] sm:$0xff]
        %v1285 = vsel %vm455, %v1279, 0
        %1287 = vmatprep.subr.mxu0 0.0
        %1288 = vmatpush1.msra.mxu0 %v1282
        %1289 = vmatprep.subr.mxu0 0.0
        %1290 = vmatpush1.msra.mxu0 %v1283
        %1291 = vmatprep.subr.mxu0 0.0
        %1292 = vmatpush1.msra.mxu0 0.0
        %1293 = vmatprep.subr.mxu0 0.0
        %1294 = vmatpush1.msra.mxu0 0.0
        %1295 = vmatprep.subr.mxu0 0.0
        %1296 = vmatpush1.msra.mxu0 0.0
        %1297 = vmatprep.subr.mxu0 0.0
        %1298 = vmatpush1.msra.mxu0 0.0
        %1299 = vmatprep.subr.mxu0 0.0
        %1300 = vmatpush1.msra.mxu0 0.0
        %1301 = vmatprep.subr.mxu0 0.0
        %1302 = vmatpush1.msra.mxu0 0.0
        %1303 = vmatprep.subr.mxu0 0.0
        %1304 = vmatpush1.msra.mxu0 0.0
        %1305 = vmatprep.subr.mxu0 0.0
        %1306 = vmatpush1.msra.mxu0 0.0
        %1307 = vmatprep.subr.mxu0 0.0
        %1308 = vmatpush1.msra.mxu0 0.0
        %1309 = vmatprep.subr.mxu0 0.0
        %1310 = vmatpush1.msra.mxu0 0.0
        %1311 = vmatprep.subr.mxu0 0.0
        %1312 = vmatpush1.msra.mxu0 0.0
        %1313 = vmatprep.subr.mxu0 0.0
        %1314 = vmatpush1.msra.mxu0 0.0
        %1315 = vmatprep.subr.mxu0 0.0
        %1316 = vmatpush1.msra.mxu0 0.0
        %1317 = vmatprep.subr.mxu0 0.0
        %1318 = vmatpush1.msra.mxu0 0.0
        %1319 = vmatprep.subr.mxu0 0.0
        %1320 = vmatpush1.msra.mxu0 0.0
        %1321 = vmatprep.subr.mxu0 0.0
        %1322 = vmatpush1.msra.mxu0 0.0
        %1323 = vmatprep.subr.mxu0 0.0
        %1324 = vmatpush1.msra.mxu0 0.0
        %1325 = vmatprep.subr.mxu0 0.0
        %1326 = vmatpush1.msra.mxu0 0.0
        %1327 = vmatprep.subr.mxu0 0.0
        %1328 = vmatpush1.msra.mxu0 0.0
        %1329 = vmatprep.subr.mxu0 0.0
        %1330 = vmatpush1.msra.mxu0 0.0
        %1331 = vmatprep.subr.mxu0 0.0
        %1332 = vmatpush1.msra.mxu0 0.0
        %1333 = vmatprep.subr.mxu0 0.0
        %1334 = vmatpush1.msra.mxu0 0.0
        %1335 = vmatprep.subr.mxu0 0.0
        %1336 = vmatpush1.msra.mxu0 0.0
        %1337 = vmatprep.subr.mxu0 0.0
        %1338 = vmatpush1.msra.mxu0 0.0
        %1339 = vmatprep.subr.mxu0 0.0
        %1340 = vmatpush1.msra.mxu0 0.0
        %1341 = vmatprep.subr.mxu0 0.0
        %1342 = vmatpush1.msra.mxu0 0.0
        %1343 = vmatprep.subr.mxu0 0.0
        %1344 = vmatpush1.msra.mxu0 0.0
        %1345 = vmatprep.subr.mxu0 0.0
        %1346 = vmatpush1.msra.mxu0 0.0
        %1347 = vmatprep.subr.mxu0 0.0
        %1348 = vmatpush1.msra.mxu0 0.0
        %1349 = vmatprep.subr.mxu0 0.0
        %1350 = vmatpush1.msra.mxu0 0.0
        %1351 = vmatprep.mubr.f32.mxu0 0.0
        %1352 = vmatmul.mubr.f32.gmra.mrb[0].mxu0 %v1285
        %v1353 = vpop.f32.mrb[0].mxu0
        %v1354 = vadd.f32 0.0, %v1353
        %v1355 = vpop.f32.mrb[0].mxu0
        %1356 = vdwg.mxu0
        %s1357 = scalar_lea.vmem [#allocation2], 32
        %1358 = vst.msk [vmem:[%s1357] sm:$0xff] %vm529, %v1354
        %s1359 = sadd.s32 %s315, 5
        %s1360 = scalar_lea.vmem %s273, %s1359 [#allocation7]
        %v1361 = vld [vmem:[%s1360] sm:$0x1]
        %v1362 = vld [vmem:[%s1360 + $0x10] sm:$0x1]
        %v1363 = vld [vmem:[%s1360 + $0x20] sm:$0x1]
        %v1364 = vld [vmem:[%s1360 + $0x30] sm:$0x1]
        %v1365 = vld [vmem:[%s1360 + $0x40] sm:$0x1]
        %v1366 = vld [vmem:[%s1360 + $0x50] sm:$0x1]
        %v1367 = vld [vmem:[%s1360 + $0x60] sm:$0x1]
        %v1368 = vld [vmem:[%s1360 + $0x70] sm:$0x1]
        %s1369 = scalar_lea.vmem %s282, %s1359 [#allocation10]
        %v1370 = vld [vmem:[%s1369] sm:$0x1]
        %v1371 = vld [vmem:[%s1369 + $0x10] sm:$0x1]
        %v1372 = vld [vmem:[%s1369 + $0x20] sm:$0x1]
        %v1373 = vld [vmem:[%s1369 + $0x30] sm:$0x1]
        %v1374 = vld [vmem:[%s1369 + $0x40] sm:$0x1]
        %v1375 = vld [vmem:[%s1369 + $0x50] sm:$0x1]
        %v1376 = vld [vmem:[%s1369 + $0x60] sm:$0x1]
        %v1377 = vld [vmem:[%s1369 + $0x70] sm:$0x1]
        %v1378 = vadd.f32 %v1361, %v1370
        %v1379 = vadd.f32 %v1362, %v1371
        %v1380 = vadd.f32 %v1363, %v1372
        %v1381 = vadd.f32 %v1364, %v1373
        %v1382 = vadd.f32 %v1365, %v1374
        %v1383 = vadd.f32 %v1366, %v1375
        %v1384 = vadd.f32 %v1367, %v1376
        %v1385 = vadd.f32 %v1368, %v1377
        %v1386 = vld [vmem:[%s5] sm:$0xff]
        %v1387 = vld [vmem:[%s7] sm:$0xff]
        %1389 = vset.pattern.permute.xlu0 0
        %1390 = vperm.xlu0 %1389, %v1387
        %v1391 = vpop.permute.xlu0 %1390
        %v1401 = vrot.slane %v1379, 7
        %v1402 = vsel %vm358, %v1401, %v1378
        %v1403 = vrot.slane %v1380, 6
        %v1404 = vsel %vm361, %v1403, %v1402
        %v1405 = vrot.slane %v1381, 5
        %v1406 = vsel %vm364, %v1405, %v1404
        %v1407 = vrot.slane %v1382, 4
        %v1408 = vsel %vm367, %v1407, %v1406
        %v1409 = vrot.slane %v1383, 3
        %v1410 = vsel %vm370, %v1409, %v1408
        %v1411 = vrot.slane %v1384, 2
        %v1412 = vsel %vm373, %v1411, %v1410
        %v1413 = vrot.slane %v1385, 1
        %v1414 = vsel %vm376, %v1413, %v1412
        %v1417 = vsel %vm379, %v1386, 0
        %1419 = vmatprep.subr.mxu0 0.0
        %1420 = vmatpush1.msra.mxu0 %v1414
        %1421 = vmatprep.subr.mxu0 0.0
        %1422 = vmatpush1.msra.mxu0 0.0
        %1423 = vmatprep.subr.mxu0 0.0
        %1424 = vmatpush1.msra.mxu0 0.0
        %1425 = vmatprep.subr.mxu0 0.0
        %1426 = vmatpush1.msra.mxu0 0.0
        %1427 = vmatprep.subr.mxu0 0.0
        %1428 = vmatpush1.msra.mxu0 0.0
        %1429 = vmatprep.subr.mxu0 0.0
        %1430 = vmatpush1.msra.mxu0 0.0
        %1431 = vmatprep.subr.mxu0 0.0
        %1432 = vmatpush1.msra.mxu0 0.0
        %1433 = vmatprep.subr.mxu0 0.0
        %1434 = vmatpush1.msra.mxu0 0.0
        %1435 = vmatprep.subr.mxu0 0.0
        %1436 = vmatpush1.msra.mxu0 0.0
        %1437 = vmatprep.subr.mxu0 0.0
        %1438 = vmatpush1.msra.mxu0 0.0
        %1439 = vmatprep.subr.mxu0 0.0
        %1440 = vmatpush1.msra.mxu0 0.0
        %1441 = vmatprep.subr.mxu0 0.0
        %1442 = vmatpush1.msra.mxu0 0.0
        %1443 = vmatprep.subr.mxu0 0.0
        %1444 = vmatpush1.msra.mxu0 0.0
        %1445 = vmatprep.subr.mxu0 0.0
        %1446 = vmatpush1.msra.mxu0 0.0
        %1447 = vmatprep.subr.mxu0 0.0
        %1448 = vmatpush1.msra.mxu0 0.0
        %1449 = vmatprep.subr.mxu0 0.0
        %1450 = vmatpush1.msra.mxu0 0.0
        %1451 = vmatprep.subr.mxu0 0.0
        %1452 = vmatpush1.msra.mxu0 0.0
        %1453 = vmatprep.subr.mxu0 0.0
        %1454 = vmatpush1.msra.mxu0 0.0
        %1455 = vmatprep.subr.mxu0 0.0
        %1456 = vmatpush1.msra.mxu0 0.0
        %1457 = vmatprep.subr.mxu0 0.0
        %1458 = vmatpush1.msra.mxu0 0.0
        %1459 = vmatprep.subr.mxu0 0.0
        %1460 = vmatpush1.msra.mxu0 0.0
        %1461 = vmatprep.subr.mxu0 0.0
        %1462 = vmatpush1.msra.mxu0 0.0
        %1463 = vmatprep.subr.mxu0 0.0
        %1464 = vmatpush1.msra.mxu0 0.0
        %1465 = vmatprep.subr.mxu0 0.0
        %1466 = vmatpush1.msra.mxu0 0.0
        %1467 = vmatprep.subr.mxu0 0.0
        %1468 = vmatpush1.msra.mxu0 0.0
        %1469 = vmatprep.subr.mxu0 0.0
        %1470 = vmatpush1.msra.mxu0 0.0
        %1471 = vmatprep.subr.mxu0 0.0
        %1472 = vmatpush1.msra.mxu0 0.0
        %1473 = vmatprep.subr.mxu0 0.0
        %1474 = vmatpush1.msra.mxu0 0.0
        %1475 = vmatprep.subr.mxu0 0.0
        %1476 = vmatpush1.msra.mxu0 0.0
        %1477 = vmatprep.subr.mxu0 0.0
        %1478 = vmatpush1.msra.mxu0 0.0
        %1479 = vmatprep.subr.mxu0 0.0
        %1480 = vmatpush1.msra.mxu0 0.0
        %1481 = vmatprep.subr.mxu0 0.0
        %1482 = vmatpush1.msra.mxu0 0.0
        %1483 = vmatprep.mubr.f32.mxu0 0.0
        %1484 = vmatmul.mubr.f32.gmra.mrb[0].mxu0 %v1417
        %v1485 = vpop.f32.mrb[0].mxu0
        %v1486 = vadd.f32 %v1391, %v1485
        %v1487 = vpop.f32.mrb[0].mxu0
        %1488 = vdwg.mxu0
        %v1489 = vld [vmem:[%s6] sm:$0xff]
        %v1490 = vld [vmem:[%s6 + $0x8] sm:$0xff]
        %v1492 = vsel %vm455, %v1486, 0
        %1494 = vmatprep.subr.mxu0 0.0
        %1495 = vmatpush1.msra.mxu0 %v1489
        %1496 = vmatprep.subr.mxu0 0.0
        %1497 = vmatpush1.msra.mxu0 %v1490
        %1498 = vmatprep.subr.mxu0 0.0
        %1499 = vmatpush1.msra.mxu0 0.0
        %1500 = vmatprep.subr.mxu0 0.0
        %1501 = vmatpush1.msra.mxu0 0.0
        %1502 = vmatprep.subr.mxu0 0.0
        %1503 = vmatpush1.msra.mxu0 0.0
        %1504 = vmatprep.subr.mxu0 0.0
        %1505 = vmatpush1.msra.mxu0 0.0
        %1506 = vmatprep.subr.mxu0 0.0
        %1507 = vmatpush1.msra.mxu0 0.0
        %1508 = vmatprep.subr.mxu0 0.0
        %1509 = vmatpush1.msra.mxu0 0.0
        %1510 = vmatprep.subr.mxu0 0.0
        %1511 = vmatpush1.msra.mxu0 0.0
        %1512 = vmatprep.subr.mxu0 0.0
        %1513 = vmatpush1.msra.mxu0 0.0
        %1514 = vmatprep.subr.mxu0 0.0
        %1515 = vmatpush1.msra.mxu0 0.0
        %1516 = vmatprep.subr.mxu0 0.0
        %1517 = vmatpush1.msra.mxu0 0.0
        %1518 = vmatprep.subr.mxu0 0.0
        %1519 = vmatpush1.msra.mxu0 0.0
        %1520 = vmatprep.subr.mxu0 0.0
        %1521 = vmatpush1.msra.mxu0 0.0
        %1522 = vmatprep.subr.mxu0 0.0
        %1523 = vmatpush1.msra.mxu0 0.0
        %1524 = vmatprep.subr.mxu0 0.0
        %1525 = vmatpush1.msra.mxu0 0.0
        %1526 = vmatprep.subr.mxu0 0.0
        %1527 = vmatpush1.msra.mxu0 0.0
        %1528 = vmatprep.subr.mxu0 0.0
        %1529 = vmatpush1.msra.mxu0 0.0
        %1530 = vmatprep.subr.mxu0 0.0
        %1531 = vmatpush1.msra.mxu0 0.0
        %1532 = vmatprep.subr.mxu0 0.0
        %1533 = vmatpush1.msra.mxu0 0.0
        %1534 = vmatprep.subr.mxu0 0.0
        %1535 = vmatpush1.msra.mxu0 0.0
        %1536 = vmatprep.subr.mxu0 0.0
        %1537 = vmatpush1.msra.mxu0 0.0
        %1538 = vmatprep.subr.mxu0 0.0
        %1539 = vmatpush1.msra.mxu0 0.0
        %1540 = vmatprep.subr.mxu0 0.0
        %1541 = vmatpush1.msra.mxu0 0.0
        %1542 = vmatprep.subr.mxu0 0.0
        %1543 = vmatpush1.msra.mxu0 0.0
        %1544 = vmatprep.subr.mxu0 0.0
        %1545 = vmatpush1.msra.mxu0 0.0
        %1546 = vmatprep.subr.mxu0 0.0
        %1547 = vmatpush1.msra.mxu0 0.0
        %1548 = vmatprep.subr.mxu0 0.0
        %1549 = vmatpush1.msra.mxu0 0.0
        %1550 = vmatprep.subr.mxu0 0.0
        %1551 = vmatpush1.msra.mxu0 0.0
        %1552 = vmatprep.subr.mxu0 0.0
        %1553 = vmatpush1.msra.mxu0 0.0
        %1554 = vmatprep.subr.mxu0 0.0
        %1555 = vmatpush1.msra.mxu0 0.0
        %1556 = vmatprep.subr.mxu0 0.0
        %1557 = vmatpush1.msra.mxu0 0.0
        %1558 = vmatprep.mubr.f32.mxu0 0.0
        %1559 = vmatmul.mubr.f32.gmra.mrb[0].mxu0 %v1492
        %v1560 = vpop.f32.mrb[0].mxu0
        %v1561 = vadd.f32 0.0, %v1560
        %v1562 = vpop.f32.mrb[0].mxu0
        %1563 = vdwg.mxu0
        %s1564 = scalar_lea.vmem [#allocation2], 40
        %1565 = vst.msk [vmem:[%s1564] sm:$0xff] %vm529, %v1561
        %s1566 = smul.u32 %s47, 8
        %s1567 = sld [smem:[#allocation5 + %s1566]]
        %s1568 = sld [smem:[#allocation6 + %s1566]]
        %s1569 = ssub.f32 1.0, %s1568
        %s1570 = smul.u32 %s1567, 8
        %s1571 = scalar_lea.vmem [#allocation2], %s1570
        %v1572 = vld [vmem:[%s1571] sm:$0xff]
        %v1573 = vstv %s1569
        %v1574 = vmul.f32 %v1573, %v1572
        %s1575 = sadd.s32 %s1567, 1
        %s1576 = smul.u32 %s1575, 8
        %s1577 = scalar_lea.vmem [#allocation2], %s1576
        %v1578 = vld [vmem:[%s1577] sm:$0xff]
        %v1579 = vstv %s1568
        %v1580 = vmul.f32 %v1579, %v1578
        %v1581 = vadd.f32 %v1574, %v1580
        %1582 = vst.msk [vmem:[%s313] sm:$0xff] %vm529, %v1581
        %s1583 = sadd.s32 %s1566, 1
        %s1584 = sld [smem:[#allocation5 + %s1583]]
        %s1585 = sld [smem:[#allocation6 + %s1583]]
        %s1586 = ssub.f32 1.0, %s1585
        %s1587 = smul.u32 %s1584, 8
        %s1588 = scalar_lea.vmem [#allocation2], %s1587
        %v1589 = vld [vmem:[%s1588] sm:$0xff]
        %v1590 = vstv %s1586
        %v1591 = vmul.f32 %v1590, %v1589
        %s1592 = sadd.s32 %s1584, 1
        %s1593 = smul.u32 %s1592, 8
        %s1594 = scalar_lea.vmem [#allocation2], %s1593
        %v1595 = vld [vmem:[%s1594] sm:$0xff]
        %v1596 = vstv %s1585
        %v1597 = vmul.f32 %v1596, %v1595
        %v1598 = vadd.f32 %v1591, %v1597
        %1600 = vrot.lane.b32.xlu0 %v1598, 32
        %v1601 = vpop.permute.xlu0 %1600
        %vm1603 = vcmask 523520
        %1604 = vst.msk [vmem:[%s313] sm:$0xff] %vm1603, %v1601
        %s1605 = sadd.s32 %s1566, 2
        %s1606 = sld [smem:[#allocation5 + %s1605]]
        %s1607 = sld [smem:[#allocation6 + %s1605]]
        %s1608 = ssub.f32 1.0, %s1607
        %s1609 = smul.u32 %s1606, 8
        %s1610 = scalar_lea.vmem [#allocation2], %s1609
        %v1611 = vld [vmem:[%s1610] sm:$0xff]
        %v1612 = vstv %s1608
        %v1613 = vmul.f32 %v1612, %v1611
        %s1614 = sadd.s32 %s1606, 1
        %s1615 = smul.u32 %s1614, 8
        %s1616 = scalar_lea.vmem [#allocation2], %s1615
        %v1617 = vld [vmem:[%s1616] sm:$0xff]
        %v1618 = vstv %s1607
        %v1619 = vmul.f32 %v1618, %v1617
        %v1620 = vadd.f32 %v1613, %v1619
        %1622 = vrot.lane.b32.xlu0 %v1620, 64
        %v1623 = vpop.permute.xlu0 %1622
        %vm1625 = vcmask 785920
        %1626 = vst.msk [vmem:[%s313] sm:$0xff] %vm1625, %v1623
        %s1627 = sadd.s32 %s1566, 3
        %s1628 = sld [smem:[#allocation5 + %s1627]]
        %s1629 = sld [smem:[#allocation6 + %s1627]]
        %s1630 = ssub.f32 1.0, %s1629
        %s1631 = smul.u32 %s1628, 8
        %s1632 = scalar_lea.vmem [#allocation2], %s1631
        %v1633 = vld [vmem:[%s1632] sm:$0xff]
        %v1634 = vstv %s1630
        %v1635 = vmul.f32 %v1634, %v1633
        %s1636 = sadd.s32 %s1628, 1
        %s1637 = smul.u32 %s1636, 8
        %s1638 = scalar_lea.vmem [#allocation2], %s1637
        %v1639 = vld [vmem:[%s1638] sm:$0xff]
        %v1640 = vstv %s1629
        %v1641 = vmul.f32 %v1640, %v1639
        %v1642 = vadd.f32 %v1635, %v1641
        %1644 = vrot.lane.b32.xlu0 %v1642, 96
        %v1645 = vpop.permute.xlu0 %1644
        %vm1647 = vcmask 1048320
        %1648 = vst.msk [vmem:[%s313] sm:$0xff] %vm1647, %v1645
        %s1649 = sadd.s32 %s1566, 4
        %s1650 = sld [smem:[#allocation5 + %s1649]]
        %s1651 = sld [smem:[#allocation6 + %s1649]]
        %s1652 = ssub.f32 1.0, %s1651
        %s1653 = smul.u32 %s1650, 8
        %s1654 = scalar_lea.vmem [#allocation2], %s1653
        %v1655 = vld [vmem:[%s1654] sm:$0xff]
        %v1656 = vstv %s1652
        %v1657 = vmul.f32 %v1656, %v1655
        %s1658 = sadd.s32 %s1650, 1
        %s1659 = smul.u32 %s1658, 8
        %s1660 = scalar_lea.vmem [#allocation2], %s1659
        %v1661 = vld [vmem:[%s1660] sm:$0xff]
        %v1662 = vstv %s1651
        %v1663 = vmul.f32 %v1662, %v1661
        %v1664 = vadd.f32 %v1657, %v1663
        %1665 = vst.msk [vmem:[%s313 + $0x8] sm:$0xff] %vm529, %v1664
        %s1666 = sadd.s32 %s1566, 5
        %s1667 = sld [smem:[#allocation5 + %s1666]]
        %s1668 = sld [smem:[#allocation6 + %s1666]]
        %s1669 = ssub.f32 1.0, %s1668
        %s1670 = smul.u32 %s1667, 8
        %s1671 = scalar_lea.vmem [#allocation2], %s1670
        %v1672 = vld [vmem:[%s1671] sm:$0xff]
        %v1673 = vstv %s1669
        %v1674 = vmul.f32 %v1673, %v1672
        %s1675 = sadd.s32 %s1667, 1
        %s1676 = smul.u32 %s1675, 8
        %s1677 = scalar_lea.vmem [#allocation2], %s1676
        %v1678 = vld [vmem:[%s1677] sm:$0xff]
        %v1679 = vstv %s1668
        %v1680 = vmul.f32 %v1679, %v1678
        %v1681 = vadd.f32 %v1674, %v1680
        %1683 = vrot.lane.b32.xlu0 %v1681, 32
        %v1684 = vpop.permute.xlu0 %1683
        %1686 = vst.msk [vmem:[%s313 + $0x8] sm:$0xff] %vm1603, %v1684
        %s1687 = sadd.s32 %s1566, 6
        %s1688 = sld [smem:[#allocation5 + %s1687]]
        %s1689 = sld [smem:[#allocation6 + %s1687]]
        %s1690 = ssub.f32 1.0, %s1689
        %s1691 = smul.u32 %s1688, 8
        %s1692 = scalar_lea.vmem [#allocation2], %s1691
        %v1693 = vld [vmem:[%s1692] sm:$0xff]
        %v1694 = vstv %s1690
        %v1695 = vmul.f32 %v1694, %v1693
        %s1696 = sadd.s32 %s1688, 1
        %s1697 = smul.u32 %s1696, 8
        %s1698 = scalar_lea.vmem [#allocation2], %s1697
        %v1699 = vld [vmem:[%s1698] sm:$0xff]
        %v1700 = vstv %s1689
        %v1701 = vmul.f32 %v1700, %v1699
        %v1702 = vadd.f32 %v1695, %v1701
        %1704 = vrot.lane.b32.xlu0 %v1702, 64
        %v1705 = vpop.permute.xlu0 %1704
        %1707 = vst.msk [vmem:[%s313 + $0x8] sm:$0xff] %vm1625, %v1705
        %s1708 = sadd.s32 %s1566, 7
        %s1709 = sld [smem:[#allocation5 + %s1708]]
        %s1710 = sld [smem:[#allocation6 + %s1708]]
        %s1711 = ssub.f32 1.0, %s1710
        %s1712 = smul.u32 %s1709, 8
        %s1713 = scalar_lea.vmem [#allocation2], %s1712
        %v1714 = vld [vmem:[%s1713] sm:$0xff]
        %v1715 = vstv %s1711
        %v1716 = vmul.f32 %v1715, %v1714
        %s1717 = sadd.s32 %s1709, 1
        %s1718 = smul.u32 %s1717, 8
        %s1719 = scalar_lea.vmem [#allocation2], %s1718
        %v1720 = vld [vmem:[%s1719] sm:$0xff]
        %v1721 = vstv %s1710
        %v1722 = vmul.f32 %v1721, %v1720
        %v1723 = vadd.f32 %v1716, %v1722
        %1725 = vrot.lane.b32.xlu0 %v1723, 96
        %v1726 = vpop.permute.xlu0 %1725
        %1728 = vst.msk [vmem:[%s313 + $0x8] sm:$0xff] %vm1647, %v1726
        %s1729 = sand.u32 %s179, 1
        %s1730 = scalar_lea.sflag [#allocation9], %s1729
        %s1731 = sand.u32 %s179, 1
        %s1732 = smul.addr %s1731, 16
        %s1733 = scalar_lea.vmem [#allocation12], %s1732
        // Predicated region
        $region49: #{tpu_custom_call.1} parent=39 // pred_check
          %p1734 = pneg %p189
        $region50: #{tpu_custom_call.1} parent=39 // pred_check_branch
          %1736 = sbr.rel (%p1734) target = $region52
        $region51: #{tpu_custom_call.1} parent=39 // pred_region
          %s1737 = smul.u32 2, %s47
          %s1739 = ssub.s32 256, 256
          %1740 = vsyncadd %s1730, %s1739
          %s1741 = smul.addr %s46, 8
          %s1742 = sadd.s32 %s1737, %s1741
          %s1743 = smul.addr %s1742, 128
          %s1744 = scalar_lea.hbm %s8, %s1743
          %s1746 = sshll.u32 %s1733, 4
          %s1747 = int_to_ptr.vmem [resolvable:$true] %s1746
          %1749 = dma.vmem_to_hbm [thread:$0]  %s1747, 256, %s1744, %s1730
        $region52: #{tpu_custom_call.1} parent=39 // pred_fallthru
          _
      $region40: #{tpu_custom_call.1} parent=5 // pred_fallthru
        _
      %p1750 = scmp.le.s32.totalorder 2, %s37
      // Predicated region
      $region53: #{tpu_custom_call.1} parent=5 // pred_check
        %p1751 = pneg %p1750
      $region54: #{tpu_custom_call.1} parent=5 // pred_check_branch
        %1753 = sbr.rel (%p1751) target = $region56
      $region55: #{tpu_custom_call.1} parent=5 // pred_region
        %s1754 = ssub.s32 %s37, 2
        // Predicated region
        $region57: #{tpu_custom_call.1} parent=55 // pred_check
          %p1755 = pneg %p195
        $region58: #{tpu_custom_call.1} parent=55 // pred_check_branch
          %1757 = sbr.rel (%p1755) target = $region60
        $region59: #{tpu_custom_call.1} parent=55 // pred_region
          %s1758 = sand.u32 %s180, 1
          %s1759 = scalar_lea.sflag [#allocation9], %s1758
          %s1760 = sand.u32 %s180, 1
          %s1761 = smul.addr %s1760, 16
          %s1762 = scalar_lea.vmem [#allocation12], %s1761
          %1763 = dma.done %s1759, 256
        $region60: #{tpu_custom_call.1} parent=55 // pred_fallthru
          _
      $region56: #{tpu_custom_call.1} parent=5 // pred_fallthru
        _
    $region6: #{tpu_custom_call.1} parent=1 // loop_footer
      %s41 = sadd.s32 1, %s37
    $region7: #{tpu_custom_call.1} parent=1 // loop_footer_branch
      %36 = sbr.rel target = $region3
    $region8: #{tpu_custom_call.1} parent=1 // loop_exit
      _
    %1764 = vsyncpa [#allocation8], 1
    %s1765 = scalar_lea.sflag [#allocation8], 1
    %1766 = vsyncpa %s1765, 1
    %1767 = vsyncpa [#allocation11], 1
    %s1768 = scalar_lea.sflag [#allocation11], 1
    %1769 = vsyncpa %s1768, 1
    %1770 = vsyncpa [#allocation9], 1
    %s1771 = scalar_lea.sflag [#allocation9], 1
    %1772 = vsyncpa %s1771, 1

</llo_original>
